<compile_context>
chip_gen: v7x
topology: tpu7x:2x2x1
jax: 0.10.0
libtpu: 0.0.40
codegen_flags: <defaults>
</compile_context>

<pallas_src>
import jax
import jax.numpy as jnp
from jax import lax
from jax.experimental import pallas as pl
from jax.experimental.pallas import tpu as pltpu

# ----------------- small config consistent with the module -----------------
B = 2              # batch
C_IN = 3           # in_chans
IMG = 16           # spatial size
PATCH = 4          # patch_size -> 4x4 grid of patches
NP = (IMG // PATCH) ** 2          # 16 patches
N = NP + 1                        # +cls token = 17
NPAD = 32                         # sequence padded to a sublane-friendly size
DIM = 128          # embedding dim (stands in for 768)
MLP_DIM = 256      # mlp hidden (stands in for 2048)
HEADS = 8          # num_heads (stands in for 64)
HEAD_DIM = DIM // HEADS
SCALE = HEAD_DIM ** -0.5          # qk_scale=None -> head_dim**-0.5
LAYERS = 2         # layers_num (stands in for 6); attention weights are SHARED across layers
LN_EPS = 1e-5
MAX_POS = NP + 9                  # pos table longer than needed, sliced to n+1 (mirrors 14**2+1)
K_PATCH = C_IN * PATCH * PATCH    # flattened patch length = 48
NEG = -1e30


# ----------------- the single fused Pallas kernel -----------------
def _vit_encoder_kernel(patches_ref, wpe_ref, add_ref,
                        wqkv_ref, wproj_ref, bproj_ref,
                        ln1g_ref, ln1b_ref, ln2g_ref, ln2b_ref,
                        w1_ref, b1_ref, w2_ref, b2_ref, o_ref):
    f32 = jnp.float32
    bf16 = jnp.bfloat16

    # ---- fused prologue: patch embedding + conv bias + cls token + positional embedding ----
    # patches_ref[0]: (NPAD, K) bf16 (row 0 and rows N.. are zero);
    # add_ref: row 0 = cls + pos[0]; rows 1..NP = conv_b + pos[1..NP]; padding rows = 0.
    x = jnp.dot(patches_ref[0], wpe_ref[...], preferred_element_type=f32) + add_ref[...]

    # key-padding mask (hoisted out of the layer loop)
    col = lax.broadcasted_iota(jnp.int32, (1, 1, NPAD), 2)
    kmask = jnp.where(col < N, 0.0, NEG).astype(f32)          # (1, 1, NPAD)

    def layer_norm(t, g, b):
        mu = jnp.mean(t, axis=-1, keepdims=True)
        var = jnp.mean(jnp.square(t - mu), axis=-1, keepdims=True)
        return (t - mu) * lax.rsqrt(var + LN_EPS) * g + b

    # ---- layer loop fully UNROLLED: static per-layer weight indexing, cross-layer scheduling ----
    for li in range(LAYERS):
        # ---- LayerNorm 1 + multi-head self-attention (weights shared across layers) ----
        h = layer_norm(x, ln1g_ref[li], ln1b_ref[li]).astype(bf16)             # (NPAD, DIM)

        # single fused QKV matmul: one MXU pass, 3*DIM = 384 output lanes
        qkv = jnp.dot(h, wqkv_ref[...], preferred_element_type=f32).astype(bf16)  # (NPAD, 3*DIM)

        # split into per-head (HEADS, NPAD, HEAD_DIM) operands via static lane slices
        q = jnp.stack([qkv[:, hh * HEAD_DIM:(hh + 1) * HEAD_DIM]
                       for hh in range(HEADS)], axis=0)
        k = jnp.stack([qkv[:, DIM + hh * HEAD_DIM:DIM + (hh + 1) * HEAD_DIM]
                       for hh in range(HEADS)], axis=0)
        v = jnp.stack([qkv[:, 2 * DIM + hh * HEAD_DIM:2 * DIM + (hh + 1) * HEAD_DIM]
                       for hh in range(HEADS)], axis=0)

        s = jnp.einsum("hnd,hmd->hnm", q, k,
                       preferred_element_type=f32) * SCALE + kmask             # (H, NPAD, NPAD)
        s = s - jnp.max(s, axis=-1, keepdims=True)
        p = jnp.exp(s)
        p = p * pl.reciprocal(jnp.sum(p, axis=-1, keepdims=True), approx=True)

        o = jnp.einsum("hnm,hmd->hnd", p.astype(bf16), v,
                       preferred_element_type=f32)                             # (H, NPAD, HD)

        # head merge into lanes (NPAD, DIM), then ONE full-depth K=128 output projection
        o_merged = jnp.concatenate([o[hh] for hh in range(HEADS)],
                                   axis=-1).astype(bf16)                       # (NPAD, DIM)
        attn = jnp.dot(o_merged, wproj_ref[...],
                       preferred_element_type=f32) + bproj_ref[...]            # (NPAD, DIM)
        x = x + attn                                                           # residual 1

        # ---- LayerNorm 2 + MLP (Linear -> exact GELU -> Linear) ----
        h2 = layer_norm(x, ln2g_ref[li], ln2b_ref[li]).astype(bf16)
        y = jnp.dot(h2, w1_ref[li], preferred_element_type=f32) + b1_ref[li]
        y = 0.5 * y * (1.0 + lax.erf(y * (2.0 ** -0.5)))                       # exact GELU (nn.GELU)
        y = jnp.dot(y.astype(bf16), w2_ref[li], preferred_element_type=f32) + b2_ref[li]
        x = x + y                                                              # residual 2

    o_ref[0] = x.astype(o_ref.dtype)


# ----------------- wrapper: host-side layout plumbing + one pallas_call -----------------
def encoder_forward(x_img, params):
    Bq, C, H, W = x_img.shape
    hp, wp = H // PATCH, W // PATCH
    npq = hp * wp
    n_tok = npq + 1
    kdim = C * PATCH * PATCH

    # Conv2d(k=stride=PATCH) == matmul over flattened patches ('b e h w -> b (h w) e').
    # Patch flatten is pure layout; the matmul happens inside the kernel.
    patches = x_img.reshape(Bq, C, hp, PATCH, wp, PATCH).transpose(0, 2, 4, 1, 3, 5)
    patches = patches.reshape(Bq, npq, kdim)
    patches_pad = jnp.zeros((Bq, NPAD, kdim), jnp.bfloat16)
    patches_pad = patches_pad.at[:, 1:1 + npq, :].set(patches.astype(jnp.bfloat16))

    # fold conv bias, cls token and positional embedding into one per-row additive term
    pos = params["pos_emb"][0, :n_tok]                                    # (N, DIM)
    add = jnp.zeros((NPAD, DIM), jnp.float32)
    add = add.at[0, :].set(params["cls_token"][0, 0] + pos[0])
    add = add.at[1:1 + npq, :].set(params["conv_b"][None, :] + pos[1:])

    w_pe = params["conv_w"].reshape(DIM, kdim).T.astype(jnp.bfloat16)     # (K, DIM)

    # shared attention weights: fused (DIM, 3*DIM) qkv weight + (DIM, DIM) projection
    a = params["attn"]
    w_qkv = a["w_qkv"].astype(jnp.bfloat16)                               # (DIM, 3*DIM)
    w_proj = a["w_proj"].astype(jnp.bfloat16)                             # (DIM, DIM)
    b_proj = a["b_proj"].astype(jnp.float32)                              # (1, DIM)

    # per-layer weights stacked along a leading layer axis (statically indexed in the kernel)
    # TODO(synk): at real ViT sizes (DIM=768, MLP=2048, 6 layers) stream w1/w2 per layer
    #             (grid axis marked "arbitrary" / emit_pipeline) instead of keeping them resident.
    ls = params["layers"]
    ln1_g = jnp.stack([l["ln1_g"] for l in ls])                           # (LAYERS, 1, DIM)
    ln1_b = jnp.stack([l["ln1_b"] for l in ls])
    ln2_g = jnp.stack([l["ln2_g"] for l in ls])
    ln2_b = jnp.stack([l["ln2_b"] for l in ls])
    w1 = jnp.stack([l["w1"] for l in ls]).astype(jnp.bfloat16)            # (LAYERS, DIM, MLP_DIM)
    b1 = jnp.stack([l["b1"] for l in ls])                                 # (LAYERS, 1, MLP_DIM)
    w2 = jnp.stack([l["w2"] for l in ls]).astype(jnp.bfloat16)            # (LAYERS, MLP_DIM, DIM)
    b2 = jnp.stack([l["b2"] for l in ls])                                 # (LAYERS, 1, DIM)

    weights = (w_pe, add, w_qkv, w_proj, b_proj,
               ln1_g, ln1_b, ln2_g, ln2_b, w1, b1, w2, b2)

    in_specs = [pl.BlockSpec((1, NPAD, kdim), lambda b: (b, 0, 0))]
    for wgt in weights:
        in_specs.append(pl.BlockSpec(wgt.shape, lambda b, _nd=wgt.ndim: (0,) * _nd))

    out = pl.pallas_call(
        _vit_encoder_kernel,
        grid=(Bq,),
        out_shape=jax.ShapeDtypeStruct((Bq, NPAD, DIM), jnp.float32),
        in_specs=in_specs,
        out_specs=pl.BlockSpec((1, NPAD, DIM), lambda b: (b, 0, 0)),
        compiler_params=pltpu.CompilerParams(
            dimension_semantics=("parallel",),
            # explicit VMEM budget: resident weights + activation + double buffers << 32 MiB here;
            # re-derive per generation (v7x has 64 MiB physical) when scaling DIM/LAYERS up.
            vmem_limit_bytes=32 * 1024 * 1024,
        ),
    )(patches_pad, *weights)
    return out[:, :n_tok, :]                                              # drop padded rows


# ----------------- parameter init (deterministic, synthetic) -----------------
def init_params(key):
    ks = jax.random.split(key, 8 + LAYERS)
    s = 0.02
    params = {
        "conv_w": jax.random.normal(ks[0], (DIM, C_IN, PATCH, PATCH), jnp.float32) * s,
        "conv_b": jax.random.normal(ks[1], (DIM,), jnp.float32) * s,
        "pos_emb": jax.random.normal(ks[2], (1, MAX_POS, DIM), jnp.float32),
        "cls_token": jax.random.normal(ks[3], (1, 1, DIM), jnp.float32),
        # attention weights are a single shared instance across all layers (as in the module)
        "attn": {
            "w_qkv": jax.random.normal(ks[4], (DIM, 3 * DIM), jnp.float32) * s,  # qkv_bias=False
            "w_proj": jax.random.normal(ks[5], (DIM, DIM), jnp.float32) * s,
            "b_proj": jax.random.normal(ks[6], (1, DIM), jnp.float32) * s,
        },
    }
    layers = []
    for li in range(LAYERS):
        kl = jax.random.split(ks[8 + li], 4)
        layers.append(dict(
            ln1_g=jnp.ones((1, DIM), jnp.float32), ln1_b=jnp.zeros((1, DIM), jnp.float32),
            ln2_g=jnp.ones((1, DIM), jnp.float32), ln2_b=jnp.zeros((1, DIM), jnp.float32),
            w1=jax.random.normal(kl[0], (DIM, MLP_DIM), jnp.float32) * s,
            b1=jax.random.normal(kl[1], (1, MLP_DIM), jnp.float32) * s,
            w2=jax.random.normal(kl[2], (MLP_DIM, DIM), jnp.float32) * s,
            b2=jax.random.normal(kl[3], (1, DIM), jnp.float32) * s,
        ))
    params["layers"] = layers
    return params


# ----------------- pure-JAX reference for a sanity check -----------------
def reference_forward(x_img, params):
    with jax.default_matmul_precision("highest"):
        Bq, C, H, W = x_img.shape
        hp, wp = H // PATCH, W // PATCH
        patches = x_img.reshape(Bq, C, hp, PATCH, wp, PATCH).transpose(
            0, 2, 4, 1, 3, 5).reshape(Bq, hp * wp, -1)
        pe = patches @ params["conv_w"].reshape(DIM, -1).T + params["conv_b"]
        cls = jnp.broadcast_to(params["cls_token"], (Bq, 1, DIM))
        x = jnp.concatenate([cls, pe], axis=1) + params["pos_emb"][:, :pe.shape[1] + 1]

        def ln(t, g, b):
            mu = t.mean(-1, keepdims=True)
            v = ((t - mu) ** 2).mean(-1, keepdims=True)
            return (t - mu) / jnp.sqrt(v + LN_EPS) * g + b

        a = params["attn"]
        for p in params["layers"]:
            h = ln(x, p["ln1_g"], p["ln1_b"])
            qkv = h @ a["w_qkv"]
            q, k, v = jnp.split(qkv, 3, axis=-1)
            q = q.reshape(Bq, N, HEADS, HEAD_DIM).transpose(0, 2, 1, 3)
            k = k.reshape(Bq, N, HEADS, HEAD_DIM).transpose(0, 2, 1, 3)
            v = v.reshape(Bq, N, HEADS, HEAD_DIM).transpose(0, 2, 1, 3)
            att = jax.nn.softmax((q @ k.transpose(0, 1, 3, 2)) * SCALE, axis=-1)
            o = (att @ v).transpose(0, 2, 1, 3).reshape(Bq, N, DIM)
            x = x + o @ a["w_proj"] + a["b_proj"]
            h = ln(x, p["ln2_g"], p["ln2_b"])
            h = h @ p["w1"] + p["b1"]
            h = 0.5 * h * (1.0 + lax.erf(h * (2.0 ** -0.5)))
            x = x + h @ p["w2"] + p["b2"]
        return x


if __name__ == "__main__":
    key = jax.random.PRNGKey(0)
    k_x, k_p = jax.random.split(key)
    x_img = jax.random.normal(k_x, (B, C_IN, IMG, IMG), jnp.float32)   # NCHW like PyTorch
    params = init_params(k_p)

    fwd = jax.jit(encoder_forward)
    out = jax.block_until_ready(fwd(x_img, params))
    assert out.shape == (B, N, DIM)

    ref = jax.block_until_ready(reference_forward(x_img, params))
    max_err = float(jnp.max(jnp.abs(out - ref)))
    # bf16 MXU operands (f32 accumulation) vs 'highest'-precision f32 reference
    assert jnp.allclose(out, ref, atol=2e-2, rtol=2e-2), max_err

    print("KERNEL_OK")
</pallas_src>

<mosaic_0001>
module attributes {stable_mosaic.version = 11 : i64} {
  func.func @_vit_encoder_kernel(%arg0: i32, %arg1: memref<1x32x48xbf16, #tpu.memory_space<vmem>>, %arg2: memref<48x128xbf16, #tpu.memory_space<vmem>>, %arg3: memref<32x128xf32, #tpu.memory_space<vmem>>, %arg4: memref<128x384xbf16, #tpu.memory_space<vmem>>, %arg5: memref<128x128xbf16, #tpu.memory_space<vmem>>, %arg6: memref<1x128xf32, #tpu.memory_space<vmem>>, %arg7: memref<2x1x128xf32, #tpu.memory_space<vmem>>, %arg8: memref<2x1x128xf32, #tpu.memory_space<vmem>>, %arg9: memref<2x1x128xf32, #tpu.memory_space<vmem>>, %arg10: memref<2x1x128xf32, #tpu.memory_space<vmem>>, %arg11: memref<2x128x256xbf16, #tpu.memory_space<vmem>>, %arg12: memref<2x1x256xf32, #tpu.memory_space<vmem>>, %arg13: memref<2x256x128xbf16, #tpu.memory_space<vmem>>, %arg14: memref<2x1x128xf32, #tpu.memory_space<vmem>>, %arg15: memref<1x32x128xf32, #tpu.memory_space<vmem>>) attributes {dimension_semantics = [#tpu.dimension_semantics<parallel>], iteration_bounds = array<i64: 2>, scalar_prefetch = 0 : i64, scratch_operands = 0 : i64, tpu.core_type = #tpu.core_type<tc>, window_params = [{transform_indices = @transform_0, window_bounds = array<i64: 1, 32, 48>}, {pipeline_mode = #tpu.pipeline_mode<synchronous>, transform_indices = @transform_1, window_bounds = array<i64: 48, 128>}, {pipeline_mode = #tpu.pipeline_mode<synchronous>, transform_indices = @transform_2, window_bounds = array<i64: 32, 128>}, {pipeline_mode = #tpu.pipeline_mode<synchronous>, transform_indices = @transform_3, window_bounds = array<i64: 128, 384>}, {pipeline_mode = #tpu.pipeline_mode<synchronous>, transform_indices = @transform_4, window_bounds = array<i64: 128, 128>}, {pipeline_mode = #tpu.pipeline_mode<synchronous>, transform_indices = @transform_5, window_bounds = array<i64: 1, 128>}, {pipeline_mode = #tpu.pipeline_mode<synchronous>, transform_indices = @transform_6, window_bounds = array<i64: 2, 1, 128>}, {pipeline_mode = #tpu.pipeline_mode<synchronous>, transform_indices = @transform_7, window_bounds = array<i64: 2, 1, 128>}, {pipeline_mode = #tpu.pipeline_mode<synchronous>, transform_indices = @transform_8, window_bounds = array<i64: 2, 1, 128>}, {pipeline_mode = #tpu.pipeline_mode<synchronous>, transform_indices = @transform_9, window_bounds = array<i64: 2, 1, 128>}, {pipeline_mode = #tpu.pipeline_mode<synchronous>, transform_indices = @transform_10, window_bounds = array<i64: 2, 128, 256>}, {pipeline_mode = #tpu.pipeline_mode<synchronous>, transform_indices = @transform_11, window_bounds = array<i64: 2, 1, 256>}, {pipeline_mode = #tpu.pipeline_mode<synchronous>, transform_indices = @transform_12, window_bounds = array<i64: 2, 256, 128>}, {pipeline_mode = #tpu.pipeline_mode<synchronous>, transform_indices = @transform_13, window_bounds = array<i64: 2, 1, 128>}, {transform_indices = @transform_14, window_bounds = array<i64: 1, 32, 128>}]} {
    %c0 = arith.constant 0 : index
    %c0_0 = arith.constant 0 : index
    %c0_1 = arith.constant 0 : index
    %0 = vector.load %arg1[%c0, %c0_0, %c0_1] : memref<1x32x48xbf16, #tpu.memory_space<vmem>>, vector<1x32x48xbf16>
    %1 = vector.shape_cast %0 : vector<1x32x48xbf16> to vector<32x48xbf16>
    %c0_2 = arith.constant 0 : index
    %c0_3 = arith.constant 0 : index
    %2 = vector.load %arg2[%c0_2, %c0_3] : memref<48x128xbf16, #tpu.memory_space<vmem>>, vector<48x128xbf16>
    %cst = arith.constant dense<0.000000e+00> : vector<32x128xf32>
    %3 = tpu.matmul %1, %2, %cst {dimension_numbers = #tpu.dot_dimension_numbers<[1], [0], [0], [1], [0, 0, 1, 1], [], []>} : vector<32x48xbf16>, vector<48x128xbf16>, vector<32x128xf32> -> vector<32x128xf32>
    %c0_4 = arith.constant 0 : index
    %c0_5 = arith.constant 0 : index
    %4 = vector.load %arg3[%c0_4, %c0_5] : memref<32x128xf32, #tpu.memory_space<vmem>>, vector<32x128xf32>
    %5 = arith.addf %3, %4 : vector<32x128xf32>
    %6 = tpu.iota {dimensions = array<i32: 2>} : vector<1x1x32xi32>
    %c17_i32 = arith.constant 17 : i32
    %7 = vector.broadcast %c17_i32 : i32 to vector<1x1x32xi32>
    %8 = arith.cmpi slt, %6, %7 : vector<1x1x32xi32>
    %cst_6 = arith.constant 0.000000e+00 : f32
    %cst_7 = arith.constant -1.000000e+30 : f32
    %9 = vector.broadcast %cst_6 : f32 to vector<1x1x32xf32>
    %10 = vector.broadcast %cst_7 : f32 to vector<1x1x32xf32>
    %11 = arith.select %8, %9, %10 : vector<1x1x32xi1>, vector<1x1x32xf32>
    %c0_8 = arith.constant 0 : index
    %c0_9 = arith.constant 0 : index
    %c0_10 = arith.constant 0 : index
    %12 = vector.load %arg7[%c0_8, %c0_9, %c0_10] : memref<2x1x128xf32, #tpu.memory_space<vmem>>, vector<1x1x128xf32>
    %13 = vector.shape_cast %12 : vector<1x1x128xf32> to vector<1x128xf32>
    %c0_11 = arith.constant 0 : index
    %c0_12 = arith.constant 0 : index
    %c0_13 = arith.constant 0 : index
    %14 = vector.load %arg8[%c0_11, %c0_12, %c0_13] : memref<2x1x128xf32, #tpu.memory_space<vmem>>, vector<1x1x128xf32>
    %15 = vector.shape_cast %14 : vector<1x1x128xf32> to vector<1x128xf32>
    %cst_14 = arith.constant dense<0.000000e+00> : vector<32xf32>
    %16 = vector.multi_reduction <add>, %5, %cst_14 [1] : vector<32x128xf32> to vector<32xf32>
    %17 = vector.shape_cast %16 : vector<32xf32> to vector<32x1xf32>
    %cst_15 = arith.constant 1.280000e+02 : f32
    %18 = vector.broadcast %cst_15 : f32 to vector<32x1xf32>
    %19 = arith.divf %17, %18 : vector<32x1xf32>
    %20 = vector.broadcast %19 : vector<32x1xf32> to vector<32x128xf32>
    %21 = arith.subf %5, %20 : vector<32x128xf32>
    %22 = arith.mulf %21, %21 : vector<32x128xf32>
    %cst_16 = arith.constant dense<0.000000e+00> : vector<32xf32>
    %23 = vector.multi_reduction <add>, %22, %cst_16 [1] : vector<32x128xf32> to vector<32xf32>
    %24 = vector.shape_cast %23 : vector<32xf32> to vector<32x1xf32>
    %cst_17 = arith.constant 1.280000e+02 : f32
    %25 = vector.broadcast %cst_17 : f32 to vector<32x1xf32>
    %26 = arith.divf %24, %25 : vector<32x1xf32>
    %27 = vector.broadcast %19 : vector<32x1xf32> to vector<32x128xf32>
    %28 = arith.subf %5, %27 : vector<32x128xf32>
    %cst_18 = arith.constant 9.99999974E-6 : f32
    %29 = vector.broadcast %cst_18 : f32 to vector<32x1xf32>
    %30 = arith.addf %26, %29 : vector<32x1xf32>
    %31 = math.rsqrt %30 : vector<32x1xf32>
    %32 = vector.broadcast %31 : vector<32x1xf32> to vector<32x128xf32>
    %33 = arith.mulf %28, %32 : vector<32x128xf32>
    %34 = vector.broadcast %13 : vector<1x128xf32> to vector<32x128xf32>
    %35 = arith.mulf %33, %34 : vector<32x128xf32>
    %36 = vector.broadcast %15 : vector<1x128xf32> to vector<32x128xf32>
    %37 = arith.addf %35, %36 : vector<32x128xf32>
    %38 = arith.truncf %37 : vector<32x128xf32> to vector<32x128xbf16>
    %c0_19 = arith.constant 0 : index
    %c0_20 = arith.constant 0 : index
    %39 = vector.load %arg4[%c0_19, %c0_20] : memref<128x384xbf16, #tpu.memory_space<vmem>>, vector<128x384xbf16>
    %cst_21 = arith.constant dense<0.000000e+00> : vector<32x384xf32>
    %40 = tpu.matmul %38, %39, %cst_21 {dimension_numbers = #tpu.dot_dimension_numbers<[1], [0], [0], [1], [0, 0, 1, 1], [], []>} : vector<32x128xbf16>, vector<128x384xbf16>, vector<32x384xf32> -> vector<32x384xf32>
    %41 = arith.truncf %40 : vector<32x384xf32> to vector<32x384xbf16>
    %42 = vector.extract_strided_slice %41 {offsets = [0, 0], sizes = [32, 16], strides = [1, 1]} : vector<32x384xbf16> to vector<32x16xbf16>
    %43 = vector.extract_strided_slice %41 {offsets = [0, 16], sizes = [32, 16], strides = [1, 1]} : vector<32x384xbf16> to vector<32x16xbf16>
    %44 = vector.extract_strided_slice %41 {offsets = [0, 32], sizes = [32, 16], strides = [1, 1]} : vector<32x384xbf16> to vector<32x16xbf16>
    %45 = vector.extract_strided_slice %41 {offsets = [0, 48], sizes = [32, 16], strides = [1, 1]} : vector<32x384xbf16> to vector<32x16xbf16>
    %46 = vector.extract_strided_slice %41 {offsets = [0, 64], sizes = [32, 16], strides = [1, 1]} : vector<32x384xbf16> to vector<32x16xbf16>
    %47 = vector.extract_strided_slice %41 {offsets = [0, 80], sizes = [32, 16], strides = [1, 1]} : vector<32x384xbf16> to vector<32x16xbf16>
    %48 = vector.extract_strided_slice %41 {offsets = [0, 96], sizes = [32, 16], strides = [1, 1]} : vector<32x384xbf16> to vector<32x16xbf16>
    %49 = vector.extract_strided_slice %41 {offsets = [0, 112], sizes = [32, 16], strides = [1, 1]} : vector<32x384xbf16> to vector<32x16xbf16>
    %50 = vector.shape_cast %42 : vector<32x16xbf16> to vector<1x32x16xbf16>
    %51 = vector.shape_cast %43 : vector<32x16xbf16> to vector<1x32x16xbf16>
    %52 = vector.shape_cast %44 : vector<32x16xbf16> to vector<1x32x16xbf16>
    %53 = vector.shape_cast %45 : vector<32x16xbf16> to vector<1x32x16xbf16>
    %54 = vector.shape_cast %46 : vector<32x16xbf16> to vector<1x32x16xbf16>
    %55 = vector.shape_cast %47 : vector<32x16xbf16> to vector<1x32x16xbf16>
    %56 = vector.shape_cast %48 : vector<32x16xbf16> to vector<1x32x16xbf16>
    %57 = vector.shape_cast %49 : vector<32x16xbf16> to vector<1x32x16xbf16>
    %58 = tpu.concatenate %50, %51, %52, %53, %54, %55, %56, %57 in 0 : vector<1x32x16xbf16>, vector<1x32x16xbf16>, vector<1x32x16xbf16>, vector<1x32x16xbf16>, vector<1x32x16xbf16>, vector<1x32x16xbf16>, vector<1x32x16xbf16>, vector<1x32x16xbf16> -> vector<8x32x16xbf16>
    %59 = vector.extract_strided_slice %41 {offsets = [0, 128], sizes = [32, 16], strides = [1, 1]} : vector<32x384xbf16> to vector<32x16xbf16>
    %60 = vector.extract_strided_slice %41 {offsets = [0, 144], sizes = [32, 16], strides = [1, 1]} : vector<32x384xbf16> to vector<32x16xbf16>
    %61 = vector.extract_strided_slice %41 {offsets = [0, 160], sizes = [32, 16], strides = [1, 1]} : vector<32x384xbf16> to vector<32x16xbf16>
    %62 = vector.extract_strided_slice %41 {offsets = [0, 176], sizes = [32, 16], strides = [1, 1]} : vector<32x384xbf16> to vector<32x16xbf16>
    %63 = vector.extract_strided_slice %41 {offsets = [0, 192], sizes = [32, 16], strides = [1, 1]} : vector<32x384xbf16> to vector<32x16xbf16>
    %64 = vector.extract_strided_slice %41 {offsets = [0, 208], sizes = [32, 16], strides = [1, 1]} : vector<32x384xbf16> to vector<32x16xbf16>
    %65 = vector.extract_strided_slice %41 {offsets = [0, 224], sizes = [32, 16], strides = [1, 1]} : vector<32x384xbf16> to vector<32x16xbf16>
    %66 = vector.extract_strided_slice %41 {offsets = [0, 240], sizes = [32, 16], strides = [1, 1]} : vector<32x384xbf16> to vector<32x16xbf16>
    %67 = vector.shape_cast %59 : vector<32x16xbf16> to vector<1x32x16xbf16>
    %68 = vector.shape_cast %60 : vector<32x16xbf16> to vector<1x32x16xbf16>
    %69 = vector.shape_cast %61 : vector<32x16xbf16> to vector<1x32x16xbf16>
    %70 = vector.shape_cast %62 : vector<32x16xbf16> to vector<1x32x16xbf16>
    %71 = vector.shape_cast %63 : vector<32x16xbf16> to vector<1x32x16xbf16>
    %72 = vector.shape_cast %64 : vector<32x16xbf16> to vector<1x32x16xbf16>
    %73 = vector.shape_cast %65 : vector<32x16xbf16> to vector<1x32x16xbf16>
    %74 = vector.shape_cast %66 : vector<32x16xbf16> to vector<1x32x16xbf16>
    %75 = tpu.concatenate %67, %68, %69, %70, %71, %72, %73, %74 in 0 : vector<1x32x16xbf16>, vector<1x32x16xbf16>, vector<1x32x16xbf16>, vector<1x32x16xbf16>, vector<1x32x16xbf16>, vector<1x32x16xbf16>, vector<1x32x16xbf16>, vector<1x32x16xbf16> -> vector<8x32x16xbf16>
    %76 = vector.extract_strided_slice %41 {offsets = [0, 256], sizes = [32, 16], strides = [1, 1]} : vector<32x384xbf16> to vector<32x16xbf16>
    %77 = vector.extract_strided_slice %41 {offsets = [0, 272], sizes = [32, 16], strides = [1, 1]} : vector<32x384xbf16> to vector<32x16xbf16>
    %78 = vector.extract_strided_slice %41 {offsets = [0, 288], sizes = [32, 16], strides = [1, 1]} : vector<32x384xbf16> to vector<32x16xbf16>
    %79 = vector.extract_strided_slice %41 {offsets = [0, 304], sizes = [32, 16], strides = [1, 1]} : vector<32x384xbf16> to vector<32x16xbf16>
    %80 = vector.extract_strided_slice %41 {offsets = [0, 320], sizes = [32, 16], strides = [1, 1]} : vector<32x384xbf16> to vector<32x16xbf16>
    %81 = vector.extract_strided_slice %41 {offsets = [0, 336], sizes = [32, 16], strides = [1, 1]} : vector<32x384xbf16> to vector<32x16xbf16>
    %82 = vector.extract_strided_slice %41 {offsets = [0, 352], sizes = [32, 16], strides = [1, 1]} : vector<32x384xbf16> to vector<32x16xbf16>
    %83 = vector.extract_strided_slice %41 {offsets = [0, 368], sizes = [32, 16], strides = [1, 1]} : vector<32x384xbf16> to vector<32x16xbf16>
    %84 = vector.shape_cast %76 : vector<32x16xbf16> to vector<1x32x16xbf16>
    %85 = vector.shape_cast %77 : vector<32x16xbf16> to vector<1x32x16xbf16>
    %86 = vector.shape_cast %78 : vector<32x16xbf16> to vector<1x32x16xbf16>
    %87 = vector.shape_cast %79 : vector<32x16xbf16> to vector<1x32x16xbf16>
    %88 = vector.shape_cast %80 : vector<32x16xbf16> to vector<1x32x16xbf16>
    %89 = vector.shape_cast %81 : vector<32x16xbf16> to vector<1x32x16xbf16>
    %90 = vector.shape_cast %82 : vector<32x16xbf16> to vector<1x32x16xbf16>
    %91 = vector.shape_cast %83 : vector<32x16xbf16> to vector<1x32x16xbf16>
    %92 = tpu.concatenate %84, %85, %86, %87, %88, %89, %90, %91 in 0 : vector<1x32x16xbf16>, vector<1x32x16xbf16>, vector<1x32x16xbf16>, vector<1x32x16xbf16>, vector<1x32x16xbf16>, vector<1x32x16xbf16>, vector<1x32x16xbf16>, vector<1x32x16xbf16> -> vector<8x32x16xbf16>
    "tpu.trace_start"() <{level = 10 : i32, message = "hnd,hmd->hnm"}> : () -> ()
    %cst_22 = arith.constant dense<0.000000e+00> : vector<8x32x32xf32>
    %93 = tpu.matmul %58, %75, %cst_22 {dimension_numbers = #tpu.dot_dimension_numbers<[2], [2], [1], [1], [0, 0, 0, 1, 1, 1], [0], [0]>} : vector<8x32x16xbf16>, vector<8x32x16xbf16>, vector<8x32x32xf32> -> vector<8x32x32xf32>
    "tpu.trace_stop"() : () -> ()
    %cst_23 = arith.constant 2.500000e-01 : f32
    %94 = vector.broadcast %cst_23 : f32 to vector<8x32x32xf32>
    %95 = arith.mulf %93, %94 : vector<8x32x32xf32>
    %96 = vector.broadcast %11 : vector<1x1x32xf32> to vector<8x32x32xf32>
    %97 = arith.addf %95, %96 : vector<8x32x32xf32>
    %cst_24 = arith.constant dense<0xFF800000> : vector<8x32xf32>
    %98 = vector.multi_reduction <maximumf>, %97, %cst_24 [2] : vector<8x32x32xf32> to vector<8x32xf32>
    %99 = vector.shape_cast %98 : vector<8x32xf32> to vector<8x32x1xf32>
    %100 = vector.broadcast %99 : vector<8x32x1xf32> to vector<8x32x32xf32>
    %101 = arith.subf %97, %100 : vector<8x32x32xf32>
    %102 = math.exp %101 : vector<8x32x32xf32>
    %cst_25 = arith.constant dense<0.000000e+00> : vector<8x32xf32>
    %103 = vector.multi_reduction <add>, %102, %cst_25 [2] : vector<8x32x32xf32> to vector<8x32xf32>
    %104 = vector.shape_cast %103 : vector<8x32xf32> to vector<8x32x1xf32>
    %105 = tpu.reciprocal %104 {approx = true} : vector<8x32x1xf32> -> vector<8x32x1xf32>
    %106 = vector.broadcast %105 : vector<8x32x1xf32> to vector<8x32x32xf32>
    %107 = arith.mulf %102, %106 : vector<8x32x32xf32>
    %108 = arith.truncf %107 : vector<8x32x32xf32> to vector<8x32x32xbf16>
    "tpu.trace_start"() <{level = 10 : i32, message = "hnm,hmd->hnd"}> : () -> ()
    %cst_26 = arith.constant dense<0.000000e+00> : vector<8x32x16xf32>
    %109 = tpu.matmul %108, %92, %cst_26 {dimension_numbers = #tpu.dot_dimension_numbers<[2], [1], [1], [2], [0, 0, 0, 1, 1, 2], [0], [0]>} : vector<8x32x32xbf16>, vector<8x32x16xbf16>, vector<8x32x16xf32> -> vector<8x32x16xf32>
    "tpu.trace_stop"() : () -> ()
    %110 = vector.extract_strided_slice %109 {offsets = [0, 0, 0], sizes = [1, 32, 16], strides = [1, 1, 1]} : vector<8x32x16xf32> to vector<1x32x16xf32>
    %111 = vector.shape_cast %110 : vector<1x32x16xf32> to vector<32x16xf32>
    %112 = vector.extract_strided_slice %109 {offsets = [1, 0, 0], sizes = [1, 32, 16], strides = [1, 1, 1]} : vector<8x32x16xf32> to vector<1x32x16xf32>
    %113 = vector.shape_cast %112 : vector<1x32x16xf32> to vector<32x16xf32>
    %114 = vector.extract_strided_slice %109 {offsets = [2, 0, 0], sizes = [1, 32, 16], strides = [1, 1, 1]} : vector<8x32x16xf32> to vector<1x32x16xf32>
    %115 = vector.shape_cast %114 : vector<1x32x16xf32> to vector<32x16xf32>
    %116 = vector.extract_strided_slice %109 {offsets = [3, 0, 0], sizes = [1, 32, 16], strides = [1, 1, 1]} : vector<8x32x16xf32> to vector<1x32x16xf32>
    %117 = vector.shape_cast %116 : vector<1x32x16xf32> to vector<32x16xf32>
    %118 = vector.extract_strided_slice %109 {offsets = [4, 0, 0], sizes = [1, 32, 16], strides = [1, 1, 1]} : vector<8x32x16xf32> to vector<1x32x16xf32>
    %119 = vector.shape_cast %118 : vector<1x32x16xf32> to vector<32x16xf32>
    %120 = vector.extract_strided_slice %109 {offsets = [5, 0, 0], sizes = [1, 32, 16], strides = [1, 1, 1]} : vector<8x32x16xf32> to vector<1x32x16xf32>
    %121 = vector.shape_cast %120 : vector<1x32x16xf32> to vector<32x16xf32>
    %122 = vector.extract_strided_slice %109 {offsets = [6, 0, 0], sizes = [1, 32, 16], strides = [1, 1, 1]} : vector<8x32x16xf32> to vector<1x32x16xf32>
    %123 = vector.shape_cast %122 : vector<1x32x16xf32> to vector<32x16xf32>
    %124 = vector.extract_strided_slice %109 {offsets = [7, 0, 0], sizes = [1, 32, 16], strides = [1, 1, 1]} : vector<8x32x16xf32> to vector<1x32x16xf32>
    %125 = vector.shape_cast %124 : vector<1x32x16xf32> to vector<32x16xf32>
    %126 = tpu.concatenate %111, %113, %115, %117, %119, %121, %123, %125 in 1 : vector<32x16xf32>, vector<32x16xf32>, vector<32x16xf32>, vector<32x16xf32>, vector<32x16xf32>, vector<32x16xf32>, vector<32x16xf32>, vector<32x16xf32> -> vector<32x128xf32>
    %127 = arith.truncf %126 : vector<32x128xf32> to vector<32x128xbf16>
    %c0_27 = arith.constant 0 : index
    %c0_28 = arith.constant 0 : index
    %128 = vector.load %arg5[%c0_27, %c0_28] : memref<128x128xbf16, #tpu.memory_space<vmem>>, vector<128x128xbf16>
    %cst_29 = arith.constant dense<0.000000e+00> : vector<32x128xf32>
    %129 = tpu.matmul %127, %128, %cst_29 {dimension_numbers = #tpu.dot_dimension_numbers<[1], [0], [0], [1], [0, 0, 1, 1], [], []>} : vector<32x128xbf16>, vector<128x128xbf16>, vector<32x128xf32> -> vector<32x128xf32>
    %c0_30 = arith.constant 0 : index
    %c0_31 = arith.constant 0 : index
    %130 = vector.load %arg6[%c0_30, %c0_31] : memref<1x128xf32, #tpu.memory_space<vmem>>, vector<1x128xf32>
    %131 = vector.broadcast %130 : vector<1x128xf32> to vector<32x128xf32>
    %132 = arith.addf %129, %131 : vector<32x128xf32>
    %133 = arith.addf %5, %132 : vector<32x128xf32>
    %c0_32 = arith.constant 0 : index
    %c0_33 = arith.constant 0 : index
    %c0_34 = arith.constant 0 : index
    %134 = vector.load %arg9[%c0_32, %c0_33, %c0_34] : memref<2x1x128xf32, #tpu.memory_space<vmem>>, vector<1x1x128xf32>
    %135 = vector.shape_cast %134 : vector<1x1x128xf32> to vector<1x128xf32>
    %c0_35 = arith.constant 0 : index
    %c0_36 = arith.constant 0 : index
    %c0_37 = arith.constant 0 : index
    %136 = vector.load %arg10[%c0_35, %c0_36, %c0_37] : memref<2x1x128xf32, #tpu.memory_space<vmem>>, vector<1x1x128xf32>
    %137 = vector.shape_cast %136 : vector<1x1x128xf32> to vector<1x128xf32>
    %cst_38 = arith.constant dense<0.000000e+00> : vector<32xf32>
    %138 = vector.multi_reduction <add>, %133, %cst_38 [1] : vector<32x128xf32> to vector<32xf32>
    %139 = vector.shape_cast %138 : vector<32xf32> to vector<32x1xf32>
    %cst_39 = arith.constant 1.280000e+02 : f32
    %140 = vector.broadcast %cst_39 : f32 to vector<32x1xf32>
    %141 = arith.divf %139, %140 : vector<32x1xf32>
    %142 = vector.broadcast %141 : vector<32x1xf32> to vector<32x128xf32>
    %143 = arith.subf %133, %142 : vector<32x128xf32>
    %144 = arith.mulf %143, %143 : vector<32x128xf32>
    %cst_40 = arith.constant dense<0.000000e+00> : vector<32xf32>
    %145 = vector.multi_reduction <add>, %144, %cst_40 [1] : vector<32x128xf32> to vector<32xf32>
    %146 = vector.shape_cast %145 : vector<32xf32> to vector<32x1xf32>
    %cst_41 = arith.constant 1.280000e+02 : f32
    %147 = vector.broadcast %cst_41 : f32 to vector<32x1xf32>
    %148 = arith.divf %146, %147 : vector<32x1xf32>
    %149 = vector.broadcast %141 : vector<32x1xf32> to vector<32x128xf32>
    %150 = arith.subf %133, %149 : vector<32x128xf32>
    %cst_42 = arith.constant 9.99999974E-6 : f32
    %151 = vector.broadcast %cst_42 : f32 to vector<32x1xf32>
    %152 = arith.addf %148, %151 : vector<32x1xf32>
    %153 = math.rsqrt %152 : vector<32x1xf32>
    %154 = vector.broadcast %153 : vector<32x1xf32> to vector<32x128xf32>
    %155 = arith.mulf %150, %154 : vector<32x128xf32>
    %156 = vector.broadcast %135 : vector<1x128xf32> to vector<32x128xf32>
    %157 = arith.mulf %155, %156 : vector<32x128xf32>
    %158 = vector.broadcast %137 : vector<1x128xf32> to vector<32x128xf32>
    %159 = arith.addf %157, %158 : vector<32x128xf32>
    %160 = arith.truncf %159 : vector<32x128xf32> to vector<32x128xbf16>
    %c0_43 = arith.constant 0 : index
    %c0_44 = arith.constant 0 : index
    %c0_45 = arith.constant 0 : index
    %161 = vector.load %arg11[%c0_43, %c0_44, %c0_45] : memref<2x128x256xbf16, #tpu.memory_space<vmem>>, vector<1x128x256xbf16>
    %162 = vector.shape_cast %161 : vector<1x128x256xbf16> to vector<128x256xbf16>
    %cst_46 = arith.constant dense<0.000000e+00> : vector<32x256xf32>
    %163 = tpu.matmul %160, %162, %cst_46 {dimension_numbers = #tpu.dot_dimension_numbers<[1], [0], [0], [1], [0, 0, 1, 1], [], []>} : vector<32x128xbf16>, vector<128x256xbf16>, vector<32x256xf32> -> vector<32x256xf32>
    %c0_47 = arith.constant 0 : index
    %c0_48 = arith.constant 0 : index
    %c0_49 = arith.constant 0 : index
    %164 = vector.load %arg12[%c0_47, %c0_48, %c0_49] : memref<2x1x256xf32, #tpu.memory_space<vmem>>, vector<1x1x256xf32>
    %165 = vector.shape_cast %164 : vector<1x1x256xf32> to vector<1x256xf32>
    %166 = vector.broadcast %165 : vector<1x256xf32> to vector<32x256xf32>
    %167 = arith.addf %163, %166 : vector<32x256xf32>
    %cst_50 = arith.constant 5.000000e-01 : f32
    %168 = vector.broadcast %cst_50 : f32 to vector<32x256xf32>
    %169 = arith.mulf %168, %167 : vector<32x256xf32>
    %cst_51 = arith.constant 0.707106769 : f32
    %170 = vector.broadcast %cst_51 : f32 to vector<32x256xf32>
    %171 = arith.mulf %167, %170 : vector<32x256xf32>
    %172 = math.erf %171 : vector<32x256xf32>
    %cst_52 = arith.constant 1.000000e+00 : f32
    %173 = vector.broadcast %cst_52 : f32 to vector<32x256xf32>
    %174 = arith.addf %173, %172 : vector<32x256xf32>
    %175 = arith.mulf %169, %174 : vector<32x256xf32>
    %176 = arith.truncf %175 : vector<32x256xf32> to vector<32x256xbf16>
    %c0_53 = arith.constant 0 : index
    %c0_54 = arith.constant 0 : index
    %c0_55 = arith.constant 0 : index
    %177 = vector.load %arg13[%c0_53, %c0_54, %c0_55] : memref<2x256x128xbf16, #tpu.memory_space<vmem>>, vector<1x256x128xbf16>
    %178 = vector.shape_cast %177 : vector<1x256x128xbf16> to vector<256x128xbf16>
    %cst_56 = arith.constant dense<0.000000e+00> : vector<32x128xf32>
    %179 = tpu.matmul %176, %178, %cst_56 {dimension_numbers = #tpu.dot_dimension_numbers<[1], [0], [0], [1], [0, 0, 1, 1], [], []>} : vector<32x256xbf16>, vector<256x128xbf16>, vector<32x128xf32> -> vector<32x128xf32>
    %c0_57 = arith.constant 0 : index
    %c0_58 = arith.constant 0 : index
    %c0_59 = arith.constant 0 : index
    %180 = vector.load %arg14[%c0_57, %c0_58, %c0_59] : memref<2x1x128xf32, #tpu.memory_space<vmem>>, vector<1x1x128xf32>
    %181 = vector.shape_cast %180 : vector<1x1x128xf32> to vector<1x128xf32>
    %182 = vector.broadcast %181 : vector<1x128xf32> to vector<32x128xf32>
    %183 = arith.addf %179, %182 : vector<32x128xf32>
    %184 = arith.addf %133, %183 : vector<32x128xf32>
    %c1 = arith.constant 1 : index
    %c0_60 = arith.constant 0 : index
    %c0_61 = arith.constant 0 : index
    %185 = vector.load %arg7[%c1, %c0_60, %c0_61] : memref<2x1x128xf32, #tpu.memory_space<vmem>>, vector<1x1x128xf32>
    %186 = vector.shape_cast %185 : vector<1x1x128xf32> to vector<1x128xf32>
    %c1_62 = arith.constant 1 : index
    %c0_63 = arith.constant 0 : index
    %c0_64 = arith.constant 0 : index
    %187 = vector.load %arg8[%c1_62, %c0_63, %c0_64] : memref<2x1x128xf32, #tpu.memory_space<vmem>>, vector<1x1x128xf32>
    %188 = vector.shape_cast %187 : vector<1x1x128xf32> to vector<1x128xf32>
    %cst_65 = arith.constant dense<0.000000e+00> : vector<32xf32>
    %189 = vector.multi_reduction <add>, %184, %cst_65 [1] : vector<32x128xf32> to vector<32xf32>
    %190 = vector.shape_cast %189 : vector<32xf32> to vector<32x1xf32>
    %cst_66 = arith.constant 1.280000e+02 : f32
    %191 = vector.broadcast %cst_66 : f32 to vector<32x1xf32>
    %192 = arith.divf %190, %191 : vector<32x1xf32>
    %193 = vector.broadcast %192 : vector<32x1xf32> to vector<32x128xf32>
    %194 = arith.subf %184, %193 : vector<32x128xf32>
    %195 = arith.mulf %194, %194 : vector<32x128xf32>
    %cst_67 = arith.constant dense<0.000000e+00> : vector<32xf32>
    %196 = vector.multi_reduction <add>, %195, %cst_67 [1] : vector<32x128xf32> to vector<32xf32>
    %197 = vector.shape_cast %196 : vector<32xf32> to vector<32x1xf32>
    %cst_68 = arith.constant 1.280000e+02 : f32
    %198 = vector.broadcast %cst_68 : f32 to vector<32x1xf32>
    %199 = arith.divf %197, %198 : vector<32x1xf32>
    %200 = vector.broadcast %192 : vector<32x1xf32> to vector<32x128xf32>
    %201 = arith.subf %184, %200 : vector<32x128xf32>
    %cst_69 = arith.constant 9.99999974E-6 : f32
    %202 = vector.broadcast %cst_69 : f32 to vector<32x1xf32>
    %203 = arith.addf %199, %202 : vector<32x1xf32>
    %204 = math.rsqrt %203 : vector<32x1xf32>
    %205 = vector.broadcast %204 : vector<32x1xf32> to vector<32x128xf32>
    %206 = arith.mulf %201, %205 : vector<32x128xf32>
    %207 = vector.broadcast %186 : vector<1x128xf32> to vector<32x128xf32>
    %208 = arith.mulf %206, %207 : vector<32x128xf32>
    %209 = vector.broadcast %188 : vector<1x128xf32> to vector<32x128xf32>
    %210 = arith.addf %208, %209 : vector<32x128xf32>
    %211 = arith.truncf %210 : vector<32x128xf32> to vector<32x128xbf16>
    %c0_70 = arith.constant 0 : index
    %c0_71 = arith.constant 0 : index
    %212 = vector.load %arg4[%c0_70, %c0_71] : memref<128x384xbf16, #tpu.memory_space<vmem>>, vector<128x384xbf16>
    %cst_72 = arith.constant dense<0.000000e+00> : vector<32x384xf32>
    %213 = tpu.matmul %211, %212, %cst_72 {dimension_numbers = #tpu.dot_dimension_numbers<[1], [0], [0], [1], [0, 0, 1, 1], [], []>} : vector<32x128xbf16>, vector<128x384xbf16>, vector<32x384xf32> -> vector<32x384xf32>
    %214 = arith.truncf %213 : vector<32x384xf32> to vector<32x384xbf16>
    %215 = vector.extract_strided_slice %214 {offsets = [0, 0], sizes = [32, 16], strides = [1, 1]} : vector<32x384xbf16> to vector<32x16xbf16>
    %216 = vector.extract_strided_slice %214 {offsets = [0, 16], sizes = [32, 16], strides = [1, 1]} : vector<32x384xbf16> to vector<32x16xbf16>
    %217 = vector.extract_strided_slice %214 {offsets = [0, 32], sizes = [32, 16], strides = [1, 1]} : vector<32x384xbf16> to vector<32x16xbf16>
    %218 = vector.extract_strided_slice %214 {offsets = [0, 48], sizes = [32, 16], strides = [1, 1]} : vector<32x384xbf16> to vector<32x16xbf16>
    %219 = vector.extract_strided_slice %214 {offsets = [0, 64], sizes = [32, 16], strides = [1, 1]} : vector<32x384xbf16> to vector<32x16xbf16>
    %220 = vector.extract_strided_slice %214 {offsets = [0, 80], sizes = [32, 16], strides = [1, 1]} : vector<32x384xbf16> to vector<32x16xbf16>
    %221 = vector.extract_strided_slice %214 {offsets = [0, 96], sizes = [32, 16], strides = [1, 1]} : vector<32x384xbf16> to vector<32x16xbf16>
    %222 = vector.extract_strided_slice %214 {offsets = [0, 112], sizes = [32, 16], strides = [1, 1]} : vector<32x384xbf16> to vector<32x16xbf16>
    %223 = vector.shape_cast %215 : vector<32x16xbf16> to vector<1x32x16xbf16>
    %224 = vector.shape_cast %216 : vector<32x16xbf16> to vector<1x32x16xbf16>
    %225 = vector.shape_cast %217 : vector<32x16xbf16> to vector<1x32x16xbf16>
    %226 = vector.shape_cast %218 : vector<32x16xbf16> to vector<1x32x16xbf16>
    %227 = vector.shape_cast %219 : vector<32x16xbf16> to vector<1x32x16xbf16>
    %228 = vector.shape_cast %220 : vector<32x16xbf16> to vector<1x32x16xbf16>
    %229 = vector.shape_cast %221 : vector<32x16xbf16> to vector<1x32x16xbf16>
    %230 = vector.shape_cast %222 : vector<32x16xbf16> to vector<1x32x16xbf16>
    %231 = tpu.concatenate %223, %224, %225, %226, %227, %228, %229, %230 in 0 : vector<1x32x16xbf16>, vector<1x32x16xbf16>, vector<1x32x16xbf16>, vector<1x32x16xbf16>, vector<1x32x16xbf16>, vector<1x32x16xbf16>, vector<1x32x16xbf16>, vector<1x32x16xbf16> -> vector<8x32x16xbf16>
    %232 = vector.extract_strided_slice %214 {offsets = [0, 128], sizes = [32, 16], strides = [1, 1]} : vector<32x384xbf16> to vector<32x16xbf16>
    %233 = vector.extract_strided_slice %214 {offsets = [0, 144], sizes = [32, 16], strides = [1, 1]} : vector<32x384xbf16> to vector<32x16xbf16>
    %234 = vector.extract_strided_slice %214 {offsets = [0, 160], sizes = [32, 16], strides = [1, 1]} : vector<32x384xbf16> to vector<32x16xbf16>
    %235 = vector.extract_strided_slice %214 {offsets = [0, 176], sizes = [32, 16], strides = [1, 1]} : vector<32x384xbf16> to vector<32x16xbf16>
    %236 = vector.extract_strided_slice %214 {offsets = [0, 192], sizes = [32, 16], strides = [1, 1]} : vector<32x384xbf16> to vector<32x16xbf16>
    %237 = vector.extract_strided_slice %214 {offsets = [0, 208], sizes = [32, 16], strides = [1, 1]} : vector<32x384xbf16> to vector<32x16xbf16>
    %238 = vector.extract_strided_slice %214 {offsets = [0, 224], sizes = [32, 16], strides = [1, 1]} : vector<32x384xbf16> to vector<32x16xbf16>
    %239 = vector.extract_strided_slice %214 {offsets = [0, 240], sizes = [32, 16], strides = [1, 1]} : vector<32x384xbf16> to vector<32x16xbf16>
    %240 = vector.shape_cast %232 : vector<32x16xbf16> to vector<1x32x16xbf16>
    %241 = vector.shape_cast %233 : vector<32x16xbf16> to vector<1x32x16xbf16>
    %242 = vector.shape_cast %234 : vector<32x16xbf16> to vector<1x32x16xbf16>
    %243 = vector.shape_cast %235 : vector<32x16xbf16> to vector<1x32x16xbf16>
    %244 = vector.shape_cast %236 : vector<32x16xbf16> to vector<1x32x16xbf16>
    %245 = vector.shape_cast %237 : vector<32x16xbf16> to vector<1x32x16xbf16>
    %246 = vector.shape_cast %238 : vector<32x16xbf16> to vector<1x32x16xbf16>
    %247 = vector.shape_cast %239 : vector<32x16xbf16> to vector<1x32x16xbf16>
    %248 = tpu.concatenate %240, %241, %242, %243, %244, %245, %246, %247 in 0 : vector<1x32x16xbf16>, vector<1x32x16xbf16>, vector<1x32x16xbf16>, vector<1x32x16xbf16>, vector<1x32x16xbf16>, vector<1x32x16xbf16>, vector<1x32x16xbf16>, vector<1x32x16xbf16> -> vector<8x32x16xbf16>
    %249 = vector.extract_strided_slice %214 {offsets = [0, 256], sizes = [32, 16], strides = [1, 1]} : vector<32x384xbf16> to vector<32x16xbf16>
    %250 = vector.extract_strided_slice %214 {offsets = [0, 272], sizes = [32, 16], strides = [1, 1]} : vector<32x384xbf16> to vector<32x16xbf16>
    %251 = vector.extract_strided_slice %214 {offsets = [0, 288], sizes = [32, 16], strides = [1, 1]} : vector<32x384xbf16> to vector<32x16xbf16>
    %252 = vector.extract_strided_slice %214 {offsets = [0, 304], sizes = [32, 16], strides = [1, 1]} : vector<32x384xbf16> to vector<32x16xbf16>
    %253 = vector.extract_strided_slice %214 {offsets = [0, 320], sizes = [32, 16], strides = [1, 1]} : vector<32x384xbf16> to vector<32x16xbf16>
    %254 = vector.extract_strided_slice %214 {offsets = [0, 336], sizes = [32, 16], strides = [1, 1]} : vector<32x384xbf16> to vector<32x16xbf16>
    %255 = vector.extract_strided_slice %214 {offsets = [0, 352], sizes = [32, 16], strides = [1, 1]} : vector<32x384xbf16> to vector<32x16xbf16>
    %256 = vector.extract_strided_slice %214 {offsets = [0, 368], sizes = [32, 16], strides = [1, 1]} : vector<32x384xbf16> to vector<32x16xbf16>
    %257 = vector.shape_cast %249 : vector<32x16xbf16> to vector<1x32x16xbf16>
    %258 = vector.shape_cast %250 : vector<32x16xbf16> to vector<1x32x16xbf16>
    %259 = vector.shape_cast %251 : vector<32x16xbf16> to vector<1x32x16xbf16>
    %260 = vector.shape_cast %252 : vector<32x16xbf16> to vector<1x32x16xbf16>
    %261 = vector.shape_cast %253 : vector<32x16xbf16> to vector<1x32x16xbf16>
    %262 = vector.shape_cast %254 : vector<32x16xbf16> to vector<1x32x16xbf16>
    %263 = vector.shape_cast %255 : vector<32x16xbf16> to vector<1x32x16xbf16>
    %264 = vector.shape_cast %256 : vector<32x16xbf16> to vector<1x32x16xbf16>
    %265 = tpu.concatenate %257, %258, %259, %260, %261, %262, %263, %264 in 0 : vector<1x32x16xbf16>, vector<1x32x16xbf16>, vector<1x32x16xbf16>, vector<1x32x16xbf16>, vector<1x32x16xbf16>, vector<1x32x16xbf16>, vector<1x32x16xbf16>, vector<1x32x16xbf16> -> vector<8x32x16xbf16>
    "tpu.trace_start"() <{level = 10 : i32, message = "hnd,hmd->hnm"}> : () -> ()
    %cst_73 = arith.constant dense<0.000000e+00> : vector<8x32x32xf32>
    %266 = tpu.matmul %231, %248, %cst_73 {dimension_numbers = #tpu.dot_dimension_numbers<[2], [2], [1], [1], [0, 0, 0, 1, 1, 1], [0], [0]>} : vector<8x32x16xbf16>, vector<8x32x16xbf16>, vector<8x32x32xf32> -> vector<8x32x32xf32>
    "tpu.trace_stop"() : () -> ()
    %cst_74 = arith.constant 2.500000e-01 : f32
    %267 = vector.broadcast %cst_74 : f32 to vector<8x32x32xf32>
    %268 = arith.mulf %266, %267 : vector<8x32x32xf32>
    %269 = vector.broadcast %11 : vector<1x1x32xf32> to vector<8x32x32xf32>
    %270 = arith.addf %268, %269 : vector<8x32x32xf32>
    %cst_75 = arith.constant dense<0xFF800000> : vector<8x32xf32>
    %271 = vector.multi_reduction <maximumf>, %270, %cst_75 [2] : vector<8x32x32xf32> to vector<8x32xf32>
    %272 = vector.shape_cast %271 : vector<8x32xf32> to vector<8x32x1xf32>
    %273 = vector.broadcast %272 : vector<8x32x1xf32> to vector<8x32x32xf32>
    %274 = arith.subf %270, %273 : vector<8x32x32xf32>
    %275 = math.exp %274 : vector<8x32x32xf32>
    %cst_76 = arith.constant dense<0.000000e+00> : vector<8x32xf32>
    %276 = vector.multi_reduction <add>, %275, %cst_76 [2] : vector<8x32x32xf32> to vector<8x32xf32>
    %277 = vector.shape_cast %276 : vector<8x32xf32> to vector<8x32x1xf32>
    %278 = tpu.reciprocal %277 {approx = true} : vector<8x32x1xf32> -> vector<8x32x1xf32>
    %279 = vector.broadcast %278 : vector<8x32x1xf32> to vector<8x32x32xf32>
    %280 = arith.mulf %275, %279 : vector<8x32x32xf32>
    %281 = arith.truncf %280 : vector<8x32x32xf32> to vector<8x32x32xbf16>
    "tpu.trace_start"() <{level = 10 : i32, message = "hnm,hmd->hnd"}> : () -> ()
    %cst_77 = arith.constant dense<0.000000e+00> : vector<8x32x16xf32>
    %282 = tpu.matmul %281, %265, %cst_77 {dimension_numbers = #tpu.dot_dimension_numbers<[2], [1], [1], [2], [0, 0, 0, 1, 1, 2], [0], [0]>} : vector<8x32x32xbf16>, vector<8x32x16xbf16>, vector<8x32x16xf32> -> vector<8x32x16xf32>
    "tpu.trace_stop"() : () -> ()
    %283 = vector.extract_strided_slice %282 {offsets = [0, 0, 0], sizes = [1, 32, 16], strides = [1, 1, 1]} : vector<8x32x16xf32> to vector<1x32x16xf32>
    %284 = vector.shape_cast %283 : vector<1x32x16xf32> to vector<32x16xf32>
    %285 = vector.extract_strided_slice %282 {offsets = [1, 0, 0], sizes = [1, 32, 16], strides = [1, 1, 1]} : vector<8x32x16xf32> to vector<1x32x16xf32>
    %286 = vector.shape_cast %285 : vector<1x32x16xf32> to vector<32x16xf32>
    %287 = vector.extract_strided_slice %282 {offsets = [2, 0, 0], sizes = [1, 32, 16], strides = [1, 1, 1]} : vector<8x32x16xf32> to vector<1x32x16xf32>
    %288 = vector.shape_cast %287 : vector<1x32x16xf32> to vector<32x16xf32>
    %289 = vector.extract_strided_slice %282 {offsets = [3, 0, 0], sizes = [1, 32, 16], strides = [1, 1, 1]} : vector<8x32x16xf32> to vector<1x32x16xf32>
    %290 = vector.shape_cast %289 : vector<1x32x16xf32> to vector<32x16xf32>
    %291 = vector.extract_strided_slice %282 {offsets = [4, 0, 0], sizes = [1, 32, 16], strides = [1, 1, 1]} : vector<8x32x16xf32> to vector<1x32x16xf32>
    %292 = vector.shape_cast %291 : vector<1x32x16xf32> to vector<32x16xf32>
    %293 = vector.extract_strided_slice %282 {offsets = [5, 0, 0], sizes = [1, 32, 16], strides = [1, 1, 1]} : vector<8x32x16xf32> to vector<1x32x16xf32>
    %294 = vector.shape_cast %293 : vector<1x32x16xf32> to vector<32x16xf32>
    %295 = vector.extract_strided_slice %282 {offsets = [6, 0, 0], sizes = [1, 32, 16], strides = [1, 1, 1]} : vector<8x32x16xf32> to vector<1x32x16xf32>
    %296 = vector.shape_cast %295 : vector<1x32x16xf32> to vector<32x16xf32>
    %297 = vector.extract_strided_slice %282 {offsets = [7, 0, 0], sizes = [1, 32, 16], strides = [1, 1, 1]} : vector<8x32x16xf32> to vector<1x32x16xf32>
    %298 = vector.shape_cast %297 : vector<1x32x16xf32> to vector<32x16xf32>
    %299 = tpu.concatenate %284, %286, %288, %290, %292, %294, %296, %298 in 1 : vector<32x16xf32>, vector<32x16xf32>, vector<32x16xf32>, vector<32x16xf32>, vector<32x16xf32>, vector<32x16xf32>, vector<32x16xf32>, vector<32x16xf32> -> vector<32x128xf32>
    %300 = arith.truncf %299 : vector<32x128xf32> to vector<32x128xbf16>
    %c0_78 = arith.constant 0 : index
    %c0_79 = arith.constant 0 : index
    %301 = vector.load %arg5[%c0_78, %c0_79] : memref<128x128xbf16, #tpu.memory_space<vmem>>, vector<128x128xbf16>
    %cst_80 = arith.constant dense<0.000000e+00> : vector<32x128xf32>
    %302 = tpu.matmul %300, %301, %cst_80 {dimension_numbers = #tpu.dot_dimension_numbers<[1], [0], [0], [1], [0, 0, 1, 1], [], []>} : vector<32x128xbf16>, vector<128x128xbf16>, vector<32x128xf32> -> vector<32x128xf32>
    %c0_81 = arith.constant 0 : index
    %c0_82 = arith.constant 0 : index
    %303 = vector.load %arg6[%c0_81, %c0_82] : memref<1x128xf32, #tpu.memory_space<vmem>>, vector<1x128xf32>
    %304 = vector.broadcast %303 : vector<1x128xf32> to vector<32x128xf32>
    %305 = arith.addf %302, %304 : vector<32x128xf32>
    %306 = arith.addf %184, %305 : vector<32x128xf32>
    %c1_83 = arith.constant 1 : index
    %c0_84 = arith.constant 0 : index
    %c0_85 = arith.constant 0 : index
    %307 = vector.load %arg9[%c1_83, %c0_84, %c0_85] : memref<2x1x128xf32, #tpu.memory_space<vmem>>, vector<1x1x128xf32>
    %308 = vector.shape_cast %307 : vector<1x1x128xf32> to vector<1x128xf32>
    %c1_86 = arith.constant 1 : index
    %c0_87 = arith.constant 0 : index
    %c0_88 = arith.constant 0 : index
    %309 = vector.load %arg10[%c1_86, %c0_87, %c0_88] : memref<2x1x128xf32, #tpu.memory_space<vmem>>, vector<1x1x128xf32>
    %310 = vector.shape_cast %309 : vector<1x1x128xf32> to vector<1x128xf32>
    %cst_89 = arith.constant dense<0.000000e+00> : vector<32xf32>
    %311 = vector.multi_reduction <add>, %306, %cst_89 [1] : vector<32x128xf32> to vector<32xf32>
    %312 = vector.shape_cast %311 : vector<32xf32> to vector<32x1xf32>
    %cst_90 = arith.constant 1.280000e+02 : f32
    %313 = vector.broadcast %cst_90 : f32 to vector<32x1xf32>
    %314 = arith.divf %312, %313 : vector<32x1xf32>
    %315 = vector.broadcast %314 : vector<32x1xf32> to vector<32x128xf32>
    %316 = arith.subf %306, %315 : vector<32x128xf32>
    %317 = arith.mulf %316, %316 : vector<32x128xf32>
    %cst_91 = arith.constant dense<0.000000e+00> : vector<32xf32>
    %318 = vector.multi_reduction <add>, %317, %cst_91 [1] : vector<32x128xf32> to vector<32xf32>
    %319 = vector.shape_cast %318 : vector<32xf32> to vector<32x1xf32>
    %cst_92 = arith.constant 1.280000e+02 : f32
    %320 = vector.broadcast %cst_92 : f32 to vector<32x1xf32>
    %321 = arith.divf %319, %320 : vector<32x1xf32>
    %322 = vector.broadcast %314 : vector<32x1xf32> to vector<32x128xf32>
    %323 = arith.subf %306, %322 : vector<32x128xf32>
    %cst_93 = arith.constant 9.99999974E-6 : f32
    %324 = vector.broadcast %cst_93 : f32 to vector<32x1xf32>
    %325 = arith.addf %321, %324 : vector<32x1xf32>
    %326 = math.rsqrt %325 : vector<32x1xf32>
    %327 = vector.broadcast %326 : vector<32x1xf32> to vector<32x128xf32>
    %328 = arith.mulf %323, %327 : vector<32x128xf32>
    %329 = vector.broadcast %308 : vector<1x128xf32> to vector<32x128xf32>
    %330 = arith.mulf %328, %329 : vector<32x128xf32>
    %331 = vector.broadcast %310 : vector<1x128xf32> to vector<32x128xf32>
    %332 = arith.addf %330, %331 : vector<32x128xf32>
    %333 = arith.truncf %332 : vector<32x128xf32> to vector<32x128xbf16>
    %c1_94 = arith.constant 1 : index
    %c0_95 = arith.constant 0 : index
    %c0_96 = arith.constant 0 : index
    %334 = vector.load %arg11[%c1_94, %c0_95, %c0_96] : memref<2x128x256xbf16, #tpu.memory_space<vmem>>, vector<1x128x256xbf16>
    %335 = vector.shape_cast %334 : vector<1x128x256xbf16> to vector<128x256xbf16>
    %cst_97 = arith.constant dense<0.000000e+00> : vector<32x256xf32>
    %336 = tpu.matmul %333, %335, %cst_97 {dimension_numbers = #tpu.dot_dimension_numbers<[1], [0], [0], [1], [0, 0, 1, 1], [], []>} : vector<32x128xbf16>, vector<128x256xbf16>, vector<32x256xf32> -> vector<32x256xf32>
    %c1_98 = arith.constant 1 : index
    %c0_99 = arith.constant 0 : index
    %c0_100 = arith.constant 0 : index
    %337 = vector.load %arg12[%c1_98, %c0_99, %c0_100] : memref<2x1x256xf32, #tpu.memory_space<vmem>>, vector<1x1x256xf32>
    %338 = vector.shape_cast %337 : vector<1x1x256xf32> to vector<1x256xf32>
    %339 = vector.broadcast %338 : vector<1x256xf32> to vector<32x256xf32>
    %340 = arith.addf %336, %339 : vector<32x256xf32>
    %cst_101 = arith.constant 5.000000e-01 : f32
    %341 = vector.broadcast %cst_101 : f32 to vector<32x256xf32>
    %342 = arith.mulf %341, %340 : vector<32x256xf32>
    %cst_102 = arith.constant 0.707106769 : f32
    %343 = vector.broadcast %cst_102 : f32 to vector<32x256xf32>
    %344 = arith.mulf %340, %343 : vector<32x256xf32>
    %345 = math.erf %344 : vector<32x256xf32>
    %cst_103 = arith.constant 1.000000e+00 : f32
    %346 = vector.broadcast %cst_103 : f32 to vector<32x256xf32>
    %347 = arith.addf %346, %345 : vector<32x256xf32>
    %348 = arith.mulf %342, %347 : vector<32x256xf32>
    %349 = arith.truncf %348 : vector<32x256xf32> to vector<32x256xbf16>
    %c1_104 = arith.constant 1 : index
    %c0_105 = arith.constant 0 : index
    %c0_106 = arith.constant 0 : index
    %350 = vector.load %arg13[%c1_104, %c0_105, %c0_106] : memref<2x256x128xbf16, #tpu.memory_space<vmem>>, vector<1x256x128xbf16>
    %351 = vector.shape_cast %350 : vector<1x256x128xbf16> to vector<256x128xbf16>
    %cst_107 = arith.constant dense<0.000000e+00> : vector<32x128xf32>
    %352 = tpu.matmul %349, %351, %cst_107 {dimension_numbers = #tpu.dot_dimension_numbers<[1], [0], [0], [1], [0, 0, 1, 1], [], []>} : vector<32x256xbf16>, vector<256x128xbf16>, vector<32x128xf32> -> vector<32x128xf32>
    %c1_108 = arith.constant 1 : index
    %c0_109 = arith.constant 0 : index
    %c0_110 = arith.constant 0 : index
    %353 = vector.load %arg14[%c1_108, %c0_109, %c0_110] : memref<2x1x128xf32, #tpu.memory_space<vmem>>, vector<1x1x128xf32>
    %354 = vector.shape_cast %353 : vector<1x1x128xf32> to vector<1x128xf32>
    %355 = vector.broadcast %354 : vector<1x128xf32> to vector<32x128xf32>
    %356 = arith.addf %352, %355 : vector<32x128xf32>
    %357 = arith.addf %306, %356 : vector<32x128xf32>
    %c0_111 = arith.constant 0 : index
    %c0_112 = arith.constant 0 : index
    %c0_113 = arith.constant 0 : index
    %358 = vector.load %arg15[%c0_111, %c0_112, %c0_113] : memref<1x32x128xf32, #tpu.memory_space<vmem>>, vector<1x32x128xf32>
    %359 = vector.shape_cast %358 : vector<1x32x128xf32> to vector<32x128xf32>
    %360 = vector.shape_cast %357 : vector<32x128xf32> to vector<1x32x128xf32>
    tpu.vector_store %arg15[%c0_111, %c0_112, %c0_113], %360 {strides = array<i32>} : memref<1x32x128xf32, #tpu.memory_space<vmem>>, vector<1x32x128xf32>,
    return
  }
  func.func @transform_0(%arg0: i32) -> (i32, i32, i32) {
    %c0_i32 = arith.constant 0 : i32
    %c0_i32_0 = arith.constant 0 : i32
    %c0_i32_1 = arith.constant 0 : i32
    return %arg0, %c0_i32, %c0_i32_0 : i32, i32, i32
  }
  func.func @transform_1(%arg0: i32) -> (i32, i32) {
    %c0_i32 = arith.constant 0 : i32
    %c0_i32_0 = arith.constant 0 : i32
    %c0_i32_1 = arith.constant 0 : i32
    return %c0_i32, %c0_i32_0 : i32, i32
  }
  func.func @transform_2(%arg0: i32) -> (i32, i32) {
    %c0_i32 = arith.constant 0 : i32
    %c0_i32_0 = arith.constant 0 : i32
    %c0_i32_1 = arith.constant 0 : i32
    return %c0_i32, %c0_i32_0 : i32, i32
  }
  func.func @transform_3(%arg0: i32) -> (i32, i32) {
    %c0_i32 = arith.constant 0 : i32
    %c0_i32_0 = arith.constant 0 : i32
    %c0_i32_1 = arith.constant 0 : i32
    return %c0_i32, %c0_i32_0 : i32, i32
  }
  func.func @transform_4(%arg0: i32) -> (i32, i32) {
    %c0_i32 = arith.constant 0 : i32
    %c0_i32_0 = arith.constant 0 : i32
    %c0_i32_1 = arith.constant 0 : i32
    return %c0_i32, %c0_i32_0 : i32, i32
  }
  func.func @transform_5(%arg0: i32) -> (i32, i32) {
    %c0_i32 = arith.constant 0 : i32
    %c0_i32_0 = arith.constant 0 : i32
    %c0_i32_1 = arith.constant 0 : i32
    return %c0_i32, %c0_i32_0 : i32, i32
  }
  func.func @transform_6(%arg0: i32) -> (i32, i32, i32) {
    %c0_i32 = arith.constant 0 : i32
    %c0_i32_0 = arith.constant 0 : i32
    %c0_i32_1 = arith.constant 0 : i32
    %c0_i32_2 = arith.constant 0 : i32
    return %c0_i32, %c0_i32_0, %c0_i32_1 : i32, i32, i32
  }
  func.func @transform_7(%arg0: i32) -> (i32, i32, i32) {
    %c0_i32 = arith.constant 0 : i32
    %c0_i32_0 = arith.constant 0 : i32
    %c0_i32_1 = arith.constant 0 : i32
    %c0_i32_2 = arith.constant 0 : i32
    return %c0_i32, %c0_i32_0, %c0_i32_1 : i32, i32, i32
  }
  func.func @transform_8(%arg0: i32) -> (i32, i32, i32) {
    %c0_i32 = arith.constant 0 : i32
    %c0_i32_0 = arith.constant 0 : i32
    %c0_i32_1 = arith.constant 0 : i32
    %c0_i32_2 = arith.constant 0 : i32
    return %c0_i32, %c0_i32_0, %c0_i32_1 : i32, i32, i32
  }
  func.func @transform_9(%arg0: i32) -> (i32, i32, i32) {
    %c0_i32 = arith.constant 0 : i32
    %c0_i32_0 = arith.constant 0 : i32
    %c0_i32_1 = arith.constant 0 : i32
    %c0_i32_2 = arith.constant 0 : i32
    return %c0_i32, %c0_i32_0, %c0_i32_1 : i32, i32, i32
  }
  func.func @transform_10(%arg0: i32) -> (i32, i32, i32) {
    %c0_i32 = arith.constant 0 : i32
    %c0_i32_0 = arith.constant 0 : i32
    %c0_i32_1 = arith.constant 0 : i32
    %c0_i32_2 = arith.constant 0 : i32
    return %c0_i32, %c0_i32_0, %c0_i32_1 : i32, i32, i32
  }
  func.func @transform_11(%arg0: i32) -> (i32, i32, i32) {
    %c0_i32 = arith.constant 0 : i32
    %c0_i32_0 = arith.constant 0 : i32
    %c0_i32_1 = arith.constant 0 : i32
    %c0_i32_2 = arith.constant 0 : i32
    return %c0_i32, %c0_i32_0, %c0_i32_1 : i32, i32, i32
  }
  func.func @transform_12(%arg0: i32) -> (i32, i32, i32) {
    %c0_i32 = arith.constant 0 : i32
    %c0_i32_0 = arith.constant 0 : i32
    %c0_i32_1 = arith.constant 0 : i32
    %c0_i32_2 = arith.constant 0 : i32
    return %c0_i32, %c0_i32_0, %c0_i32_1 : i32, i32, i32
  }
  func.func @transform_13(%arg0: i32) -> (i32, i32, i32) {
    %c0_i32 = arith.constant 0 : i32
    %c0_i32_0 = arith.constant 0 : i32
    %c0_i32_1 = arith.constant 0 : i32
    %c0_i32_2 = arith.constant 0 : i32
    return %c0_i32, %c0_i32_0, %c0_i32_1 : i32, i32, i32
  }
  func.func @transform_14(%arg0: i32) -> (i32, i32, i32) {
    %c0_i32 = arith.constant 0 : i32
    %c0_i32_0 = arith.constant 0 : i32
    %c0_i32_1 = arith.constant 0 : i32
    return %arg0, %c0_i32, %c0_i32_0 : i32, i32, i32
  }
}

</mosaic_0001>

<llo_original>
// kernel: encoder_forward.1
$region0: #{encoder_forward.1}
  #allocation0 [shape = 'u32[]', space=smem, size = 0x4, offset = 0x4, fixed_abs, tag = 'smem constant byte address 0x4 - core index']
  #allocation1 [shape = 'u32[144,128]{1,0:T(1,128)}', space=vmem, size = 0x12000, scoped, tag = 'internal scratch']
  %s0 = inlined_call_operand.vmem [shape: bf16[2,32,48], index: 0, kind: input, shape index: {}]
  %s1 = inlined_call_operand.vmem [shape: bf16[48,128], index: 1, kind: input, shape index: {}]
  %s2 = inlined_call_operand.vmem [shape: f32[32,128], index: 2, kind: input, shape index: {}]
  %s3 = inlined_call_operand.vmem [shape: bf16[128,384], index: 3, kind: input, shape index: {}]
  %s4 = inlined_call_operand.vmem [shape: bf16[128,128], index: 4, kind: input, shape index: {}]
  %s5 = inlined_call_operand.vmem [shape: f32[1,128], index: 5, kind: input, shape index: {}]
  %s6 = inlined_call_operand.vmem [shape: f32[2,1,128], index: 6, kind: input, shape index: {}]
  %s7 = inlined_call_operand.vmem [shape: f32[2,1,128], index: 7, kind: input, shape index: {}]
  %s8 = inlined_call_operand.vmem [shape: f32[2,1,128], index: 8, kind: input, shape index: {}]
  %s9 = inlined_call_operand.vmem [shape: f32[2,1,128], index: 9, kind: input, shape index: {}]
  %s10 = inlined_call_operand.vmem [shape: bf16[2,128,256], index: 10, kind: input, shape index: {}]
  %s11 = inlined_call_operand.vmem [shape: f32[2,1,256], index: 11, kind: input, shape index: {}]
  %s12 = inlined_call_operand.vmem [shape: bf16[2,256,128], index: 12, kind: input, shape index: {}]
  %s13 = inlined_call_operand.vmem [shape: f32[2,1,128], index: 13, kind: input, shape index: {}]
  %s14 = inlined_call_operand.vmem [shape: f32[2,32,128], index: 14, kind: output, shape index: {}]
  %s15 = sld [smem:[#allocation0]]
  $region89: #{encoder_forward.1} parent=0
    _
  %s17 = ssub.s32 1, %s15
  %s18 = scalar_select 0, %s17, %s15
  loop: start=0, step=1, limit=4
  $region2: #{encoder_forward.1} parent=0 // loop_pre_header
    _
  $region3: #{encoder_forward.1} parent=0 // loop_header
    %s20 = sphi 0, %s24
    %p21 = scmp.ge.s32.totalorder %s20, 4
    %s30 = sphi 0, %s32
    %s33 = sphi 0, %s30
    %s34 = sphi 0, %s33
    %s50 = sphi 0, %s34
    %s54 = sphi 0, %s54
    %s56 = sphi 0, %s54
    %s57 = sphi 0, %s56
    %s71 = sphi 0, %s57
    %s75 = sphi 0, %s75
    %s77 = sphi 0, %s75
    %s78 = sphi 0, %s77
    %s92 = sphi 0, %s78
    %s96 = sphi 0, %s96
    %s98 = sphi 0, %s96
    %s99 = sphi 0, %s98
    %s113 = sphi 0, %s99
    %s117 = sphi 0, %s117
    %s119 = sphi 0, %s117
    %s120 = sphi 0, %s119
    %s134 = sphi 0, %s120
    %s138 = sphi 0, %s138
    %s140 = sphi 0, %s138
    %s141 = sphi 0, %s140
    %s155 = sphi 0, %s141
    %s159 = sphi 0, %s159
    %s161 = sphi 0, %s159
    %s162 = sphi 0, %s161
    %s176 = sphi 0, %s162
    %s180 = sphi 0, %s180
    %s182 = sphi 0, %s180
    %s183 = sphi 0, %s182
    %s197 = sphi 0, %s183
    %s201 = sphi 0, %s201
    %s203 = sphi 0, %s201
    %s204 = sphi 0, %s203
    %s218 = sphi 0, %s204
    %s222 = sphi 0, %s222
    %s224 = sphi 0, %s222
    %s225 = sphi 0, %s224
    %s239 = sphi 0, %s225
    %s243 = sphi 0, %s243
    %s245 = sphi 0, %s243
    %s246 = sphi 0, %s245
    %s260 = sphi 0, %s246
    %s264 = sphi 0, %s264
    %s266 = sphi 0, %s264
    %s267 = sphi 0, %s266
    %s281 = sphi 0, %s267
    %s285 = sphi 0, %s285
    %s287 = sphi 0, %s285
    %s288 = sphi 0, %s287
    %s302 = sphi 0, %s288
    %s306 = sphi 0, %s306
    %s308 = sphi 0, %s306
    %s309 = sphi 0, %s308
    %s323 = sphi 0, %s309
    %s329 = sphi 0, %s331
    %s332 = sphi 0, %s329
    %s333 = sphi 0, %s332
    %s349 = sphi 0, %s333
  $region4: #{encoder_forward.1} parent=0 // loop_header_branch
    %23 = sbr.rel (%p21) target = $region8
  $region5: #{encoder_forward.1} parent=0 // loop_body
    %s25 = ssub.s32 %s20, 1
    %s26 = ssub.s32 %s20, 2
    %s27 = sadd.s32 %s20, 1
    %s28 = ssub.s32 %s20, %s27
    %p29 = scmp.eq.s32.totalorder %s28, 0
    %s31 = sadd.s32 %s30, 1
    %s32 = scalar_select %p29, %s30, %s31
    %p35 = pneg %p29
    %p36 = scmp.eq.s32.totalorder %s20, 1
    %p37 = por %p35, %p36
    %p38 = scmp.ne.s32.totalorder %s30, %s33
    %p39 = scmp.eq.s32.totalorder %s20, 0
    %p40 = por %p38, %p39
    %p41 = scmp.ne.s32.totalorder %s30, %s33
    %p42 = scmp.eq.s32.totalorder %s25, 1
    %p43 = por %p41, %p42
    %p44 = scmp.ne.s32.totalorder %s33, %s34
    %p45 = scmp.eq.s32.totalorder %s25, 0
    %p46 = por %p44, %p45
    %p47 = scmp.ne.s32.totalorder %s33, %s34
    %p48 = scmp.eq.s32.totalorder %s26, 1
    %p49 = por %p47, %p48
    %p51 = scmp.ne.s32.totalorder %s34, %s50
    %p52 = scmp.eq.s32.totalorder %s26, 0
    %p53 = por %p51, %p52
    %s55 = sadd.s32 %s54, 1
    %p58 = scmp.eq.s32.totalorder %s20, 1
    %p59 = scmp.ne.s32.totalorder %s54, %s56
    %p60 = scmp.eq.s32.totalorder %s20, 0
    %p61 = por %p59, %p60
    %p62 = scmp.ne.s32.totalorder %s54, %s56
    %p63 = scmp.eq.s32.totalorder %s25, 1
    %p64 = por %p62, %p63
    %p65 = scmp.ne.s32.totalorder %s56, %s57
    %p66 = scmp.eq.s32.totalorder %s25, 0
    %p67 = por %p65, %p66
    %p68 = scmp.ne.s32.totalorder %s56, %s57
    %p69 = scmp.eq.s32.totalorder %s26, 1
    %p70 = por %p68, %p69
    %p72 = scmp.ne.s32.totalorder %s57, %s71
    %p73 = scmp.eq.s32.totalorder %s26, 0
    %p74 = por %p72, %p73
    %s76 = sadd.s32 %s75, 1
    %p79 = scmp.eq.s32.totalorder %s20, 1
    %p80 = scmp.ne.s32.totalorder %s75, %s77
    %p81 = scmp.eq.s32.totalorder %s20, 0
    %p82 = por %p80, %p81
    %p83 = scmp.ne.s32.totalorder %s75, %s77
    %p84 = scmp.eq.s32.totalorder %s25, 1
    %p85 = por %p83, %p84
    %p86 = scmp.ne.s32.totalorder %s77, %s78
    %p87 = scmp.eq.s32.totalorder %s25, 0
    %p88 = por %p86, %p87
    %p89 = scmp.ne.s32.totalorder %s77, %s78
    %p90 = scmp.eq.s32.totalorder %s26, 1
    %p91 = por %p89, %p90
    %p93 = scmp.ne.s32.totalorder %s78, %s92
    %p94 = scmp.eq.s32.totalorder %s26, 0
    %p95 = por %p93, %p94
    %s97 = sadd.s32 %s96, 1
    %p100 = scmp.eq.s32.totalorder %s20, 1
    %p101 = scmp.ne.s32.totalorder %s96, %s98
    %p102 = scmp.eq.s32.totalorder %s20, 0
    %p103 = por %p101, %p102
    %p104 = scmp.ne.s32.totalorder %s96, %s98
    %p105 = scmp.eq.s32.totalorder %s25, 1
    %p106 = por %p104, %p105
    %p107 = scmp.ne.s32.totalorder %s98, %s99
    %p108 = scmp.eq.s32.totalorder %s25, 0
    %p109 = por %p107, %p108
    %p110 = scmp.ne.s32.totalorder %s98, %s99
    %p111 = scmp.eq.s32.totalorder %s26, 1
    %p112 = por %p110, %p111
    %p114 = scmp.ne.s32.totalorder %s99, %s113
    %p115 = scmp.eq.s32.totalorder %s26, 0
    %p116 = por %p114, %p115
    %s118 = sadd.s32 %s117, 1
    %p121 = scmp.eq.s32.totalorder %s20, 1
    %p122 = scmp.ne.s32.totalorder %s117, %s119
    %p123 = scmp.eq.s32.totalorder %s20, 0
    %p124 = por %p122, %p123
    %p125 = scmp.ne.s32.totalorder %s117, %s119
    %p126 = scmp.eq.s32.totalorder %s25, 1
    %p127 = por %p125, %p126
    %p128 = scmp.ne.s32.totalorder %s119, %s120
    %p129 = scmp.eq.s32.totalorder %s25, 0
    %p130 = por %p128, %p129
    %p131 = scmp.ne.s32.totalorder %s119, %s120
    %p132 = scmp.eq.s32.totalorder %s26, 1
    %p133 = por %p131, %p132
    %p135 = scmp.ne.s32.totalorder %s120, %s134
    %p136 = scmp.eq.s32.totalorder %s26, 0
    %p137 = por %p135, %p136
    %s139 = sadd.s32 %s138, 1
    %p142 = scmp.eq.s32.totalorder %s20, 1
    %p143 = scmp.ne.s32.totalorder %s138, %s140
    %p144 = scmp.eq.s32.totalorder %s20, 0
    %p145 = por %p143, %p144
    %p146 = scmp.ne.s32.totalorder %s138, %s140
    %p147 = scmp.eq.s32.totalorder %s25, 1
    %p148 = por %p146, %p147
    %p149 = scmp.ne.s32.totalorder %s140, %s141
    %p150 = scmp.eq.s32.totalorder %s25, 0
    %p151 = por %p149, %p150
    %p152 = scmp.ne.s32.totalorder %s140, %s141
    %p153 = scmp.eq.s32.totalorder %s26, 1
    %p154 = por %p152, %p153
    %p156 = scmp.ne.s32.totalorder %s141, %s155
    %p157 = scmp.eq.s32.totalorder %s26, 0
    %p158 = por %p156, %p157
    %s160 = sadd.s32 %s159, 1
    %p163 = scmp.eq.s32.totalorder %s20, 1
    %p164 = scmp.ne.s32.totalorder %s159, %s161
    %p165 = scmp.eq.s32.totalorder %s20, 0
    %p166 = por %p164, %p165
    %p167 = scmp.ne.s32.totalorder %s159, %s161
    %p168 = scmp.eq.s32.totalorder %s25, 1
    %p169 = por %p167, %p168
    %p170 = scmp.ne.s32.totalorder %s161, %s162
    %p171 = scmp.eq.s32.totalorder %s25, 0
    %p172 = por %p170, %p171
    %p173 = scmp.ne.s32.totalorder %s161, %s162
    %p174 = scmp.eq.s32.totalorder %s26, 1
    %p175 = por %p173, %p174
    %p177 = scmp.ne.s32.totalorder %s162, %s176
    %p178 = scmp.eq.s32.totalorder %s26, 0
    %p179 = por %p177, %p178
    %s181 = sadd.s32 %s180, 1
    %p184 = scmp.eq.s32.totalorder %s20, 1
    %p185 = scmp.ne.s32.totalorder %s180, %s182
    %p186 = scmp.eq.s32.totalorder %s20, 0
    %p187 = por %p185, %p186
    %p188 = scmp.ne.s32.totalorder %s180, %s182
    %p189 = scmp.eq.s32.totalorder %s25, 1
    %p190 = por %p188, %p189
    %p191 = scmp.ne.s32.totalorder %s182, %s183
    %p192 = scmp.eq.s32.totalorder %s25, 0
    %p193 = por %p191, %p192
    %p194 = scmp.ne.s32.totalorder %s182, %s183
    %p195 = scmp.eq.s32.totalorder %s26, 1
    %p196 = por %p194, %p195
    %p198 = scmp.ne.s32.totalorder %s183, %s197
    %p199 = scmp.eq.s32.totalorder %s26, 0
    %p200 = por %p198, %p199
    %s202 = sadd.s32 %s201, 1
    %p205 = scmp.eq.s32.totalorder %s20, 1
    %p206 = scmp.ne.s32.totalorder %s201, %s203
    %p207 = scmp.eq.s32.totalorder %s20, 0
    %p208 = por %p206, %p207
    %p209 = scmp.ne.s32.totalorder %s201, %s203
    %p210 = scmp.eq.s32.totalorder %s25, 1
    %p211 = por %p209, %p210
    %p212 = scmp.ne.s32.totalorder %s203, %s204
    %p213 = scmp.eq.s32.totalorder %s25, 0
    %p214 = por %p212, %p213
    %p215 = scmp.ne.s32.totalorder %s203, %s204
    %p216 = scmp.eq.s32.totalorder %s26, 1
    %p217 = por %p215, %p216
    %p219 = scmp.ne.s32.totalorder %s204, %s218
    %p220 = scmp.eq.s32.totalorder %s26, 0
    %p221 = por %p219, %p220
    %s223 = sadd.s32 %s222, 1
    %p226 = scmp.eq.s32.totalorder %s20, 1
    %p227 = scmp.ne.s32.totalorder %s222, %s224
    %p228 = scmp.eq.s32.totalorder %s20, 0
    %p229 = por %p227, %p228
    %p230 = scmp.ne.s32.totalorder %s222, %s224
    %p231 = scmp.eq.s32.totalorder %s25, 1
    %p232 = por %p230, %p231
    %p233 = scmp.ne.s32.totalorder %s224, %s225
    %p234 = scmp.eq.s32.totalorder %s25, 0
    %p235 = por %p233, %p234
    %p236 = scmp.ne.s32.totalorder %s224, %s225
    %p237 = scmp.eq.s32.totalorder %s26, 1
    %p238 = por %p236, %p237
    %p240 = scmp.ne.s32.totalorder %s225, %s239
    %p241 = scmp.eq.s32.totalorder %s26, 0
    %p242 = por %p240, %p241
    %s244 = sadd.s32 %s243, 1
    %p247 = scmp.eq.s32.totalorder %s20, 1
    %p248 = scmp.ne.s32.totalorder %s243, %s245
    %p249 = scmp.eq.s32.totalorder %s20, 0
    %p250 = por %p248, %p249
    %p251 = scmp.ne.s32.totalorder %s243, %s245
    %p252 = scmp.eq.s32.totalorder %s25, 1
    %p253 = por %p251, %p252
    %p254 = scmp.ne.s32.totalorder %s245, %s246
    %p255 = scmp.eq.s32.totalorder %s25, 0
    %p256 = por %p254, %p255
    %p257 = scmp.ne.s32.totalorder %s245, %s246
    %p258 = scmp.eq.s32.totalorder %s26, 1
    %p259 = por %p257, %p258
    %p261 = scmp.ne.s32.totalorder %s246, %s260
    %p262 = scmp.eq.s32.totalorder %s26, 0
    %p263 = por %p261, %p262
    %s265 = sadd.s32 %s264, 1
    %p268 = scmp.eq.s32.totalorder %s20, 1
    %p269 = scmp.ne.s32.totalorder %s264, %s266
    %p270 = scmp.eq.s32.totalorder %s20, 0
    %p271 = por %p269, %p270
    %p272 = scmp.ne.s32.totalorder %s264, %s266
    %p273 = scmp.eq.s32.totalorder %s25, 1
    %p274 = por %p272, %p273
    %p275 = scmp.ne.s32.totalorder %s266, %s267
    %p276 = scmp.eq.s32.totalorder %s25, 0
    %p277 = por %p275, %p276
    %p278 = scmp.ne.s32.totalorder %s266, %s267
    %p279 = scmp.eq.s32.totalorder %s26, 1
    %p280 = por %p278, %p279
    %p282 = scmp.ne.s32.totalorder %s267, %s281
    %p283 = scmp.eq.s32.totalorder %s26, 0
    %p284 = por %p282, %p283
    %s286 = sadd.s32 %s285, 1
    %p289 = scmp.eq.s32.totalorder %s20, 1
    %p290 = scmp.ne.s32.totalorder %s285, %s287
    %p291 = scmp.eq.s32.totalorder %s20, 0
    %p292 = por %p290, %p291
    %p293 = scmp.ne.s32.totalorder %s285, %s287
    %p294 = scmp.eq.s32.totalorder %s25, 1
    %p295 = por %p293, %p294
    %p296 = scmp.ne.s32.totalorder %s287, %s288
    %p297 = scmp.eq.s32.totalorder %s25, 0
    %p298 = por %p296, %p297
    %p299 = scmp.ne.s32.totalorder %s287, %s288
    %p300 = scmp.eq.s32.totalorder %s26, 1
    %p301 = por %p299, %p300
    %p303 = scmp.ne.s32.totalorder %s288, %s302
    %p304 = scmp.eq.s32.totalorder %s26, 0
    %p305 = por %p303, %p304
    %s307 = sadd.s32 %s306, 1
    %p310 = scmp.eq.s32.totalorder %s20, 1
    %p311 = scmp.ne.s32.totalorder %s306, %s308
    %p312 = scmp.eq.s32.totalorder %s20, 0
    %p313 = por %p311, %p312
    %p314 = scmp.ne.s32.totalorder %s306, %s308
    %p315 = scmp.eq.s32.totalorder %s25, 1
    %p316 = por %p314, %p315
    %p317 = scmp.ne.s32.totalorder %s308, %s309
    %p318 = scmp.eq.s32.totalorder %s25, 0
    %p319 = por %p317, %p318
    %p320 = scmp.ne.s32.totalorder %s308, %s309
    %p321 = scmp.eq.s32.totalorder %s26, 1
    %p322 = por %p320, %p321
    %p324 = scmp.ne.s32.totalorder %s309, %s323
    %p325 = scmp.eq.s32.totalorder %s26, 0
    %p326 = por %p324, %p325
    %s327 = ssub.s32 %s20, %s27
    %p328 = scmp.eq.s32.totalorder %s327, 0
    %s330 = sadd.s32 %s329, 1
    %s331 = scalar_select %p328, %s329, %s330
    %p334 = pneg %p328
    %p335 = scmp.eq.s32.totalorder %s20, 1
    %p336 = por %p334, %p335
    %p337 = scmp.ne.s32.totalorder %s329, %s332
    %p338 = scmp.eq.s32.totalorder %s20, 0
    %p339 = por %p337, %p338
    %p340 = scmp.ne.s32.totalorder %s329, %s332
    %p341 = scmp.eq.s32.totalorder %s25, 1
    %p342 = por %p340, %p341
    %p343 = scmp.ne.s32.totalorder %s332, %s333
    %p344 = scmp.eq.s32.totalorder %s25, 0
    %p345 = por %p343, %p344
    %p346 = scmp.ne.s32.totalorder %s332, %s333
    %p347 = scmp.eq.s32.totalorder %s26, 1
    %p348 = por %p346, %p347
    %p350 = scmp.ne.s32.totalorder %s333, %s349
    %p351 = scmp.eq.s32.totalorder %s26, 0
    %p352 = por %p350, %p351
    %p353 = scmp.le.s32.totalorder 1, %s20
    %p354 = scmp.lt.s32.totalorder %s20, 3
    %p355 = pnand %p353, %p354
    %p356 = pneg %p355
    // Predicated region
    $region9: #{encoder_forward.1} parent=5 // pred_check
      _
    $region10: #{encoder_forward.1} parent=5 // pred_check_branch
      %358 = sbr.rel (%p355) target = $region12
    $region11: #{encoder_forward.1} parent=5 // pred_region
      %s359 = ssub.s32 %s20, 1
      // Predicated region
      $region13: #{encoder_forward.1} parent=11 // pred_check
        %p360 = pneg %p67
      $region14: #{encoder_forward.1} parent=11 // pred_check_branch
        %362 = sbr.rel (%p360) target = $region16
      $region15: #{encoder_forward.1} parent=11 // pred_region
        _
      $region16: #{encoder_forward.1} parent=11 // pred_fallthru
        _
      // Predicated region
      $region17: #{encoder_forward.1} parent=11 // pred_check
        %p363 = pneg %p88
      $region18: #{encoder_forward.1} parent=11 // pred_check_branch
        %365 = sbr.rel (%p363) target = $region20
      $region19: #{encoder_forward.1} parent=11 // pred_region
        _
      $region20: #{encoder_forward.1} parent=11 // pred_fallthru
        _
      // Predicated region
      $region21: #{encoder_forward.1} parent=11 // pred_check
        %p366 = pneg %p109
      $region22: #{encoder_forward.1} parent=11 // pred_check_branch
        %368 = sbr.rel (%p366) target = $region24
      $region23: #{encoder_forward.1} parent=11 // pred_region
        _
      $region24: #{encoder_forward.1} parent=11 // pred_fallthru
        _
      // Predicated region
      $region25: #{encoder_forward.1} parent=11 // pred_check
        %p369 = pneg %p130
      $region26: #{encoder_forward.1} parent=11 // pred_check_branch
        %371 = sbr.rel (%p369) target = $region28
      $region27: #{encoder_forward.1} parent=11 // pred_region
        _
      $region28: #{encoder_forward.1} parent=11 // pred_fallthru
        _
      // Predicated region
      $region29: #{encoder_forward.1} parent=11 // pred_check
        %p372 = pneg %p151
      $region30: #{encoder_forward.1} parent=11 // pred_check_branch
        %374 = sbr.rel (%p372) target = $region32
      $region31: #{encoder_forward.1} parent=11 // pred_region
        _
      $region32: #{encoder_forward.1} parent=11 // pred_fallthru
        _
      // Predicated region
      $region33: #{encoder_forward.1} parent=11 // pred_check
        %p375 = pneg %p172
      $region34: #{encoder_forward.1} parent=11 // pred_check_branch
        %377 = sbr.rel (%p375) target = $region36
      $region35: #{encoder_forward.1} parent=11 // pred_region
        _
      $region36: #{encoder_forward.1} parent=11 // pred_fallthru
        _
      // Predicated region
      $region37: #{encoder_forward.1} parent=11 // pred_check
        %p378 = pneg %p193
      $region38: #{encoder_forward.1} parent=11 // pred_check_branch
        %380 = sbr.rel (%p378) target = $region40
      $region39: #{encoder_forward.1} parent=11 // pred_region
        _
      $region40: #{encoder_forward.1} parent=11 // pred_fallthru
        _
      // Predicated region
      $region41: #{encoder_forward.1} parent=11 // pred_check
        %p381 = pneg %p214
      $region42: #{encoder_forward.1} parent=11 // pred_check_branch
        %383 = sbr.rel (%p381) target = $region44
      $region43: #{encoder_forward.1} parent=11 // pred_region
        _
      $region44: #{encoder_forward.1} parent=11 // pred_fallthru
        _
      // Predicated region
      $region45: #{encoder_forward.1} parent=11 // pred_check
        %p384 = pneg %p235
      $region46: #{encoder_forward.1} parent=11 // pred_check_branch
        %386 = sbr.rel (%p384) target = $region48
      $region47: #{encoder_forward.1} parent=11 // pred_region
        _
      $region48: #{encoder_forward.1} parent=11 // pred_fallthru
        _
      // Predicated region
      $region49: #{encoder_forward.1} parent=11 // pred_check
        %p387 = pneg %p256
      $region50: #{encoder_forward.1} parent=11 // pred_check_branch
        %389 = sbr.rel (%p387) target = $region52
      $region51: #{encoder_forward.1} parent=11 // pred_region
        _
      $region52: #{encoder_forward.1} parent=11 // pred_fallthru
        _
      // Predicated region
      $region53: #{encoder_forward.1} parent=11 // pred_check
        %p390 = pneg %p277
      $region54: #{encoder_forward.1} parent=11 // pred_check_branch
        %392 = sbr.rel (%p390) target = $region56
      $region55: #{encoder_forward.1} parent=11 // pred_region
        _
      $region56: #{encoder_forward.1} parent=11 // pred_fallthru
        _
      // Predicated region
      $region57: #{encoder_forward.1} parent=11 // pred_check
        %p393 = pneg %p298
      $region58: #{encoder_forward.1} parent=11 // pred_check_branch
        %395 = sbr.rel (%p393) target = $region60
      $region59: #{encoder_forward.1} parent=11 // pred_region
        _
      $region60: #{encoder_forward.1} parent=11 // pred_fallthru
        _
      // Predicated region
      $region61: #{encoder_forward.1} parent=11 // pred_check
        %p396 = pneg %p319
      $region62: #{encoder_forward.1} parent=11 // pred_check_branch
        %398 = sbr.rel (%p396) target = $region64
      $region63: #{encoder_forward.1} parent=11 // pred_region
        _
      $region64: #{encoder_forward.1} parent=11 // pred_fallthru
        _
    $region12: #{encoder_forward.1} parent=5 // pred_fallthru
      _
    %p399 = scmp.lt.s32.totalorder %s20, 2
    // Predicated region
    $region65: #{encoder_forward.1} parent=5 // pred_check
      %p400 = pneg %p399
    $region66: #{encoder_forward.1} parent=5 // pred_check_branch
      %402 = sbr.rel (%p400) target = $region68
    $region67: #{encoder_forward.1} parent=5 // pred_region
      // Predicated region
      $region69: #{encoder_forward.1} parent=67 // pred_check
        %p403 = pneg %p40
      $region70: #{encoder_forward.1} parent=67 // pred_check_branch
        %405 = sbr.rel (%p403) target = $region72
      $region71: #{encoder_forward.1} parent=67 // pred_region
        %p406 = scmp.lt.s32.totalorder %s20, 1
        %s407 = scalar_select %p406, %s20, 1
        %s408 = smul.addr %s407, 4
        %s409 = smul.addr %s408, 4
        %s410 = scalar_lea.vmem %s0, %s409
      $region72: #{encoder_forward.1} parent=67 // pred_fallthru
        _
    $region68: #{encoder_forward.1} parent=5 // pred_fallthru
      _
    %p411 = scmp.le.s32.totalorder 1, %s20
    %p412 = scmp.lt.s32.totalorder %s20, 3
    %p413 = pnand %p411, %p412
    %p414 = pneg %p413
    // Predicated region
    $region73: #{encoder_forward.1} parent=5 // pred_check
      _
    $region74: #{encoder_forward.1} parent=5 // pred_check_branch
      %416 = sbr.rel (%p413) target = $region76
    $region75: #{encoder_forward.1} parent=5 // pred_region
      %s417 = ssub.s32 %s20, 1
      %p418 = scmp.lt.s32.totalorder %s25, 1
      %s419 = scalar_select %p418, %s25, 1
      %s420 = smul.addr %s419, 4
      %s421 = smul.addr %s420, 4
      %s422 = scalar_lea.vmem %s0, %s421
      %p423 = pneg %p46
      %p424 = pneg %p43
      %p425 = pneg %p67
      %p426 = pneg %p64
      %p427 = pneg %p88
      %p428 = pneg %p85
      %p429 = pneg %p109
      %p430 = pneg %p106
      %p431 = pneg %p130
      %p432 = pneg %p127
      %p433 = pneg %p151
      %p434 = pneg %p148
      %p435 = pneg %p172
      %p436 = pneg %p169
      %p437 = pneg %p193
      %p438 = pneg %p190
      %p439 = pneg %p214
      %p440 = pneg %p211
      %p441 = pneg %p235
      %p442 = pneg %p232
      %p443 = pneg %p256
      %p444 = pneg %p253
      %p445 = pneg %p277
      %p446 = pneg %p274
      %p447 = pneg %p298
      %p448 = pneg %p295
      %p449 = pneg %p319
      %p450 = pneg %p316
      %p451 = pneg %p345
      %p452 = pneg %p342
      %p453 = scmp.lt.s32.totalorder %s25, 1
      %s454 = scalar_select %p453, %s25, 1
      %s455 = smul.addr %s454, 4
      %s456 = smul.addr %s455, 8
      %s457 = scalar_lea.vmem %s14, %s456
      %p458 = scmp.lt.s32.totalorder %s25, 1
      %s459 = scalar_select %p458, %s25, 1
      %s460 = smul.addr %s459, 4
      %s461 = smul.addr %s460, 4
      %s462 = scalar_lea.vmem %s0, %s461
      %p463 = scmp.lt.s32.totalorder %s25, 1
      %s464 = scalar_select %p463, %s25, 1
      %s465 = smul.addr %s464, 4
      %s466 = smul.addr %s465, 8
      %s467 = scalar_lea.vmem %s14, %s466
      %v469 = vld [vmem:[%s462] sm:$0xf]
      %v470 = vld [vmem:[%s462 + $0x4] sm:$0xf]
      %v471 = vld [vmem:[%s462 + $0x8] sm:$0xf]
      %v472 = vld [vmem:[%s462 + $0xc] sm:$0xf]
      %v473 = vld [vmem:[%s1] sm:$0xf]
      %v474 = vld [vmem:[%s1 + $0x4] sm:$0xf]
      %v475 = vld [vmem:[%s1 + $0x8] sm:$0xf]
      %v476 = vld [vmem:[%s1 + $0xc] sm:$0xf]
      %v477 = vld [vmem:[%s1 + $0x10] sm:$0xf]
      %v478 = vld [vmem:[%s1 + $0x14] sm:$0xf]
      %v479 = vld [vmem:[%s2] sm:$0xff]
      %v480 = vld [vmem:[%s2 + $0x8] sm:$0xff]
      %v481 = vld [vmem:[%s2 + $0x10] sm:$0xff]
      %v482 = vld [vmem:[%s2 + $0x18] sm:$0xff]
      %v487 = vunpack.c.l.b16 %v469
      %v488 = vunpack.c.l.b16 %v470
      %v489 = vunpack.c.l.b16 %v471
      %v490 = vunpack.c.l.b16 %v472
      %v491 = vpack.c.b16 %v488, %v487
      %v492 = vpack.c.b16 %v490, %v489
      %v499 = vunpack.c.l.b16 %v473
      %v500 = vunpack.c.l.b16 %v474
      %v501 = vunpack.c.l.b16 %v475
      %v502 = vunpack.c.l.b16 %v476
      %v503 = vunpack.c.l.b16 %v477
      %v504 = vunpack.c.l.b16 %v478
      %v505 = vpack.c.b16 %v500, %v499
      %v506 = vpack.c.b16 %v502, %v501
      %v507 = vpack.c.b16 %v504, %v503
      %vm511 = vcmask 392192
      %v513 = vsel %vm511, %v491, 0
      %v516 = vsel %vm511, %v492, 0
      %518 = vmatprep.subr.bf16.mxu0 0
      %519 = vmatpush1.bf16.msra.mxu0 %v505
      %520 = vmatprep.subr.bf16.mxu0 0
      %521 = vmatpush1.bf16.msra.mxu0 %v506
      %522 = vmatprep.subr.bf16.mxu0 0
      %523 = vmatpush1.bf16.msra.mxu0 %v507
      %524 = vmatprep.subr.bf16.mxu0 0
      %525 = vmatpush1.bf16.msra.mxu0 0
      %526 = vmatprep.subr.bf16.mxu0 0
      %527 = vmatpush1.bf16.msra.mxu0 0
      %528 = vmatprep.subr.bf16.mxu0 0
      %529 = vmatpush1.bf16.msra.mxu0 0
      %530 = vmatprep.subr.bf16.mxu0 0
      %531 = vmatpush1.bf16.msra.mxu0 0
      %532 = vmatprep.subr.bf16.mxu0 0
      %533 = vmatpush1.bf16.msra.mxu0 0
      %534 = vmatprep.subr.bf16.mxu0 0
      %535 = vmatpush1.bf16.msra.mxu0 0
      %536 = vmatprep.subr.bf16.mxu0 0
      %537 = vmatpush1.bf16.msra.mxu0 0
      %538 = vmatprep.subr.bf16.mxu0 0
      %539 = vmatpush1.bf16.msra.mxu0 0
      %540 = vmatprep.subr.bf16.mxu0 0
      %541 = vmatpush1.bf16.msra.mxu0 0
      %542 = vmatprep.subr.bf16.mxu0 0
      %543 = vmatpush1.bf16.msra.mxu0 0
      %544 = vmatprep.subr.bf16.mxu0 0
      %545 = vmatpush1.bf16.msra.mxu0 0
      %546 = vmatprep.subr.bf16.mxu0 0
      %547 = vmatpush1.bf16.msra.mxu0 0
      %548 = vmatprep.subr.bf16.mxu0 0
      %549 = vmatpush1.bf16.msra.mxu0 0
      %550 = vmatprep.mubr.bf16.mxu0 0
      %551 = vmatmul.mubr.bf16.gmra.mrb[0].mxu0 %v513
      %v552 = vpop.f32.mrb[0].mxu0
      %v553 = vadd.f32 %v479, %v552
      %v554 = vpop.f32.mrb[0].mxu0
      %v555 = vpop.f32.mrb[0].mxu0
      %v556 = vadd.f32 %v480, %v555
      %v557 = vpop.f32.mrb[0].mxu0
      %558 = vmatprep.mubr.bf16.mxu0 0
      %559 = vmatmul.mubr.bf16.gmra.mrb[0].mxu0 %v516
      %v560 = vpop.f32.mrb[0].mxu0
      %v561 = vadd.f32 %v481, %v560
      %v562 = vpop.f32.mrb[0].mxu0
      %v563 = vpop.f32.mrb[0].mxu0
      %v564 = vadd.f32 %v482, %v563
      %v565 = vpop.f32.mrb[0].mxu0
      %566 = vdwg.mxu0
      %v567 = vlaneseq
      %v568 = vand.u32 %v567, 127
      %vm569 = vcmp.lt.s32.totalorder %v568, 17
      %v570 = vsel %vm569, 0.0, -1e+30
      %v571 = vld [vmem:[%s6] sm:$0x1]
      %v572 = vld [vmem:[%s7] sm:$0x1]
      %573 = vadd.xlane.f32.xlu0 %v553
      %v574 = vpop.xlane.xlu0 %573
      %575 = vadd.xlane.f32.xlu0 %v556
      %v576 = vpop.xlane.xlu0 %575
      %577 = vadd.xlane.f32.xlu0 %v561
      %v578 = vpop.xlane.xlu0 %577
      %579 = vadd.xlane.f32.xlu0 %v564
      %v580 = vpop.xlane.xlu0 %579
      %v581 = vrcp.pop 128.0
      %v582 = vmul.f32 %v574, %v581
      %v583 = vmul.f32 %v576, %v581
      %v584 = vmul.f32 %v578, %v581
      %v585 = vmul.f32 %v580, %v581
      %v586 = vsub.f32 %v553, %v582
      %v587 = vsub.f32 %v556, %v583
      %v588 = vsub.f32 %v561, %v584
      %v589 = vsub.f32 %v564, %v585
      %v590 = vmul.f32 %v586, %v586
      %v591 = vmul.f32 %v587, %v587
      %v592 = vmul.f32 %v588, %v588
      %v593 = vmul.f32 %v589, %v589
      %594 = vadd.xlane.f32.xlu0 %v590
      %v595 = vpop.xlane.xlu0 %594
      %596 = vadd.xlane.f32.xlu0 %v591
      %v597 = vpop.xlane.xlu0 %596
      %598 = vadd.xlane.f32.xlu0 %v592
      %v599 = vpop.xlane.xlu0 %598
      %600 = vadd.xlane.f32.xlu0 %v593
      %v601 = vpop.xlane.xlu0 %600
      %v602 = vmul.f32 %v595, %v581
      %v603 = vmul.f32 %v597, %v581
      %v604 = vmul.f32 %v599, %v581
      %v605 = vmul.f32 %v601, %v581
      %v606 = vadd.f32 %v602, 1e-05
      %v607 = vadd.f32 %v603, 1e-05
      %v608 = vadd.f32 %v604, 1e-05
      %v609 = vadd.f32 %v605, 1e-05
      %v610 = vrsqrt.pop %v606
      %v611 = vrsqrt.pop %v607
      %v612 = vrsqrt.pop %v608
      %v613 = vrsqrt.pop %v609
      %v614 = vmul.f32 %v586, %v610
      %v615 = vmul.f32 %v587, %v611
      %v616 = vmul.f32 %v588, %v612
      %v617 = vmul.f32 %v589, %v613
      %v619 = vlaneseq
      %v620 = vshrl.u32 %v619, 7
      %v621 = vsub.s32 0, %v620
      %v622 = vrot.slane %v571, %v621
      %v624 = vmul.f32 %v614, %v622
      %v625 = vmul.f32 %v615, %v622
      %v626 = vmul.f32 %v616, %v622
      %v627 = vmul.f32 %v617, %v622
      %v629 = vlaneseq
      %v630 = vshrl.u32 %v629, 7
      %v631 = vsub.s32 0, %v630
      %v632 = vrot.slane %v572, %v631
      %v634 = vadd.f32 %v624, %v632
      %v635 = vadd.f32 %v625, %v632
      %v636 = vadd.f32 %v626, %v632
      %v637 = vadd.f32 %v627, %v632
      %v638 = vpack.c.bf16 %v635, %v634
      %v639 = vpack.c.bf16 %v637, %v636
      %v640 = vld [vmem:[%s3] sm:$0xff]
      %v641 = vld [vmem:[%s3 + $0x8] sm:$0xf]
      %v642 = vld [vmem:[%s3 + $0xc] sm:$0xff]
      %v643 = vld [vmem:[%s3 + $0x14] sm:$0xf]
      %v644 = vld [vmem:[%s3 + $0x18] sm:$0xff]
      %v645 = vld [vmem:[%s3 + $0x20] sm:$0xf]
      %v646 = vld [vmem:[%s3 + $0x24] sm:$0xff]
      %v647 = vld [vmem:[%s3 + $0x2c] sm:$0xf]
      %v648 = vld [vmem:[%s3 + $0x30] sm:$0xff]
      %v649 = vld [vmem:[%s3 + $0x38] sm:$0xf]
      %v650 = vld [vmem:[%s3 + $0x3c] sm:$0xff]
      %v651 = vld [vmem:[%s3 + $0x44] sm:$0xf]
      %v652 = vld [vmem:[%s3 + $0x48] sm:$0xff]
      %v653 = vld [vmem:[%s3 + $0x50] sm:$0xf]
      %v654 = vld [vmem:[%s3 + $0x54] sm:$0xff]
      %v655 = vld [vmem:[%s3 + $0x5c] sm:$0xf]
      %v656 = vld [vmem:[%s3 + $0x60] sm:$0xff]
      %v657 = vld [vmem:[%s3 + $0x68] sm:$0xf]
      %v658 = vld [vmem:[%s3 + $0x6c] sm:$0xff]
      %v659 = vld [vmem:[%s3 + $0x74] sm:$0xf]
      %v660 = vld [vmem:[%s3 + $0x78] sm:$0xff]
      %v661 = vld [vmem:[%s3 + $0x80] sm:$0xf]
      %v662 = vld [vmem:[%s3 + $0x84] sm:$0xff]
      %v663 = vld [vmem:[%s3 + $0x8c] sm:$0xf]
      %v664 = vld [vmem:[%s3 + $0x90] sm:$0xff]
      %v665 = vld [vmem:[%s3 + $0x98] sm:$0xf]
      %v666 = vld [vmem:[%s3 + $0x9c] sm:$0xff]
      %v667 = vld [vmem:[%s3 + $0xa4] sm:$0xf]
      %v668 = vld [vmem:[%s3 + $0xa8] sm:$0xff]
      %v669 = vld [vmem:[%s3 + $0xb0] sm:$0xf]
      %v670 = vld [vmem:[%s3 + $0xb4] sm:$0xff]
      %v671 = vld [vmem:[%s3 + $0xbc] sm:$0xf]
      %v704 = vunpack.c.l.b16 %v640
      %v705 = vunpack.c.h.b16 %v640
      %v706 = vunpack.c.l.b16 %v641
      %v707 = vunpack.c.l.b16 %v642
      %v708 = vunpack.c.h.b16 %v642
      %v709 = vunpack.c.l.b16 %v643
      %v710 = vunpack.c.l.b16 %v644
      %v711 = vunpack.c.h.b16 %v644
      %v712 = vunpack.c.l.b16 %v645
      %v713 = vunpack.c.l.b16 %v646
      %v714 = vunpack.c.h.b16 %v646
      %v715 = vunpack.c.l.b16 %v647
      %v716 = vunpack.c.l.b16 %v648
      %v717 = vunpack.c.h.b16 %v648
      %v718 = vunpack.c.l.b16 %v649
      %v719 = vunpack.c.l.b16 %v650
      %v720 = vunpack.c.h.b16 %v650
      %v721 = vunpack.c.l.b16 %v651
      %v722 = vunpack.c.l.b16 %v652
      %v723 = vunpack.c.h.b16 %v652
      %v724 = vunpack.c.l.b16 %v653
      %v725 = vunpack.c.l.b16 %v654
      %v726 = vunpack.c.h.b16 %v654
      %v727 = vunpack.c.l.b16 %v655
      %v728 = vunpack.c.l.b16 %v656
      %v729 = vunpack.c.h.b16 %v656
      %v730 = vunpack.c.l.b16 %v657
      %v731 = vunpack.c.l.b16 %v658
      %v732 = vunpack.c.h.b16 %v658
      %v733 = vunpack.c.l.b16 %v659
      %v734 = vunpack.c.l.b16 %v660
      %v735 = vunpack.c.h.b16 %v660
      %v736 = vunpack.c.l.b16 %v661
      %v737 = vunpack.c.l.b16 %v662
      %v738 = vunpack.c.h.b16 %v662
      %v739 = vunpack.c.l.b16 %v663
      %v740 = vunpack.c.l.b16 %v664
      %v741 = vunpack.c.h.b16 %v664
      %v742 = vunpack.c.l.b16 %v665
      %v743 = vunpack.c.l.b16 %v666
      %v744 = vunpack.c.h.b16 %v666
      %v745 = vunpack.c.l.b16 %v667
      %v746 = vunpack.c.l.b16 %v668
      %v747 = vunpack.c.h.b16 %v668
      %v748 = vunpack.c.l.b16 %v669
      %v749 = vunpack.c.l.b16 %v670
      %v750 = vunpack.c.h.b16 %v670
      %v751 = vunpack.c.l.b16 %v671
      %v752 = vpack.c.b16 %v707, %v704
      %v753 = vpack.c.b16 %v708, %v705
      %v754 = vpack.c.b16 %v709, %v706
      %v755 = vpack.c.b16 %v713, %v710
      %v756 = vpack.c.b16 %v714, %v711
      %v757 = vpack.c.b16 %v715, %v712
      %v758 = vpack.c.b16 %v719, %v716
      %v759 = vpack.c.b16 %v720, %v717
      %v760 = vpack.c.b16 %v721, %v718
      %v761 = vpack.c.b16 %v725, %v722
      %v762 = vpack.c.b16 %v726, %v723
      %v763 = vpack.c.b16 %v727, %v724
      %v764 = vpack.c.b16 %v731, %v728
      %v765 = vpack.c.b16 %v732, %v729
      %v766 = vpack.c.b16 %v733, %v730
      %v767 = vpack.c.b16 %v737, %v734
      %v768 = vpack.c.b16 %v738, %v735
      %v769 = vpack.c.b16 %v739, %v736
      %v770 = vpack.c.b16 %v743, %v740
      %v771 = vpack.c.b16 %v744, %v741
      %v772 = vpack.c.b16 %v745, %v742
      %v773 = vpack.c.b16 %v749, %v746
      %v774 = vpack.c.b16 %v750, %v747
      %v775 = vpack.c.b16 %v751, %v748
      %800 = vmatprep.subr.bf16.mxu0 %v753
      %801 = vmatpush1.bf16.msra.mxu0 %v752
      %802 = vmatprep.subr.bf16.mxu0 %v756
      %803 = vmatpush1.bf16.msra.mxu0 %v755
      %804 = vmatprep.subr.bf16.mxu0 %v759
      %805 = vmatpush1.bf16.msra.mxu0 %v758
      %806 = vmatprep.subr.bf16.mxu0 %v762
      %807 = vmatpush1.bf16.msra.mxu0 %v761
      %808 = vmatprep.subr.bf16.mxu0 %v765
      %809 = vmatpush1.bf16.msra.mxu0 %v764
      %810 = vmatprep.subr.bf16.mxu0 %v768
      %811 = vmatpush1.bf16.msra.mxu0 %v767
      %812 = vmatprep.subr.bf16.mxu0 %v771
      %813 = vmatpush1.bf16.msra.mxu0 %v770
      %814 = vmatprep.subr.bf16.mxu0 %v774
      %815 = vmatpush1.bf16.msra.mxu0 %v773
      %816 = vmatprep.subr.bf16.mxu0 0
      %817 = vmatpush1.bf16.msra.mxu0 0
      %818 = vmatprep.subr.bf16.mxu0 0
      %819 = vmatpush1.bf16.msra.mxu0 0
      %820 = vmatprep.subr.bf16.mxu0 0
      %821 = vmatpush1.bf16.msra.mxu0 0
      %822 = vmatprep.subr.bf16.mxu0 0
      %823 = vmatpush1.bf16.msra.mxu0 0
      %824 = vmatprep.subr.bf16.mxu0 0
      %825 = vmatpush1.bf16.msra.mxu0 0
      %826 = vmatprep.subr.bf16.mxu0 0
      %827 = vmatpush1.bf16.msra.mxu0 0
      %828 = vmatprep.subr.bf16.mxu0 0
      %829 = vmatpush1.bf16.msra.mxu0 0
      %830 = vmatprep.subr.bf16.mxu0 0
      %831 = vmatpush1.bf16.msra.mxu0 0
      %832 = vmatprep.mubr.bf16.mxu0 0
      %833 = vmatmul.mubr.bf16.gmra.mrb[0].mxu0 %v638
      %v834 = vpop.f32.mrb[0].mxu0
      %v835 = vadd.f32 0.0, %v834
      %v836 = vpop.f32.mrb[0].mxu0
      %v837 = vadd.f32 0.0, %v836
      %v838 = vpop.f32.mrb[0].mxu0
      %v839 = vadd.f32 0.0, %v838
      %v840 = vpop.f32.mrb[0].mxu0
      %v841 = vadd.f32 0.0, %v840
      %842 = vmatprep.mubr.bf16.mxu0 0
      %843 = vmatmul.mubr.bf16.gmra.mrb[0].mxu0 %v639
      %v844 = vpop.f32.mrb[0].mxu0
      %v845 = vadd.f32 0.0, %v844
      %v846 = vpop.f32.mrb[0].mxu0
      %v847 = vadd.f32 0.0, %v846
      %v848 = vpop.f32.mrb[0].mxu0
      %v849 = vadd.f32 0.0, %v848
      %v850 = vpop.f32.mrb[0].mxu0
      %v851 = vadd.f32 0.0, %v850
      %852 = vdwg.mxu0
      %853 = vmatprep.subr.bf16.mxu0 0
      %854 = vmatpush1.bf16.msra.mxu0 %v754
      %855 = vmatprep.subr.bf16.mxu0 0
      %856 = vmatpush1.bf16.msra.mxu0 %v757
      %857 = vmatprep.subr.bf16.mxu0 0
      %858 = vmatpush1.bf16.msra.mxu0 %v760
      %859 = vmatprep.subr.bf16.mxu0 0
      %860 = vmatpush1.bf16.msra.mxu0 %v763
      %861 = vmatprep.subr.bf16.mxu0 0
      %862 = vmatpush1.bf16.msra.mxu0 %v766
      %863 = vmatprep.subr.bf16.mxu0 0
      %864 = vmatpush1.bf16.msra.mxu0 %v769
      %865 = vmatprep.subr.bf16.mxu0 0
      %866 = vmatpush1.bf16.msra.mxu0 %v772
      %867 = vmatprep.subr.bf16.mxu0 0
      %868 = vmatpush1.bf16.msra.mxu0 %v775
      %869 = vmatprep.subr.bf16.mxu0 0
      %870 = vmatpush1.bf16.msra.mxu0 0
      %871 = vmatprep.subr.bf16.mxu0 0
      %872 = vmatpush1.bf16.msra.mxu0 0
      %873 = vmatprep.subr.bf16.mxu0 0
      %874 = vmatpush1.bf16.msra.mxu0 0
      %875 = vmatprep.subr.bf16.mxu0 0
      %876 = vmatpush1.bf16.msra.mxu0 0
      %877 = vmatprep.subr.bf16.mxu0 0
      %878 = vmatpush1.bf16.msra.mxu0 0
      %879 = vmatprep.subr.bf16.mxu0 0
      %880 = vmatpush1.bf16.msra.mxu0 0
      %881 = vmatprep.subr.bf16.mxu0 0
      %882 = vmatpush1.bf16.msra.mxu0 0
      %883 = vmatprep.subr.bf16.mxu0 0
      %884 = vmatpush1.bf16.msra.mxu0 0
      %885 = vmatprep.mubr.bf16.mxu0 0
      %886 = vmatmul.mubr.bf16.gmra.mrb[0].mxu0 %v638
      %v887 = vpop.f32.mrb[0].mxu0
      %v888 = vadd.f32 0.0, %v887
      %v889 = vpop.f32.mrb[0].mxu0
      %v890 = vpop.f32.mrb[0].mxu0
      %v891 = vadd.f32 0.0, %v890
      %v892 = vpop.f32.mrb[0].mxu0
      %893 = vmatprep.mubr.bf16.mxu0 0
      %894 = vmatmul.mubr.bf16.gmra.mrb[0].mxu0 %v639
      %v895 = vpop.f32.mrb[0].mxu0
      %v896 = vadd.f32 0.0, %v895
      %v897 = vpop.f32.mrb[0].mxu0
      %v898 = vpop.f32.mrb[0].mxu0
      %v899 = vadd.f32 0.0, %v898
      %v900 = vpop.f32.mrb[0].mxu0
      %901 = vdwg.mxu0
      %v902 = vpack.c.bf16 %v839, %v835
      %v903 = vpack.c.bf16 %v841, %v837
      %v904 = vpack.c.bf16 %v891, %v888
      %v905 = vpack.c.bf16 %v849, %v845
      %v906 = vpack.c.bf16 %v851, %v847
      %v907 = vpack.c.bf16 %v899, %v896
      %910 = vrot.lane.b32.xlu0 %v902, 112
      %v911 = vpop.permute.xlu0 %910
      %912 = vrot.lane.b32.xlu0 %v905, 112
      %v913 = vpop.permute.xlu0 %912
      %914 = vrot.lane.b32.xlu0 %v902, 96
      %v915 = vpop.permute.xlu0 %914
      %916 = vrot.lane.b32.xlu0 %v905, 96
      %v917 = vpop.permute.xlu0 %916
      %918 = vrot.lane.b32.xlu0 %v902, 80
      %v919 = vpop.permute.xlu0 %918
      %920 = vrot.lane.b32.xlu0 %v905, 80
      %v921 = vpop.permute.xlu0 %920
      %922 = vrot.lane.b32.xlu0 %v902, 64
      %v923 = vpop.permute.xlu0 %922
      %924 = vrot.lane.b32.xlu0 %v905, 64
      %v925 = vpop.permute.xlu0 %924
      %926 = vrot.lane.b32.xlu0 %v902, 48
      %v927 = vpop.permute.xlu0 %926
      %928 = vrot.lane.b32.xlu0 %v905, 48
      %v929 = vpop.permute.xlu0 %928
      %930 = vrot.lane.b32.xlu0 %v902, 32
      %v931 = vpop.permute.xlu0 %930
      %932 = vrot.lane.b32.xlu0 %v905, 32
      %v933 = vpop.permute.xlu0 %932
      %934 = vrot.lane.b32.xlu0 %v902, 16
      %v935 = vpop.permute.xlu0 %934
      %936 = vrot.lane.b32.xlu0 %v905, 16
      %v937 = vpop.permute.xlu0 %936
      %940 = vrot.lane.b32.xlu0 %v903, 112
      %v941 = vpop.permute.xlu0 %940
      %942 = vrot.lane.b32.xlu0 %v906, 112
      %v943 = vpop.permute.xlu0 %942
      %944 = vrot.lane.b32.xlu0 %v903, 96
      %v945 = vpop.permute.xlu0 %944
      %946 = vrot.lane.b32.xlu0 %v906, 96
      %v947 = vpop.permute.xlu0 %946
      %948 = vrot.lane.b32.xlu0 %v903, 80
      %v949 = vpop.permute.xlu0 %948
      %950 = vrot.lane.b32.xlu0 %v906, 80
      %v951 = vpop.permute.xlu0 %950
      %952 = vrot.lane.b32.xlu0 %v903, 64
      %v953 = vpop.permute.xlu0 %952
      %954 = vrot.lane.b32.xlu0 %v906, 64
      %v955 = vpop.permute.xlu0 %954
      %956 = vrot.lane.b32.xlu0 %v903, 48
      %v957 = vpop.permute.xlu0 %956
      %958 = vrot.lane.b32.xlu0 %v906, 48
      %v959 = vpop.permute.xlu0 %958
      %960 = vrot.lane.b32.xlu0 %v903, 32
      %v961 = vpop.permute.xlu0 %960
      %962 = vrot.lane.b32.xlu0 %v906, 32
      %v963 = vpop.permute.xlu0 %962
      %964 = vrot.lane.b32.xlu0 %v903, 16
      %v965 = vpop.permute.xlu0 %964
      %966 = vrot.lane.b32.xlu0 %v906, 16
      %v967 = vpop.permute.xlu0 %966
      %970 = vrot.lane.b32.xlu0 %v904, 112
      %v971 = vpop.permute.xlu0 %970
      %972 = vrot.lane.b32.xlu0 %v907, 112
      %v973 = vpop.permute.xlu0 %972
      %976 = vrot.lane.b32.xlu0 %v904, 96
      %v977 = vpop.permute.xlu0 %976
      %978 = vrot.lane.b32.xlu0 %v907, 96
      %v979 = vpop.permute.xlu0 %978
      %982 = vrot.lane.b32.xlu0 %v904, 80
      %v983 = vpop.permute.xlu0 %982
      %984 = vrot.lane.b32.xlu0 %v907, 80
      %v985 = vpop.permute.xlu0 %984
      %988 = vrot.lane.b32.xlu0 %v904, 64
      %v989 = vpop.permute.xlu0 %988
      %990 = vrot.lane.b32.xlu0 %v907, 64
      %v991 = vpop.permute.xlu0 %990
      %994 = vrot.lane.b32.xlu0 %v904, 48
      %v995 = vpop.permute.xlu0 %994
      %996 = vrot.lane.b32.xlu0 %v907, 48
      %v997 = vpop.permute.xlu0 %996
      %1000 = vrot.lane.b32.xlu0 %v904, 32
      %v1001 = vpop.permute.xlu0 %1000
      %1002 = vrot.lane.b32.xlu0 %v907, 32
      %v1003 = vpop.permute.xlu0 %1002
      %1006 = vrot.lane.b32.xlu0 %v904, 16
      %v1007 = vpop.permute.xlu0 %1006
      %1008 = vrot.lane.b32.xlu0 %v907, 16
      %v1009 = vpop.permute.xlu0 %1008
      %vm1012 = vcmask 130048
      %v1014 = vsel %vm1012, %v902, 0
      %v1017 = vsel %vm1012, %v905, 0
      %v1020 = vsel %vm1012, %v903, 0
      %v1023 = vsel %vm1012, %v906, 0
      %1025 = vmatprep.subr.bf16.mxu0 0
      %1026 = vmatpush1.bf16.xpose.msra.mxu0 %v1020
      %1027 = vmatprep.subr.bf16.mxu0 0
      %1028 = vmatpush1.bf16.xpose.msra.mxu0 %v1023
      %1029 = vmatprep.subr.bf16.mxu0 0
      %1030 = vmatpush1.bf16.xpose.msra.mxu0 0
      %1031 = vmatprep.subr.bf16.mxu0 0
      %1032 = vmatpush1.bf16.xpose.msra.mxu0 0
      %1033 = vmatprep.subr.bf16.mxu0 0
      %1034 = vmatpush1.bf16.xpose.msra.mxu0 0
      %1035 = vmatprep.subr.bf16.mxu0 0
      %1036 = vmatpush1.bf16.xpose.msra.mxu0 0
      %1037 = vmatprep.subr.bf16.mxu0 0
      %1038 = vmatpush1.bf16.xpose.msra.mxu0 0
      %1039 = vmatprep.subr.bf16.mxu0 0
      %1040 = vmatpush1.bf16.xpose.msra.mxu0 0
      %1041 = vmatprep.subr.bf16.mxu0 0
      %1042 = vmatpush1.bf16.xpose.msra.mxu0 0
      %1043 = vmatprep.subr.bf16.mxu0 0
      %1044 = vmatpush1.bf16.xpose.msra.mxu0 0
      %1045 = vmatprep.subr.bf16.mxu0 0
      %1046 = vmatpush1.bf16.xpose.msra.mxu0 0
      %1047 = vmatprep.subr.bf16.mxu0 0
      %1048 = vmatpush1.bf16.xpose.msra.mxu0 0
      %1049 = vmatprep.subr.bf16.mxu0 0
      %1050 = vmatpush1.bf16.xpose.msra.mxu0 0
      %1051 = vmatprep.subr.bf16.mxu0 0
      %1052 = vmatpush1.bf16.xpose.msra.mxu0 0
      %1053 = vmatprep.subr.bf16.mxu0 0
      %1054 = vmatpush1.bf16.xpose.msra.mxu0 0
      %1055 = vmatprep.subr.bf16.mxu0 0
      %1056 = vmatpush1.bf16.xpose.msra.mxu0 0
      %1057 = vmatprep.mubr.bf16.mxu0 0
      %1058 = vmatmul.mubr.bf16.gmra.mrb[0].mxu0 %v1014
      %v1059 = vpop.f32.mrb[0].mxu0
      %v1060 = vadd.f32 0.0, %v1059
      %v1061 = vpop.f32.mrb[0].mxu0
      %v1062 = vpop.f32.mrb[0].mxu0
      %v1063 = vadd.f32 0.0, %v1062
      %v1064 = vpop.f32.mrb[0].mxu0
      %1065 = vmatprep.mubr.bf16.mxu0 0
      %1066 = vmatmul.mubr.bf16.gmra.mrb[0].mxu0 %v1017
      %v1067 = vpop.f32.mrb[0].mxu0
      %v1068 = vadd.f32 0.0, %v1067
      %v1069 = vpop.f32.mrb[0].mxu0
      %v1070 = vpop.f32.mrb[0].mxu0
      %v1071 = vadd.f32 0.0, %v1070
      %v1072 = vpop.f32.mrb[0].mxu0
      %1073 = vdwg.mxu0
      %v1075 = vsel %vm1012, %v911, 0
      %v1078 = vsel %vm1012, %v913, 0
      %v1081 = vsel %vm1012, %v941, 0
      %v1084 = vsel %vm1012, %v943, 0
      %1086 = vmatprep.subr.bf16.mxu0 0
      %1087 = vmatpush1.bf16.xpose.msra.mxu0 %v1081
      %1088 = vmatprep.subr.bf16.mxu0 0
      %1089 = vmatpush1.bf16.xpose.msra.mxu0 %v1084
      %1090 = vmatprep.subr.bf16.mxu0 0
      %1091 = vmatpush1.bf16.xpose.msra.mxu0 0
      %1092 = vmatprep.subr.bf16.mxu0 0
      %1093 = vmatpush1.bf16.xpose.msra.mxu0 0
      %1094 = vmatprep.subr.bf16.mxu0 0
      %1095 = vmatpush1.bf16.xpose.msra.mxu0 0
      %1096 = vmatprep.subr.bf16.mxu0 0
      %1097 = vmatpush1.bf16.xpose.msra.mxu0 0
      %1098 = vmatprep.subr.bf16.mxu0 0
      %1099 = vmatpush1.bf16.xpose.msra.mxu0 0
      %1100 = vmatprep.subr.bf16.mxu0 0
      %1101 = vmatpush1.bf16.xpose.msra.mxu0 0
      %1102 = vmatprep.subr.bf16.mxu0 0
      %1103 = vmatpush1.bf16.xpose.msra.mxu0 0
      %1104 = vmatprep.subr.bf16.mxu0 0
      %1105 = vmatpush1.bf16.xpose.msra.mxu0 0
      %1106 = vmatprep.subr.bf16.mxu0 0
      %1107 = vmatpush1.bf16.xpose.msra.mxu0 0
      %1108 = vmatprep.subr.bf16.mxu0 0
      %1109 = vmatpush1.bf16.xpose.msra.mxu0 0
      %1110 = vmatprep.subr.bf16.mxu0 0
      %1111 = vmatpush1.bf16.xpose.msra.mxu0 0
      %1112 = vmatprep.subr.bf16.mxu0 0
      %1113 = vmatpush1.bf16.xpose.msra.mxu0 0
      %1114 = vmatprep.subr.bf16.mxu0 0
      %1115 = vmatpush1.bf16.xpose.msra.mxu0 0
      %1116 = vmatprep.subr.bf16.mxu0 0
      %1117 = vmatpush1.bf16.xpose.msra.mxu0 0
      %1118 = vmatprep.mubr.bf16.mxu0 0
      %1119 = vmatmul.mubr.bf16.gmra.mrb[0].mxu0 %v1075
      %v1120 = vpop.f32.mrb[0].mxu0
      %v1121 = vadd.f32 0.0, %v1120
      %v1122 = vpop.f32.mrb[0].mxu0
      %v1123 = vpop.f32.mrb[0].mxu0
      %v1124 = vadd.f32 0.0, %v1123
      %v1125 = vpop.f32.mrb[0].mxu0
      %1126 = vmatprep.mubr.bf16.mxu0 0
      %1127 = vmatmul.mubr.bf16.gmra.mrb[0].mxu0 %v1078
      %v1128 = vpop.f32.mrb[0].mxu0
      %v1129 = vadd.f32 0.0, %v1128
      %v1130 = vpop.f32.mrb[0].mxu0
      %v1131 = vpop.f32.mrb[0].mxu0
      %v1132 = vadd.f32 0.0, %v1131
      %v1133 = vpop.f32.mrb[0].mxu0
      %1134 = vdwg.mxu0
      %v1136 = vsel %vm1012, %v915, 0
      %v1139 = vsel %vm1012, %v917, 0
      %v1142 = vsel %vm1012, %v945, 0
      %v1145 = vsel %vm1012, %v947, 0
      %1147 = vmatprep.subr.bf16.mxu0 0
      %1148 = vmatpush1.bf16.xpose.msra.mxu0 %v1142
      %1149 = vmatprep.subr.bf16.mxu0 0
      %1150 = vmatpush1.bf16.xpose.msra.mxu0 %v1145
      %1151 = vmatprep.subr.bf16.mxu0 0
      %1152 = vmatpush1.bf16.xpose.msra.mxu0 0
      %1153 = vmatprep.subr.bf16.mxu0 0
      %1154 = vmatpush1.bf16.xpose.msra.mxu0 0
      %1155 = vmatprep.subr.bf16.mxu0 0
      %1156 = vmatpush1.bf16.xpose.msra.mxu0 0
      %1157 = vmatprep.subr.bf16.mxu0 0
      %1158 = vmatpush1.bf16.xpose.msra.mxu0 0
      %1159 = vmatprep.subr.bf16.mxu0 0
      %1160 = vmatpush1.bf16.xpose.msra.mxu0 0
      %1161 = vmatprep.subr.bf16.mxu0 0
      %1162 = vmatpush1.bf16.xpose.msra.mxu0 0
      %1163 = vmatprep.subr.bf16.mxu0 0
      %1164 = vmatpush1.bf16.xpose.msra.mxu0 0
      %1165 = vmatprep.subr.bf16.mxu0 0
      %1166 = vmatpush1.bf16.xpose.msra.mxu0 0
      %1167 = vmatprep.subr.bf16.mxu0 0
      %1168 = vmatpush1.bf16.xpose.msra.mxu0 0
      %1169 = vmatprep.subr.bf16.mxu0 0
      %1170 = vmatpush1.bf16.xpose.msra.mxu0 0
      %1171 = vmatprep.subr.bf16.mxu0 0
      %1172 = vmatpush1.bf16.xpose.msra.mxu0 0
      %1173 = vmatprep.subr.bf16.mxu0 0
      %1174 = vmatpush1.bf16.xpose.msra.mxu0 0
      %1175 = vmatprep.subr.bf16.mxu0 0
      %1176 = vmatpush1.bf16.xpose.msra.mxu0 0
      %1177 = vmatprep.subr.bf16.mxu0 0
      %1178 = vmatpush1.bf16.xpose.msra.mxu0 0
      %1179 = vmatprep.mubr.bf16.mxu0 0
      %1180 = vmatmul.mubr.bf16.gmra.mrb[0].mxu0 %v1136
      %v1181 = vpop.f32.mrb[0].mxu0
      %v1182 = vadd.f32 0.0, %v1181
      %v1183 = vpop.f32.mrb[0].mxu0
      %v1184 = vpop.f32.mrb[0].mxu0
      %v1185 = vadd.f32 0.0, %v1184
      %v1186 = vpop.f32.mrb[0].mxu0
      %1187 = vmatprep.mubr.bf16.mxu0 0
      %1188 = vmatmul.mubr.bf16.gmra.mrb[0].mxu0 %v1139
      %v1189 = vpop.f32.mrb[0].mxu0
      %v1190 = vadd.f32 0.0, %v1189
      %v1191 = vpop.f32.mrb[0].mxu0
      %v1192 = vpop.f32.mrb[0].mxu0
      %v1193 = vadd.f32 0.0, %v1192
      %v1194 = vpop.f32.mrb[0].mxu0
      %1195 = vdwg.mxu0
      %v1197 = vsel %vm1012, %v919, 0
      %v1200 = vsel %vm1012, %v921, 0
      %v1203 = vsel %vm1012, %v949, 0
      %v1206 = vsel %vm1012, %v951, 0
      %1208 = vmatprep.subr.bf16.mxu0 0
      %1209 = vmatpush1.bf16.xpose.msra.mxu0 %v1203
      %1210 = vmatprep.subr.bf16.mxu0 0
      %1211 = vmatpush1.bf16.xpose.msra.mxu0 %v1206
      %1212 = vmatprep.subr.bf16.mxu0 0
      %1213 = vmatpush1.bf16.xpose.msra.mxu0 0
      %1214 = vmatprep.subr.bf16.mxu0 0
      %1215 = vmatpush1.bf16.xpose.msra.mxu0 0
      %1216 = vmatprep.subr.bf16.mxu0 0
      %1217 = vmatpush1.bf16.xpose.msra.mxu0 0
      %1218 = vmatprep.subr.bf16.mxu0 0
      %1219 = vmatpush1.bf16.xpose.msra.mxu0 0
      %1220 = vmatprep.subr.bf16.mxu0 0
      %1221 = vmatpush1.bf16.xpose.msra.mxu0 0
      %1222 = vmatprep.subr.bf16.mxu0 0
      %1223 = vmatpush1.bf16.xpose.msra.mxu0 0
      %1224 = vmatprep.subr.bf16.mxu0 0
      %1225 = vmatpush1.bf16.xpose.msra.mxu0 0
      %1226 = vmatprep.subr.bf16.mxu0 0
      %1227 = vmatpush1.bf16.xpose.msra.mxu0 0
      %1228 = vmatprep.subr.bf16.mxu0 0
      %1229 = vmatpush1.bf16.xpose.msra.mxu0 0
      %1230 = vmatprep.subr.bf16.mxu0 0
      %1231 = vmatpush1.bf16.xpose.msra.mxu0 0
      %1232 = vmatprep.subr.bf16.mxu0 0
      %1233 = vmatpush1.bf16.xpose.msra.mxu0 0
      %1234 = vmatprep.subr.bf16.mxu0 0
      %1235 = vmatpush1.bf16.xpose.msra.mxu0 0
      %1236 = vmatprep.subr.bf16.mxu0 0
      %1237 = vmatpush1.bf16.xpose.msra.mxu0 0
      %1238 = vmatprep.subr.bf16.mxu0 0
      %1239 = vmatpush1.bf16.xpose.msra.mxu0 0
      %1240 = vmatprep.mubr.bf16.mxu0 0
      %1241 = vmatmul.mubr.bf16.gmra.mrb[0].mxu0 %v1197
      %v1242 = vpop.f32.mrb[0].mxu0
      %v1243 = vadd.f32 0.0, %v1242
      %v1244 = vpop.f32.mrb[0].mxu0
      %v1245 = vpop.f32.mrb[0].mxu0
      %v1246 = vadd.f32 0.0, %v1245
      %v1247 = vpop.f32.mrb[0].mxu0
      %1248 = vmatprep.mubr.bf16.mxu0 0
      %1249 = vmatmul.mubr.bf16.gmra.mrb[0].mxu0 %v1200
      %v1250 = vpop.f32.mrb[0].mxu0
      %v1251 = vadd.f32 0.0, %v1250
      %v1252 = vpop.f32.mrb[0].mxu0
      %v1253 = vpop.f32.mrb[0].mxu0
      %v1254 = vadd.f32 0.0, %v1253
      %v1255 = vpop.f32.mrb[0].mxu0
      %1256 = vdwg.mxu0
      %v1258 = vsel %vm1012, %v923, 0
      %v1261 = vsel %vm1012, %v925, 0
      %v1264 = vsel %vm1012, %v953, 0
      %v1267 = vsel %vm1012, %v955, 0
      %1269 = vmatprep.subr.bf16.mxu0 0
      %1270 = vmatpush1.bf16.xpose.msra.mxu0 %v1264
      %1271 = vmatprep.subr.bf16.mxu0 0
      %1272 = vmatpush1.bf16.xpose.msra.mxu0 %v1267
      %1273 = vmatprep.subr.bf16.mxu0 0
      %1274 = vmatpush1.bf16.xpose.msra.mxu0 0
      %1275 = vmatprep.subr.bf16.mxu0 0
      %1276 = vmatpush1.bf16.xpose.msra.mxu0 0
      %1277 = vmatprep.subr.bf16.mxu0 0
      %1278 = vmatpush1.bf16.xpose.msra.mxu0 0
      %1279 = vmatprep.subr.bf16.mxu0 0
      %1280 = vmatpush1.bf16.xpose.msra.mxu0 0
      %1281 = vmatprep.subr.bf16.mxu0 0
      %1282 = vmatpush1.bf16.xpose.msra.mxu0 0
      %1283 = vmatprep.subr.bf16.mxu0 0
      %1284 = vmatpush1.bf16.xpose.msra.mxu0 0
      %1285 = vmatprep.subr.bf16.mxu0 0
      %1286 = vmatpush1.bf16.xpose.msra.mxu0 0
      %1287 = vmatprep.subr.bf16.mxu0 0
      %1288 = vmatpush1.bf16.xpose.msra.mxu0 0
      %1289 = vmatprep.subr.bf16.mxu0 0
      %1290 = vmatpush1.bf16.xpose.msra.mxu0 0
      %1291 = vmatprep.subr.bf16.mxu0 0
      %1292 = vmatpush1.bf16.xpose.msra.mxu0 0
      %1293 = vmatprep.subr.bf16.mxu0 0
      %1294 = vmatpush1.bf16.xpose.msra.mxu0 0
      %1295 = vmatprep.subr.bf16.mxu0 0
      %1296 = vmatpush1.bf16.xpose.msra.mxu0 0
      %1297 = vmatprep.subr.bf16.mxu0 0
      %1298 = vmatpush1.bf16.xpose.msra.mxu0 0
      %1299 = vmatprep.subr.bf16.mxu0 0
      %1300 = vmatpush1.bf16.xpose.msra.mxu0 0
      %1301 = vmatprep.mubr.bf16.mxu0 0
      %1302 = vmatmul.mubr.bf16.gmra.mrb[0].mxu0 %v1258
      %v1303 = vpop.f32.mrb[0].mxu0
      %v1304 = vadd.f32 0.0, %v1303
      %v1305 = vpop.f32.mrb[0].mxu0
      %v1306 = vpop.f32.mrb[0].mxu0
      %v1307 = vadd.f32 0.0, %v1306
      %v1308 = vpop.f32.mrb[0].mxu0
      %1309 = vmatprep.mubr.bf16.mxu0 0
      %1310 = vmatmul.mubr.bf16.gmra.mrb[0].mxu0 %v1261
      %v1311 = vpop.f32.mrb[0].mxu0
      %v1312 = vadd.f32 0.0, %v1311
      %v1313 = vpop.f32.mrb[0].mxu0
      %v1314 = vpop.f32.mrb[0].mxu0
      %v1315 = vadd.f32 0.0, %v1314
      %v1316 = vpop.f32.mrb[0].mxu0
      %1317 = vdwg.mxu0
      %v1319 = vsel %vm1012, %v927, 0
      %v1322 = vsel %vm1012, %v929, 0
      %v1325 = vsel %vm1012, %v957, 0
      %v1328 = vsel %vm1012, %v959, 0
      %1330 = vmatprep.subr.bf16.mxu0 0
      %1331 = vmatpush1.bf16.xpose.msra.mxu0 %v1325
      %1332 = vmatprep.subr.bf16.mxu0 0
      %1333 = vmatpush1.bf16.xpose.msra.mxu0 %v1328
      %1334 = vmatprep.subr.bf16.mxu0 0
      %1335 = vmatpush1.bf16.xpose.msra.mxu0 0
      %1336 = vmatprep.subr.bf16.mxu0 0
      %1337 = vmatpush1.bf16.xpose.msra.mxu0 0
      %1338 = vmatprep.subr.bf16.mxu0 0
      %1339 = vmatpush1.bf16.xpose.msra.mxu0 0
      %1340 = vmatprep.subr.bf16.mxu0 0
      %1341 = vmatpush1.bf16.xpose.msra.mxu0 0
      %1342 = vmatprep.subr.bf16.mxu0 0
      %1343 = vmatpush1.bf16.xpose.msra.mxu0 0
      %1344 = vmatprep.subr.bf16.mxu0 0
      %1345 = vmatpush1.bf16.xpose.msra.mxu0 0
      %1346 = vmatprep.subr.bf16.mxu0 0
      %1347 = vmatpush1.bf16.xpose.msra.mxu0 0
      %1348 = vmatprep.subr.bf16.mxu0 0
      %1349 = vmatpush1.bf16.xpose.msra.mxu0 0
      %1350 = vmatprep.subr.bf16.mxu0 0
      %1351 = vmatpush1.bf16.xpose.msra.mxu0 0
      %1352 = vmatprep.subr.bf16.mxu0 0
      %1353 = vmatpush1.bf16.xpose.msra.mxu0 0
      %1354 = vmatprep.subr.bf16.mxu0 0
      %1355 = vmatpush1.bf16.xpose.msra.mxu0 0
      %1356 = vmatprep.subr.bf16.mxu0 0
      %1357 = vmatpush1.bf16.xpose.msra.mxu0 0
      %1358 = vmatprep.subr.bf16.mxu0 0
      %1359 = vmatpush1.bf16.xpose.msra.mxu0 0
      %1360 = vmatprep.subr.bf16.mxu0 0
      %1361 = vmatpush1.bf16.xpose.msra.mxu0 0
      %1362 = vmatprep.mubr.bf16.mxu0 0
      %1363 = vmatmul.mubr.bf16.gmra.mrb[0].mxu0 %v1319
      %v1364 = vpop.f32.mrb[0].mxu0
      %v1365 = vadd.f32 0.0, %v1364
      %v1366 = vpop.f32.mrb[0].mxu0
      %v1367 = vpop.f32.mrb[0].mxu0
      %v1368 = vadd.f32 0.0, %v1367
      %v1369 = vpop.f32.mrb[0].mxu0
      %1370 = vmatprep.mubr.bf16.mxu0 0
      %1371 = vmatmul.mubr.bf16.gmra.mrb[0].mxu0 %v1322
      %v1372 = vpop.f32.mrb[0].mxu0
      %v1373 = vadd.f32 0.0, %v1372
      %v1374 = vpop.f32.mrb[0].mxu0
      %v1375 = vpop.f32.mrb[0].mxu0
      %v1376 = vadd.f32 0.0, %v1375
      %v1377 = vpop.f32.mrb[0].mxu0
      %1378 = vdwg.mxu0
      %v1380 = vsel %vm1012, %v931, 0
      %v1383 = vsel %vm1012, %v933, 0
      %v1386 = vsel %vm1012, %v961, 0
      %v1389 = vsel %vm1012, %v963, 0
      %1391 = vmatprep.subr.bf16.mxu0 0
      %1392 = vmatpush1.bf16.xpose.msra.mxu0 %v1386
      %1393 = vmatprep.subr.bf16.mxu0 0
      %1394 = vmatpush1.bf16.xpose.msra.mxu0 %v1389
      %1395 = vmatprep.subr.bf16.mxu0 0
      %1396 = vmatpush1.bf16.xpose.msra.mxu0 0
      %1397 = vmatprep.subr.bf16.mxu0 0
      %1398 = vmatpush1.bf16.xpose.msra.mxu0 0
      %1399 = vmatprep.subr.bf16.mxu0 0
      %1400 = vmatpush1.bf16.xpose.msra.mxu0 0
      %1401 = vmatprep.subr.bf16.mxu0 0
      %1402 = vmatpush1.bf16.xpose.msra.mxu0 0
      %1403 = vmatprep.subr.bf16.mxu0 0
      %1404 = vmatpush1.bf16.xpose.msra.mxu0 0
      %1405 = vmatprep.subr.bf16.mxu0 0
      %1406 = vmatpush1.bf16.xpose.msra.mxu0 0
      %1407 = vmatprep.subr.bf16.mxu0 0
      %1408 = vmatpush1.bf16.xpose.msra.mxu0 0
      %1409 = vmatprep.subr.bf16.mxu0 0
      %1410 = vmatpush1.bf16.xpose.msra.mxu0 0
      %1411 = vmatprep.subr.bf16.mxu0 0
      %1412 = vmatpush1.bf16.xpose.msra.mxu0 0
      %1413 = vmatprep.subr.bf16.mxu0 0
      %1414 = vmatpush1.bf16.xpose.msra.mxu0 0
      %1415 = vmatprep.subr.bf16.mxu0 0
      %1416 = vmatpush1.bf16.xpose.msra.mxu0 0
      %1417 = vmatprep.subr.bf16.mxu0 0
      %1418 = vmatpush1.bf16.xpose.msra.mxu0 0
      %1419 = vmatprep.subr.bf16.mxu0 0
      %1420 = vmatpush1.bf16.xpose.msra.mxu0 0
      %1421 = vmatprep.subr.bf16.mxu0 0
      %1422 = vmatpush1.bf16.xpose.msra.mxu0 0
      %1423 = vmatprep.mubr.bf16.mxu0 0
      %1424 = vmatmul.mubr.bf16.gmra.mrb[0].mxu0 %v1380
      %v1425 = vpop.f32.mrb[0].mxu0
      %v1426 = vadd.f32 0.0, %v1425
      %v1427 = vpop.f32.mrb[0].mxu0
      %v1428 = vpop.f32.mrb[0].mxu0
      %v1429 = vadd.f32 0.0, %v1428
      %v1430 = vpop.f32.mrb[0].mxu0
      %1431 = vmatprep.mubr.bf16.mxu0 0
      %1432 = vmatmul.mubr.bf16.gmra.mrb[0].mxu0 %v1383
      %v1433 = vpop.f32.mrb[0].mxu0
      %v1434 = vadd.f32 0.0, %v1433
      %v1435 = vpop.f32.mrb[0].mxu0
      %v1436 = vpop.f32.mrb[0].mxu0
      %v1437 = vadd.f32 0.0, %v1436
      %v1438 = vpop.f32.mrb[0].mxu0
      %1439 = vdwg.mxu0
      %v1441 = vsel %vm1012, %v935, 0
      %v1444 = vsel %vm1012, %v937, 0
      %v1447 = vsel %vm1012, %v965, 0
      %v1450 = vsel %vm1012, %v967, 0
      %1452 = vmatprep.subr.bf16.mxu0 0
      %1453 = vmatpush1.bf16.xpose.msra.mxu0 %v1447
      %1454 = vmatprep.subr.bf16.mxu0 0
      %1455 = vmatpush1.bf16.xpose.msra.mxu0 %v1450
      %1456 = vmatprep.subr.bf16.mxu0 0
      %1457 = vmatpush1.bf16.xpose.msra.mxu0 0
      %1458 = vmatprep.subr.bf16.mxu0 0
      %1459 = vmatpush1.bf16.xpose.msra.mxu0 0
      %1460 = vmatprep.subr.bf16.mxu0 0
      %1461 = vmatpush1.bf16.xpose.msra.mxu0 0
      %1462 = vmatprep.subr.bf16.mxu0 0
      %1463 = vmatpush1.bf16.xpose.msra.mxu0 0
      %1464 = vmatprep.subr.bf16.mxu0 0
      %1465 = vmatpush1.bf16.xpose.msra.mxu0 0
      %1466 = vmatprep.subr.bf16.mxu0 0
      %1467 = vmatpush1.bf16.xpose.msra.mxu0 0
      %1468 = vmatprep.subr.bf16.mxu0 0
      %1469 = vmatpush1.bf16.xpose.msra.mxu0 0
      %1470 = vmatprep.subr.bf16.mxu0 0
      %1471 = vmatpush1.bf16.xpose.msra.mxu0 0
      %1472 = vmatprep.subr.bf16.mxu0 0
      %1473 = vmatpush1.bf16.xpose.msra.mxu0 0
      %1474 = vmatprep.subr.bf16.mxu0 0
      %1475 = vmatpush1.bf16.xpose.msra.mxu0 0
      %1476 = vmatprep.subr.bf16.mxu0 0
      %1477 = vmatpush1.bf16.xpose.msra.mxu0 0
      %1478 = vmatprep.subr.bf16.mxu0 0
      %1479 = vmatpush1.bf16.xpose.msra.mxu0 0
      %1480 = vmatprep.subr.bf16.mxu0 0
      %1481 = vmatpush1.bf16.xpose.msra.mxu0 0
      %1482 = vmatprep.subr.bf16.mxu0 0
      %1483 = vmatpush1.bf16.xpose.msra.mxu0 0
      %1484 = vmatprep.mubr.bf16.mxu0 0
      %1485 = vmatmul.mubr.bf16.gmra.mrb[0].mxu0 %v1441
      %v1486 = vpop.f32.mrb[0].mxu0
      %v1487 = vadd.f32 0.0, %v1486
      %v1488 = vpop.f32.mrb[0].mxu0
      %v1489 = vpop.f32.mrb[0].mxu0
      %v1490 = vadd.f32 0.0, %v1489
      %v1491 = vpop.f32.mrb[0].mxu0
      %1492 = vmatprep.mubr.bf16.mxu0 0
      %1493 = vmatmul.mubr.bf16.gmra.mrb[0].mxu0 %v1444
      %v1494 = vpop.f32.mrb[0].mxu0
      %v1495 = vadd.f32 0.0, %v1494
      %v1496 = vpop.f32.mrb[0].mxu0
      %v1497 = vpop.f32.mrb[0].mxu0
      %v1498 = vadd.f32 0.0, %v1497
      %v1499 = vpop.f32.mrb[0].mxu0
      %1500 = vdwg.mxu0
      %v1501 = vmul.f32 %v1060, 0.25
      %v1502 = vmul.f32 %v1063, 0.25
      %v1503 = vmul.f32 %v1068, 0.25
      %v1504 = vmul.f32 %v1071, 0.25
      %v1505 = vmul.f32 %v1121, 0.25
      %v1506 = vmul.f32 %v1124, 0.25
      %v1507 = vmul.f32 %v1129, 0.25
      %v1508 = vmul.f32 %v1132, 0.25
      %v1509 = vmul.f32 %v1182, 0.25
      %v1510 = vmul.f32 %v1185, 0.25
      %v1511 = vmul.f32 %v1190, 0.25
      %v1512 = vmul.f32 %v1193, 0.25
      %v1513 = vmul.f32 %v1243, 0.25
      %v1514 = vmul.f32 %v1246, 0.25
      %v1515 = vmul.f32 %v1251, 0.25
      %v1516 = vmul.f32 %v1254, 0.25
      %v1517 = vmul.f32 %v1304, 0.25
      %v1518 = vmul.f32 %v1307, 0.25
      %v1519 = vmul.f32 %v1312, 0.25
      %v1520 = vmul.f32 %v1315, 0.25
      %v1521 = vmul.f32 %v1365, 0.25
      %v1522 = vmul.f32 %v1368, 0.25
      %v1523 = vmul.f32 %v1373, 0.25
      %v1524 = vmul.f32 %v1376, 0.25
      %v1525 = vmul.f32 %v1426, 0.25
      %v1526 = vmul.f32 %v1429, 0.25
      %v1527 = vmul.f32 %v1434, 0.25
      %v1528 = vmul.f32 %v1437, 0.25
      %v1529 = vmul.f32 %v1487, 0.25
      %v1530 = vmul.f32 %v1490, 0.25
      %v1531 = vmul.f32 %v1495, 0.25
      %v1532 = vmul.f32 %v1498, 0.25
      %v1533 = vadd.f32 %v1501, %v570
      %v1534 = vadd.f32 %v1502, %v570
      %v1535 = vadd.f32 %v1503, %v570
      %v1536 = vadd.f32 %v1504, %v570
      %v1537 = vadd.f32 %v1505, %v570
      %v1538 = vadd.f32 %v1506, %v570
      %v1539 = vadd.f32 %v1507, %v570
      %v1540 = vadd.f32 %v1508, %v570
      %v1541 = vadd.f32 %v1509, %v570
      %v1542 = vadd.f32 %v1510, %v570
      %v1543 = vadd.f32 %v1511, %v570
      %v1544 = vadd.f32 %v1512, %v570
      %v1545 = vadd.f32 %v1513, %v570
      %v1546 = vadd.f32 %v1514, %v570
      %v1547 = vadd.f32 %v1515, %v570
      %v1548 = vadd.f32 %v1516, %v570
      %v1549 = vadd.f32 %v1517, %v570
      %v1550 = vadd.f32 %v1518, %v570
      %v1551 = vadd.f32 %v1519, %v570
      %v1552 = vadd.f32 %v1520, %v570
      %v1553 = vadd.f32 %v1521, %v570
      %v1554 = vadd.f32 %v1522, %v570
      %v1555 = vadd.f32 %v1523, %v570
      %v1556 = vadd.f32 %v1524, %v570
      %v1557 = vadd.f32 %v1525, %v570
      %v1558 = vadd.f32 %v1526, %v570
      %v1559 = vadd.f32 %v1527, %v570
      %v1560 = vadd.f32 %v1528, %v570
      %v1561 = vadd.f32 %v1529, %v570
      %v1562 = vadd.f32 %v1530, %v570
      %v1563 = vadd.f32 %v1531, %v570
      %v1564 = vadd.f32 %v1532, %v570
      %vm1565 = vcmask 261120
      %v1566 = vsel %vm1565, %v1533, -inf
      %1567 = vmax.xlane.f32.xlu0 %v1566
      %v1568 = vpop.xlane.xlu0 %1567
      %v1569 = vsel %vm1565, %v1534, -inf
      %1570 = vmax.xlane.f32.xlu0 %v1569
      %v1571 = vpop.xlane.xlu0 %1570
      %v1572 = vsel %vm1565, %v1535, -inf
      %1573 = vmax.xlane.f32.xlu0 %v1572
      %v1574 = vpop.xlane.xlu0 %1573
      %v1575 = vsel %vm1565, %v1536, -inf
      %1576 = vmax.xlane.f32.xlu0 %v1575
      %v1577 = vpop.xlane.xlu0 %1576
      %v1578 = vsel %vm1565, %v1537, -inf
      %1579 = vmax.xlane.f32.xlu0 %v1578
      %v1580 = vpop.xlane.xlu0 %1579
      %v1581 = vsel %vm1565, %v1538, -inf
      %1582 = vmax.xlane.f32.xlu0 %v1581
      %v1583 = vpop.xlane.xlu0 %1582
      %v1584 = vsel %vm1565, %v1539, -inf
      %1585 = vmax.xlane.f32.xlu0 %v1584
      %v1586 = vpop.xlane.xlu0 %1585
      %v1587 = vsel %vm1565, %v1540, -inf
      %1588 = vmax.xlane.f32.xlu0 %v1587
      %v1589 = vpop.xlane.xlu0 %1588
      %v1590 = vsel %vm1565, %v1541, -inf
      %1591 = vmax.xlane.f32.xlu0 %v1590
      %v1592 = vpop.xlane.xlu0 %1591
      %v1593 = vsel %vm1565, %v1542, -inf
      %1594 = vmax.xlane.f32.xlu0 %v1593
      %v1595 = vpop.xlane.xlu0 %1594
      %v1596 = vsel %vm1565, %v1543, -inf
      %1597 = vmax.xlane.f32.xlu0 %v1596
      %v1598 = vpop.xlane.xlu0 %1597
      %v1599 = vsel %vm1565, %v1544, -inf
      %1600 = vmax.xlane.f32.xlu0 %v1599
      %v1601 = vpop.xlane.xlu0 %1600
      %v1602 = vsel %vm1565, %v1545, -inf
      %1603 = vmax.xlane.f32.xlu0 %v1602
      %v1604 = vpop.xlane.xlu0 %1603
      %v1605 = vsel %vm1565, %v1546, -inf
      %1606 = vmax.xlane.f32.xlu0 %v1605
      %v1607 = vpop.xlane.xlu0 %1606
      %v1608 = vsel %vm1565, %v1547, -inf
      %1609 = vmax.xlane.f32.xlu0 %v1608
      %v1610 = vpop.xlane.xlu0 %1609
      %v1611 = vsel %vm1565, %v1548, -inf
      %1612 = vmax.xlane.f32.xlu0 %v1611
      %v1613 = vpop.xlane.xlu0 %1612
      %v1614 = vsel %vm1565, %v1549, -inf
      %1615 = vmax.xlane.f32.xlu0 %v1614
      %v1616 = vpop.xlane.xlu0 %1615
      %v1617 = vsel %vm1565, %v1550, -inf
      %1618 = vmax.xlane.f32.xlu0 %v1617
      %v1619 = vpop.xlane.xlu0 %1618
      %v1620 = vsel %vm1565, %v1551, -inf
      %1621 = vmax.xlane.f32.xlu0 %v1620
      %v1622 = vpop.xlane.xlu0 %1621
      %v1623 = vsel %vm1565, %v1552, -inf
      %1624 = vmax.xlane.f32.xlu0 %v1623
      %v1625 = vpop.xlane.xlu0 %1624
      %v1626 = vsel %vm1565, %v1553, -inf
      %1627 = vmax.xlane.f32.xlu0 %v1626
      %v1628 = vpop.xlane.xlu0 %1627
      %v1629 = vsel %vm1565, %v1554, -inf
      %1630 = vmax.xlane.f32.xlu0 %v1629
      %v1631 = vpop.xlane.xlu0 %1630
      %v1632 = vsel %vm1565, %v1555, -inf
      %1633 = vmax.xlane.f32.xlu0 %v1632
      %v1634 = vpop.xlane.xlu0 %1633
      %v1635 = vsel %vm1565, %v1556, -inf
      %1636 = vmax.xlane.f32.xlu0 %v1635
      %v1637 = vpop.xlane.xlu0 %1636
      %v1638 = vsel %vm1565, %v1557, -inf
      %1639 = vmax.xlane.f32.xlu0 %v1638
      %v1640 = vpop.xlane.xlu0 %1639
      %v1641 = vsel %vm1565, %v1558, -inf
      %1642 = vmax.xlane.f32.xlu0 %v1641
      %v1643 = vpop.xlane.xlu0 %1642
      %v1644 = vsel %vm1565, %v1559, -inf
      %1645 = vmax.xlane.f32.xlu0 %v1644
      %v1646 = vpop.xlane.xlu0 %1645
      %v1647 = vsel %vm1565, %v1560, -inf
      %1648 = vmax.xlane.f32.xlu0 %v1647
      %v1649 = vpop.xlane.xlu0 %1648
      %v1650 = vsel %vm1565, %v1561, -inf
      %1651 = vmax.xlane.f32.xlu0 %v1650
      %v1652 = vpop.xlane.xlu0 %1651
      %v1653 = vsel %vm1565, %v1562, -inf
      %1654 = vmax.xlane.f32.xlu0 %v1653
      %v1655 = vpop.xlane.xlu0 %1654
      %v1656 = vsel %vm1565, %v1563, -inf
      %1657 = vmax.xlane.f32.xlu0 %v1656
      %v1658 = vpop.xlane.xlu0 %1657
      %v1659 = vsel %vm1565, %v1564, -inf
      %1660 = vmax.xlane.f32.xlu0 %v1659
      %v1661 = vpop.xlane.xlu0 %1660
      %v1662 = vsub.f32 %v1533, %v1568
      %v1663 = vsub.f32 %v1534, %v1571
      %v1664 = vsub.f32 %v1535, %v1574
      %v1665 = vsub.f32 %v1536, %v1577
      %v1666 = vsub.f32 %v1537, %v1580
      %v1667 = vsub.f32 %v1538, %v1583
      %v1668 = vsub.f32 %v1539, %v1586
      %v1669 = vsub.f32 %v1540, %v1589
      %v1670 = vsub.f32 %v1541, %v1592
      %v1671 = vsub.f32 %v1542, %v1595
      %v1672 = vsub.f32 %v1543, %v1598
      %v1673 = vsub.f32 %v1544, %v1601
      %v1674 = vsub.f32 %v1545, %v1604
      %v1675 = vsub.f32 %v1546, %v1607
      %v1676 = vsub.f32 %v1547, %v1610
      %v1677 = vsub.f32 %v1548, %v1613
      %v1678 = vsub.f32 %v1549, %v1616
      %v1679 = vsub.f32 %v1550, %v1619
      %v1680 = vsub.f32 %v1551, %v1622
      %v1681 = vsub.f32 %v1552, %v1625
      %v1682 = vsub.f32 %v1553, %v1628
      %v1683 = vsub.f32 %v1554, %v1631
      %v1684 = vsub.f32 %v1555, %v1634
      %v1685 = vsub.f32 %v1556, %v1637
      %v1686 = vsub.f32 %v1557, %v1640
      %v1687 = vsub.f32 %v1558, %v1643
      %v1688 = vsub.f32 %v1559, %v1646
      %v1689 = vsub.f32 %v1560, %v1649
      %v1690 = vsub.f32 %v1561, %v1652
      %v1691 = vsub.f32 %v1562, %v1655
      %v1692 = vsub.f32 %v1563, %v1658
      %v1693 = vsub.f32 %v1564, %v1661
      %v1694 = vmul.f32 %v1662, 1.442695
      %v1695 = vpow.pop %v1694
      %v1696 = vmul.f32 %v1663, 1.442695
      %v1697 = vpow.pop %v1696
      %v1698 = vmul.f32 %v1664, 1.442695
      %v1699 = vpow.pop %v1698
      %v1700 = vmul.f32 %v1665, 1.442695
      %v1701 = vpow.pop %v1700
      %v1702 = vmul.f32 %v1666, 1.442695
      %v1703 = vpow.pop %v1702
      %v1704 = vmul.f32 %v1667, 1.442695
      %v1705 = vpow.pop %v1704
      %v1706 = vmul.f32 %v1668, 1.442695
      %v1707 = vpow.pop %v1706
      %v1708 = vmul.f32 %v1669, 1.442695
      %v1709 = vpow.pop %v1708
      %v1710 = vmul.f32 %v1670, 1.442695
      %v1711 = vpow.pop %v1710
      %v1712 = vmul.f32 %v1671, 1.442695
      %v1713 = vpow.pop %v1712
      %v1714 = vmul.f32 %v1672, 1.442695
      %v1715 = vpow.pop %v1714
      %v1716 = vmul.f32 %v1673, 1.442695
      %v1717 = vpow.pop %v1716
      %v1718 = vmul.f32 %v1674, 1.442695
      %v1719 = vpow.pop %v1718
      %v1720 = vmul.f32 %v1675, 1.442695
      %v1721 = vpow.pop %v1720
      %v1722 = vmul.f32 %v1676, 1.442695
      %v1723 = vpow.pop %v1722
      %v1724 = vmul.f32 %v1677, 1.442695
      %v1725 = vpow.pop %v1724
      %v1726 = vmul.f32 %v1678, 1.442695
      %v1727 = vpow.pop %v1726
      %v1728 = vmul.f32 %v1679, 1.442695
      %v1729 = vpow.pop %v1728
      %v1730 = vmul.f32 %v1680, 1.442695
      %v1731 = vpow.pop %v1730
      %v1732 = vmul.f32 %v1681, 1.442695
      %v1733 = vpow.pop %v1732
      %v1734 = vmul.f32 %v1682, 1.442695
      %v1735 = vpow.pop %v1734
      %v1736 = vmul.f32 %v1683, 1.442695
      %v1737 = vpow.pop %v1736
      %v1738 = vmul.f32 %v1684, 1.442695
      %v1739 = vpow.pop %v1738
      %v1740 = vmul.f32 %v1685, 1.442695
      %v1741 = vpow.pop %v1740
      %v1742 = vmul.f32 %v1686, 1.442695
      %v1743 = vpow.pop %v1742
      %v1744 = vmul.f32 %v1687, 1.442695
      %v1745 = vpow.pop %v1744
      %v1746 = vmul.f32 %v1688, 1.442695
      %v1747 = vpow.pop %v1746
      %v1748 = vmul.f32 %v1689, 1.442695
      %v1749 = vpow.pop %v1748
      %v1750 = vmul.f32 %v1690, 1.442695
      %v1751 = vpow.pop %v1750
      %v1752 = vmul.f32 %v1691, 1.442695
      %v1753 = vpow.pop %v1752
      %v1754 = vmul.f32 %v1692, 1.442695
      %v1755 = vpow.pop %v1754
      %v1756 = vmul.f32 %v1693, 1.442695
      %v1757 = vpow.pop %v1756
      %v1758 = vsel %vm1565, %v1695, 0.0
      %1759 = vadd.xlane.f32.xlu0 %v1758
      %v1760 = vpop.xlane.xlu0 %1759
      %v1761 = vsel %vm1565, %v1697, 0.0
      %1762 = vadd.xlane.f32.xlu0 %v1761
      %v1763 = vpop.xlane.xlu0 %1762
      %v1764 = vsel %vm1565, %v1699, 0.0
      %1765 = vadd.xlane.f32.xlu0 %v1764
      %v1766 = vpop.xlane.xlu0 %1765
      %v1767 = vsel %vm1565, %v1701, 0.0
      %1768 = vadd.xlane.f32.xlu0 %v1767
      %v1769 = vpop.xlane.xlu0 %1768
      %v1770 = vsel %vm1565, %v1703, 0.0
      %1771 = vadd.xlane.f32.xlu0 %v1770
      %v1772 = vpop.xlane.xlu0 %1771
      %v1773 = vsel %vm1565, %v1705, 0.0
      %1774 = vadd.xlane.f32.xlu0 %v1773
      %v1775 = vpop.xlane.xlu0 %1774
      %v1776 = vsel %vm1565, %v1707, 0.0
      %1777 = vadd.xlane.f32.xlu0 %v1776
      %v1778 = vpop.xlane.xlu0 %1777
      %v1779 = vsel %vm1565, %v1709, 0.0
      %1780 = vadd.xlane.f32.xlu0 %v1779
      %v1781 = vpop.xlane.xlu0 %1780
      %v1782 = vsel %vm1565, %v1711, 0.0
      %1783 = vadd.xlane.f32.xlu0 %v1782
      %v1784 = vpop.xlane.xlu0 %1783
      %v1785 = vsel %vm1565, %v1713, 0.0
      %1786 = vadd.xlane.f32.xlu0 %v1785
      %v1787 = vpop.xlane.xlu0 %1786
      %v1788 = vsel %vm1565, %v1715, 0.0
      %1789 = vadd.xlane.f32.xlu0 %v1788
      %v1790 = vpop.xlane.xlu0 %1789
      %v1791 = vsel %vm1565, %v1717, 0.0
      %1792 = vadd.xlane.f32.xlu0 %v1791
      %v1793 = vpop.xlane.xlu0 %1792
      %v1794 = vsel %vm1565, %v1719, 0.0
      %1795 = vadd.xlane.f32.xlu0 %v1794
      %v1796 = vpop.xlane.xlu0 %1795
      %v1797 = vsel %vm1565, %v1721, 0.0
      %1798 = vadd.xlane.f32.xlu0 %v1797
      %v1799 = vpop.xlane.xlu0 %1798
      %v1800 = vsel %vm1565, %v1723, 0.0
      %1801 = vadd.xlane.f32.xlu0 %v1800
      %v1802 = vpop.xlane.xlu0 %1801
      %v1803 = vsel %vm1565, %v1725, 0.0
      %1804 = vadd.xlane.f32.xlu0 %v1803
      %v1805 = vpop.xlane.xlu0 %1804
      %v1806 = vsel %vm1565, %v1727, 0.0
      %1807 = vadd.xlane.f32.xlu0 %v1806
      %v1808 = vpop.xlane.xlu0 %1807
      %v1809 = vsel %vm1565, %v1729, 0.0
      %1810 = vadd.xlane.f32.xlu0 %v1809
      %v1811 = vpop.xlane.xlu0 %1810
      %v1812 = vsel %vm1565, %v1731, 0.0
      %1813 = vadd.xlane.f32.xlu0 %v1812
      %v1814 = vpop.xlane.xlu0 %1813
      %v1815 = vsel %vm1565, %v1733, 0.0
      %1816 = vadd.xlane.f32.xlu0 %v1815
      %v1817 = vpop.xlane.xlu0 %1816
      %v1818 = vsel %vm1565, %v1735, 0.0
      %1819 = vadd.xlane.f32.xlu0 %v1818
      %v1820 = vpop.xlane.xlu0 %1819
      %v1821 = vsel %vm1565, %v1737, 0.0
      %1822 = vadd.xlane.f32.xlu0 %v1821
      %v1823 = vpop.xlane.xlu0 %1822
      %v1824 = vsel %vm1565, %v1739, 0.0
      %1825 = vadd.xlane.f32.xlu0 %v1824
      %v1826 = vpop.xlane.xlu0 %1825
      %v1827 = vsel %vm1565, %v1741, 0.0
      %1828 = vadd.xlane.f32.xlu0 %v1827
      %v1829 = vpop.xlane.xlu0 %1828
      %v1830 = vsel %vm1565, %v1743, 0.0
      %1831 = vadd.xlane.f32.xlu0 %v1830
      %v1832 = vpop.xlane.xlu0 %1831
      %v1833 = vsel %vm1565, %v1745, 0.0
      %1834 = vadd.xlane.f32.xlu0 %v1833
      %v1835 = vpop.xlane.xlu0 %1834
      %v1836 = vsel %vm1565, %v1747, 0.0
      %1837 = vadd.xlane.f32.xlu0 %v1836
      %v1838 = vpop.xlane.xlu0 %1837
      %v1839 = vsel %vm1565, %v1749, 0.0
      %1840 = vadd.xlane.f32.xlu0 %v1839
      %v1841 = vpop.xlane.xlu0 %1840
      %v1842 = vsel %vm1565, %v1751, 0.0
      %1843 = vadd.xlane.f32.xlu0 %v1842
      %v1844 = vpop.xlane.xlu0 %1843
      %v1845 = vsel %vm1565, %v1753, 0.0
      %1846 = vadd.xlane.f32.xlu0 %v1845
      %v1847 = vpop.xlane.xlu0 %1846
      %v1848 = vsel %vm1565, %v1755, 0.0
      %1849 = vadd.xlane.f32.xlu0 %v1848
      %v1850 = vpop.xlane.xlu0 %1849
      %v1851 = vsel %vm1565, %v1757, 0.0
      %1852 = vadd.xlane.f32.xlu0 %v1851
      %v1853 = vpop.xlane.xlu0 %1852
      %v1854 = vrcp.pop %v1760
      %v1855 = vrcp.pop %v1763
      %v1856 = vrcp.pop %v1766
      %v1857 = vrcp.pop %v1769
      %v1858 = vrcp.pop %v1772
      %v1859 = vrcp.pop %v1775
      %v1860 = vrcp.pop %v1778
      %v1861 = vrcp.pop %v1781
      %v1862 = vrcp.pop %v1784
      %v1863 = vrcp.pop %v1787
      %v1864 = vrcp.pop %v1790
      %v1865 = vrcp.pop %v1793
      %v1866 = vrcp.pop %v1796
      %v1867 = vrcp.pop %v1799
      %v1868 = vrcp.pop %v1802
      %v1869 = vrcp.pop %v1805
      %v1870 = vrcp.pop %v1808
      %v1871 = vrcp.pop %v1811
      %v1872 = vrcp.pop %v1814
      %v1873 = vrcp.pop %v1817
      %v1874 = vrcp.pop %v1820
      %v1875 = vrcp.pop %v1823
      %v1876 = vrcp.pop %v1826
      %v1877 = vrcp.pop %v1829
      %v1878 = vrcp.pop %v1832
      %v1879 = vrcp.pop %v1835
      %v1880 = vrcp.pop %v1838
      %v1881 = vrcp.pop %v1841
      %v1882 = vrcp.pop %v1844
      %v1883 = vrcp.pop %v1847
      %v1884 = vrcp.pop %v1850
      %v1885 = vrcp.pop %v1853
      %v1886 = vmul.f32 %v1695, %v1854
      %v1887 = vmul.f32 %v1697, %v1855
      %v1888 = vmul.f32 %v1699, %v1856
      %v1889 = vmul.f32 %v1701, %v1857
      %v1890 = vmul.f32 %v1703, %v1858
      %v1891 = vmul.f32 %v1705, %v1859
      %v1892 = vmul.f32 %v1707, %v1860
      %v1893 = vmul.f32 %v1709, %v1861
      %v1894 = vmul.f32 %v1711, %v1862
      %v1895 = vmul.f32 %v1713, %v1863
      %v1896 = vmul.f32 %v1715, %v1864
      %v1897 = vmul.f32 %v1717, %v1865
      %v1898 = vmul.f32 %v1719, %v1866
      %v1899 = vmul.f32 %v1721, %v1867
      %v1900 = vmul.f32 %v1723, %v1868
      %v1901 = vmul.f32 %v1725, %v1869
      %v1902 = vmul.f32 %v1727, %v1870
      %v1903 = vmul.f32 %v1729, %v1871
      %v1904 = vmul.f32 %v1731, %v1872
      %v1905 = vmul.f32 %v1733, %v1873
      %v1906 = vmul.f32 %v1735, %v1874
      %v1907 = vmul.f32 %v1737, %v1875
      %v1908 = vmul.f32 %v1739, %v1876
      %v1909 = vmul.f32 %v1741, %v1877
      %v1910 = vmul.f32 %v1743, %v1878
      %v1911 = vmul.f32 %v1745, %v1879
      %v1912 = vmul.f32 %v1747, %v1880
      %v1913 = vmul.f32 %v1749, %v1881
      %v1914 = vmul.f32 %v1751, %v1882
      %v1915 = vmul.f32 %v1753, %v1883
      %v1916 = vmul.f32 %v1755, %v1884
      %v1917 = vmul.f32 %v1757, %v1885
      %v1918 = vpack.c.bf16 %v1887, %v1886
      %v1919 = vpack.c.bf16 %v1889, %v1888
      %v1920 = vpack.c.bf16 %v1891, %v1890
      %v1921 = vpack.c.bf16 %v1893, %v1892
      %v1922 = vpack.c.bf16 %v1895, %v1894
      %v1923 = vpack.c.bf16 %v1897, %v1896
      %v1924 = vpack.c.bf16 %v1899, %v1898
      %v1925 = vpack.c.bf16 %v1901, %v1900
      %v1926 = vpack.c.bf16 %v1903, %v1902
      %v1927 = vpack.c.bf16 %v1905, %v1904
      %v1928 = vpack.c.bf16 %v1907, %v1906
      %v1929 = vpack.c.bf16 %v1909, %v1908
      %v1930 = vpack.c.bf16 %v1911, %v1910
      %v1931 = vpack.c.bf16 %v1913, %v1912
      %v1932 = vpack.c.bf16 %v1915, %v1914
      %v1933 = vpack.c.bf16 %v1917, %v1916
      %v1935 = vsel %vm1565, %v1918, 0
      %v1938 = vsel %vm1565, %v1919, 0
      %1940 = vmatprep.subr.bf16.mxu0 0
      %1941 = vmatpush1.bf16.msra.mxu0 %v904
      %1942 = vmatprep.subr.bf16.mxu0 0
      %1943 = vmatpush1.bf16.msra.mxu0 %v907
      %1944 = vmatprep.subr.bf16.mxu0 0
      %1945 = vmatpush1.bf16.msra.mxu0 0
      %1946 = vmatprep.subr.bf16.mxu0 0
      %1947 = vmatpush1.bf16.msra.mxu0 0
      %1948 = vmatprep.subr.bf16.mxu0 0
      %1949 = vmatpush1.bf16.msra.mxu0 0
      %1950 = vmatprep.subr.bf16.mxu0 0
      %1951 = vmatpush1.bf16.msra.mxu0 0
      %1952 = vmatprep.subr.bf16.mxu0 0
      %1953 = vmatpush1.bf16.msra.mxu0 0
      %1954 = vmatprep.subr.bf16.mxu0 0
      %1955 = vmatpush1.bf16.msra.mxu0 0
      %1956 = vmatprep.subr.bf16.mxu0 0
      %1957 = vmatpush1.bf16.msra.mxu0 0
      %1958 = vmatprep.subr.bf16.mxu0 0
      %1959 = vmatpush1.bf16.msra.mxu0 0
      %1960 = vmatprep.subr.bf16.mxu0 0
      %1961 = vmatpush1.bf16.msra.mxu0 0
      %1962 = vmatprep.subr.bf16.mxu0 0
      %1963 = vmatpush1.bf16.msra.mxu0 0
      %1964 = vmatprep.subr.bf16.mxu0 0
      %1965 = vmatpush1.bf16.msra.mxu0 0
      %1966 = vmatprep.subr.bf16.mxu0 0
      %1967 = vmatpush1.bf16.msra.mxu0 0
      %1968 = vmatprep.subr.bf16.mxu0 0
      %1969 = vmatpush1.bf16.msra.mxu0 0
      %1970 = vmatprep.subr.bf16.mxu0 0
      %1971 = vmatpush1.bf16.msra.mxu0 0
      %1972 = vmatprep.mubr.bf16.mxu0 0
      %1973 = vmatmul.mubr.bf16.gmra.mrb[0].mxu0 %v1935
      %v1974 = vpop.f32.mrb[0].mxu0
      %v1975 = vadd.f32 0.0, %v1974
      %v1976 = vpop.f32.mrb[0].mxu0
      %v1977 = vpop.f32.mrb[0].mxu0
      %v1978 = vadd.f32 0.0, %v1977
      %v1979 = vpop.f32.mrb[0].mxu0
      %1980 = vmatprep.mubr.bf16.mxu0 0
      %1981 = vmatmul.mubr.bf16.gmra.mrb[0].mxu0 %v1938
      %v1982 = vpop.f32.mrb[0].mxu0
      %v1983 = vadd.f32 0.0, %v1982
      %v1984 = vpop.f32.mrb[0].mxu0
      %v1985 = vpop.f32.mrb[0].mxu0
      %v1986 = vadd.f32 0.0, %v1985
      %v1987 = vpop.f32.mrb[0].mxu0
      %1988 = vdwg.mxu0
      %v1990 = vsel %vm1565, %v1920, 0
      %v1993 = vsel %vm1565, %v1921, 0
      %1995 = vmatprep.subr.bf16.mxu0 0
      %1996 = vmatpush1.bf16.msra.mxu0 %v971
      %1997 = vmatprep.subr.bf16.mxu0 0
      %1998 = vmatpush1.bf16.msra.mxu0 %v973
      %1999 = vmatprep.subr.bf16.mxu0 0
      %2000 = vmatpush1.bf16.msra.mxu0 0
      %2001 = vmatprep.subr.bf16.mxu0 0
      %2002 = vmatpush1.bf16.msra.mxu0 0
      %2003 = vmatprep.subr.bf16.mxu0 0
      %2004 = vmatpush1.bf16.msra.mxu0 0
      %2005 = vmatprep.subr.bf16.mxu0 0
      %2006 = vmatpush1.bf16.msra.mxu0 0
      %2007 = vmatprep.subr.bf16.mxu0 0
      %2008 = vmatpush1.bf16.msra.mxu0 0
      %2009 = vmatprep.subr.bf16.mxu0 0
      %2010 = vmatpush1.bf16.msra.mxu0 0
      %2011 = vmatprep.subr.bf16.mxu0 0
      %2012 = vmatpush1.bf16.msra.mxu0 0
      %2013 = vmatprep.subr.bf16.mxu0 0
      %2014 = vmatpush1.bf16.msra.mxu0 0
      %2015 = vmatprep.subr.bf16.mxu0 0
      %2016 = vmatpush1.bf16.msra.mxu0 0
      %2017 = vmatprep.subr.bf16.mxu0 0
      %2018 = vmatpush1.bf16.msra.mxu0 0
      %2019 = vmatprep.subr.bf16.mxu0 0
      %2020 = vmatpush1.bf16.msra.mxu0 0
      %2021 = vmatprep.subr.bf16.mxu0 0
      %2022 = vmatpush1.bf16.msra.mxu0 0
      %2023 = vmatprep.subr.bf16.mxu0 0
      %2024 = vmatpush1.bf16.msra.mxu0 0
      %2025 = vmatprep.subr.bf16.mxu0 0
      %2026 = vmatpush1.bf16.msra.mxu0 0
      %2027 = vmatprep.mubr.bf16.mxu0 0
      %2028 = vmatmul.mubr.bf16.gmra.mrb[0].mxu0 %v1990
      %v2029 = vpop.f32.mrb[0].mxu0
      %v2030 = vadd.f32 0.0, %v2029
      %v2031 = vpop.f32.mrb[0].mxu0
      %v2032 = vpop.f32.mrb[0].mxu0
      %v2033 = vadd.f32 0.0, %v2032
      %v2034 = vpop.f32.mrb[0].mxu0
      %2035 = vmatprep.mubr.bf16.mxu0 0
      %2036 = vmatmul.mubr.bf16.gmra.mrb[0].mxu0 %v1993
      %v2037 = vpop.f32.mrb[0].mxu0
      %v2038 = vadd.f32 0.0, %v2037
      %v2039 = vpop.f32.mrb[0].mxu0
      %v2040 = vpop.f32.mrb[0].mxu0
      %v2041 = vadd.f32 0.0, %v2040
      %v2042 = vpop.f32.mrb[0].mxu0
      %2043 = vdwg.mxu0
      %v2045 = vsel %vm1565, %v1922, 0
      %v2048 = vsel %vm1565, %v1923, 0
      %2050 = vmatprep.subr.bf16.mxu0 0
      %2051 = vmatpush1.bf16.msra.mxu0 %v977
      %2052 = vmatprep.subr.bf16.mxu0 0
      %2053 = vmatpush1.bf16.msra.mxu0 %v979
      %2054 = vmatprep.subr.bf16.mxu0 0
      %2055 = vmatpush1.bf16.msra.mxu0 0
      %2056 = vmatprep.subr.bf16.mxu0 0
      %2057 = vmatpush1.bf16.msra.mxu0 0
      %2058 = vmatprep.subr.bf16.mxu0 0
      %2059 = vmatpush1.bf16.msra.mxu0 0
      %2060 = vmatprep.subr.bf16.mxu0 0
      %2061 = vmatpush1.bf16.msra.mxu0 0
      %2062 = vmatprep.subr.bf16.mxu0 0
      %2063 = vmatpush1.bf16.msra.mxu0 0
      %2064 = vmatprep.subr.bf16.mxu0 0
      %2065 = vmatpush1.bf16.msra.mxu0 0
      %2066 = vmatprep.subr.bf16.mxu0 0
      %2067 = vmatpush1.bf16.msra.mxu0 0
      %2068 = vmatprep.subr.bf16.mxu0 0
      %2069 = vmatpush1.bf16.msra.mxu0 0
      %2070 = vmatprep.subr.bf16.mxu0 0
      %2071 = vmatpush1.bf16.msra.mxu0 0
      %2072 = vmatprep.subr.bf16.mxu0 0
      %2073 = vmatpush1.bf16.msra.mxu0 0
      %2074 = vmatprep.subr.bf16.mxu0 0
      %2075 = vmatpush1.bf16.msra.mxu0 0
      %2076 = vmatprep.subr.bf16.mxu0 0
      %2077 = vmatpush1.bf16.msra.mxu0 0
      %2078 = vmatprep.subr.bf16.mxu0 0
      %2079 = vmatpush1.bf16.msra.mxu0 0
      %2080 = vmatprep.subr.bf16.mxu0 0
      %2081 = vmatpush1.bf16.msra.mxu0 0
      %2082 = vmatprep.mubr.bf16.mxu0 0
      %2083 = vmatmul.mubr.bf16.gmra.mrb[0].mxu0 %v2045
      %v2084 = vpop.f32.mrb[0].mxu0
      %v2085 = vadd.f32 0.0, %v2084
      %v2086 = vpop.f32.mrb[0].mxu0
      %v2087 = vpop.f32.mrb[0].mxu0
      %v2088 = vadd.f32 0.0, %v2087
      %v2089 = vpop.f32.mrb[0].mxu0
      %2090 = vmatprep.mubr.bf16.mxu0 0
      %2091 = vmatmul.mubr.bf16.gmra.mrb[0].mxu0 %v2048
      %v2092 = vpop.f32.mrb[0].mxu0
      %v2093 = vadd.f32 0.0, %v2092
      %v2094 = vpop.f32.mrb[0].mxu0
      %v2095 = vpop.f32.mrb[0].mxu0
      %v2096 = vadd.f32 0.0, %v2095
      %v2097 = vpop.f32.mrb[0].mxu0
      %2098 = vdwg.mxu0
      %v2100 = vsel %vm1565, %v1924, 0
      %v2103 = vsel %vm1565, %v1925, 0
      %2105 = vmatprep.subr.bf16.mxu0 0
      %2106 = vmatpush1.bf16.msra.mxu0 %v983
      %2107 = vmatprep.subr.bf16.mxu0 0
      %2108 = vmatpush1.bf16.msra.mxu0 %v985
      %2109 = vmatprep.subr.bf16.mxu0 0
      %2110 = vmatpush1.bf16.msra.mxu0 0
      %2111 = vmatprep.subr.bf16.mxu0 0
      %2112 = vmatpush1.bf16.msra.mxu0 0
      %2113 = vmatprep.subr.bf16.mxu0 0
      %2114 = vmatpush1.bf16.msra.mxu0 0
      %2115 = vmatprep.subr.bf16.mxu0 0
      %2116 = vmatpush1.bf16.msra.mxu0 0
      %2117 = vmatprep.subr.bf16.mxu0 0
      %2118 = vmatpush1.bf16.msra.mxu0 0
      %2119 = vmatprep.subr.bf16.mxu0 0
      %2120 = vmatpush1.bf16.msra.mxu0 0
      %2121 = vmatprep.subr.bf16.mxu0 0
      %2122 = vmatpush1.bf16.msra.mxu0 0
      %2123 = vmatprep.subr.bf16.mxu0 0
      %2124 = vmatpush1.bf16.msra.mxu0 0
      %2125 = vmatprep.subr.bf16.mxu0 0
      %2126 = vmatpush1.bf16.msra.mxu0 0
      %2127 = vmatprep.subr.bf16.mxu0 0
      %2128 = vmatpush1.bf16.msra.mxu0 0
      %2129 = vmatprep.subr.bf16.mxu0 0
      %2130 = vmatpush1.bf16.msra.mxu0 0
      %2131 = vmatprep.subr.bf16.mxu0 0
      %2132 = vmatpush1.bf16.msra.mxu0 0
      %2133 = vmatprep.subr.bf16.mxu0 0
      %2134 = vmatpush1.bf16.msra.mxu0 0
      %2135 = vmatprep.subr.bf16.mxu0 0
      %2136 = vmatpush1.bf16.msra.mxu0 0
      %2137 = vmatprep.mubr.bf16.mxu0 0
      %2138 = vmatmul.mubr.bf16.gmra.mrb[0].mxu0 %v2100
      %v2139 = vpop.f32.mrb[0].mxu0
      %v2140 = vadd.f32 0.0, %v2139
      %v2141 = vpop.f32.mrb[0].mxu0
      %v2142 = vpop.f32.mrb[0].mxu0
      %v2143 = vadd.f32 0.0, %v2142
      %v2144 = vpop.f32.mrb[0].mxu0
      %2145 = vmatprep.mubr.bf16.mxu0 0
      %2146 = vmatmul.mubr.bf16.gmra.mrb[0].mxu0 %v2103
      %v2147 = vpop.f32.mrb[0].mxu0
      %v2148 = vadd.f32 0.0, %v2147
      %v2149 = vpop.f32.mrb[0].mxu0
      %v2150 = vpop.f32.mrb[0].mxu0
      %v2151 = vadd.f32 0.0, %v2150
      %v2152 = vpop.f32.mrb[0].mxu0
      %2153 = vdwg.mxu0
      %v2155 = vsel %vm1565, %v1926, 0
      %v2158 = vsel %vm1565, %v1927, 0
      %2160 = vmatprep.subr.bf16.mxu0 0
      %2161 = vmatpush1.bf16.msra.mxu0 %v989
      %2162 = vmatprep.subr.bf16.mxu0 0
      %2163 = vmatpush1.bf16.msra.mxu0 %v991
      %2164 = vmatprep.subr.bf16.mxu0 0
      %2165 = vmatpush1.bf16.msra.mxu0 0
      %2166 = vmatprep.subr.bf16.mxu0 0
      %2167 = vmatpush1.bf16.msra.mxu0 0
      %2168 = vmatprep.subr.bf16.mxu0 0
      %2169 = vmatpush1.bf16.msra.mxu0 0
      %2170 = vmatprep.subr.bf16.mxu0 0
      %2171 = vmatpush1.bf16.msra.mxu0 0
      %2172 = vmatprep.subr.bf16.mxu0 0
      %2173 = vmatpush1.bf16.msra.mxu0 0
      %2174 = vmatprep.subr.bf16.mxu0 0
      %2175 = vmatpush1.bf16.msra.mxu0 0
      %2176 = vmatprep.subr.bf16.mxu0 0
      %2177 = vmatpush1.bf16.msra.mxu0 0
      %2178 = vmatprep.subr.bf16.mxu0 0
      %2179 = vmatpush1.bf16.msra.mxu0 0
      %2180 = vmatprep.subr.bf16.mxu0 0
      %2181 = vmatpush1.bf16.msra.mxu0 0
      %2182 = vmatprep.subr.bf16.mxu0 0
      %2183 = vmatpush1.bf16.msra.mxu0 0
      %2184 = vmatprep.subr.bf16.mxu0 0
      %2185 = vmatpush1.bf16.msra.mxu0 0
      %2186 = vmatprep.subr.bf16.mxu0 0
      %2187 = vmatpush1.bf16.msra.mxu0 0
      %2188 = vmatprep.subr.bf16.mxu0 0
      %2189 = vmatpush1.bf16.msra.mxu0 0
      %2190 = vmatprep.subr.bf16.mxu0 0
      %2191 = vmatpush1.bf16.msra.mxu0 0
      %2192 = vmatprep.mubr.bf16.mxu0 0
      %2193 = vmatmul.mubr.bf16.gmra.mrb[0].mxu0 %v2155
      %v2194 = vpop.f32.mrb[0].mxu0
      %v2195 = vadd.f32 0.0, %v2194
      %v2196 = vpop.f32.mrb[0].mxu0
      %v2197 = vpop.f32.mrb[0].mxu0
      %v2198 = vadd.f32 0.0, %v2197
      %v2199 = vpop.f32.mrb[0].mxu0
      %2200 = vmatprep.mubr.bf16.mxu0 0
      %2201 = vmatmul.mubr.bf16.gmra.mrb[0].mxu0 %v2158
      %v2202 = vpop.f32.mrb[0].mxu0
      %v2203 = vadd.f32 0.0, %v2202
      %v2204 = vpop.f32.mrb[0].mxu0
      %v2205 = vpop.f32.mrb[0].mxu0
      %v2206 = vadd.f32 0.0, %v2205
      %v2207 = vpop.f32.mrb[0].mxu0
      %2208 = vdwg.mxu0
      %v2210 = vsel %vm1565, %v1928, 0
      %v2213 = vsel %vm1565, %v1929, 0
      %2215 = vmatprep.subr.bf16.mxu0 0
      %2216 = vmatpush1.bf16.msra.mxu0 %v995
      %2217 = vmatprep.subr.bf16.mxu0 0
      %2218 = vmatpush1.bf16.msra.mxu0 %v997
      %2219 = vmatprep.subr.bf16.mxu0 0
      %2220 = vmatpush1.bf16.msra.mxu0 0
      %2221 = vmatprep.subr.bf16.mxu0 0
      %2222 = vmatpush1.bf16.msra.mxu0 0
      %2223 = vmatprep.subr.bf16.mxu0 0
      %2224 = vmatpush1.bf16.msra.mxu0 0
      %2225 = vmatprep.subr.bf16.mxu0 0
      %2226 = vmatpush1.bf16.msra.mxu0 0
      %2227 = vmatprep.subr.bf16.mxu0 0
      %2228 = vmatpush1.bf16.msra.mxu0 0
      %2229 = vmatprep.subr.bf16.mxu0 0
      %2230 = vmatpush1.bf16.msra.mxu0 0
      %2231 = vmatprep.subr.bf16.mxu0 0
      %2232 = vmatpush1.bf16.msra.mxu0 0
      %2233 = vmatprep.subr.bf16.mxu0 0
      %2234 = vmatpush1.bf16.msra.mxu0 0
      %2235 = vmatprep.subr.bf16.mxu0 0
      %2236 = vmatpush1.bf16.msra.mxu0 0
      %2237 = vmatprep.subr.bf16.mxu0 0
      %2238 = vmatpush1.bf16.msra.mxu0 0
      %2239 = vmatprep.subr.bf16.mxu0 0
      %2240 = vmatpush1.bf16.msra.mxu0 0
      %2241 = vmatprep.subr.bf16.mxu0 0
      %2242 = vmatpush1.bf16.msra.mxu0 0
      %2243 = vmatprep.subr.bf16.mxu0 0
      %2244 = vmatpush1.bf16.msra.mxu0 0
      %2245 = vmatprep.subr.bf16.mxu0 0
      %2246 = vmatpush1.bf16.msra.mxu0 0
      %2247 = vmatprep.mubr.bf16.mxu0 0
      %2248 = vmatmul.mubr.bf16.gmra.mrb[0].mxu0 %v2210
      %v2249 = vpop.f32.mrb[0].mxu0
      %v2250 = vadd.f32 0.0, %v2249
      %v2251 = vpop.f32.mrb[0].mxu0
      %v2252 = vpop.f32.mrb[0].mxu0
      %v2253 = vadd.f32 0.0, %v2252
      %v2254 = vpop.f32.mrb[0].mxu0
      %2255 = vmatprep.mubr.bf16.mxu0 0
      %2256 = vmatmul.mubr.bf16.gmra.mrb[0].mxu0 %v2213
      %v2257 = vpop.f32.mrb[0].mxu0
      %v2258 = vadd.f32 0.0, %v2257
      %v2259 = vpop.f32.mrb[0].mxu0
      %v2260 = vpop.f32.mrb[0].mxu0
      %v2261 = vadd.f32 0.0, %v2260
      %v2262 = vpop.f32.mrb[0].mxu0
      %2263 = vdwg.mxu0
      %v2265 = vsel %vm1565, %v1930, 0
      %v2268 = vsel %vm1565, %v1931, 0
      %2270 = vmatprep.subr.bf16.mxu0 0
      %2271 = vmatpush1.bf16.msra.mxu0 %v1001
      %2272 = vmatprep.subr.bf16.mxu0 0
      %2273 = vmatpush1.bf16.msra.mxu0 %v1003
      %2274 = vmatprep.subr.bf16.mxu0 0
      %2275 = vmatpush1.bf16.msra.mxu0 0
      %2276 = vmatprep.subr.bf16.mxu0 0
      %2277 = vmatpush1.bf16.msra.mxu0 0
      %2278 = vmatprep.subr.bf16.mxu0 0
      %2279 = vmatpush1.bf16.msra.mxu0 0
      %2280 = vmatprep.subr.bf16.mxu0 0
      %2281 = vmatpush1.bf16.msra.mxu0 0
      %2282 = vmatprep.subr.bf16.mxu0 0
      %2283 = vmatpush1.bf16.msra.mxu0 0
      %2284 = vmatprep.subr.bf16.mxu0 0
      %2285 = vmatpush1.bf16.msra.mxu0 0
      %2286 = vmatprep.subr.bf16.mxu0 0
      %2287 = vmatpush1.bf16.msra.mxu0 0
      %2288 = vmatprep.subr.bf16.mxu0 0
      %2289 = vmatpush1.bf16.msra.mxu0 0
      %2290 = vmatprep.subr.bf16.mxu0 0
      %2291 = vmatpush1.bf16.msra.mxu0 0
      %2292 = vmatprep.subr.bf16.mxu0 0
      %2293 = vmatpush1.bf16.msra.mxu0 0
      %2294 = vmatprep.subr.bf16.mxu0 0
      %2295 = vmatpush1.bf16.msra.mxu0 0
      %2296 = vmatprep.subr.bf16.mxu0 0
      %2297 = vmatpush1.bf16.msra.mxu0 0
      %2298 = vmatprep.subr.bf16.mxu0 0
      %2299 = vmatpush1.bf16.msra.mxu0 0
      %2300 = vmatprep.subr.bf16.mxu0 0
      %2301 = vmatpush1.bf16.msra.mxu0 0
      %2302 = vmatprep.mubr.bf16.mxu0 0
      %2303 = vmatmul.mubr.bf16.gmra.mrb[0].mxu0 %v2265
      %v2304 = vpop.f32.mrb[0].mxu0
      %v2305 = vadd.f32 0.0, %v2304
      %v2306 = vpop.f32.mrb[0].mxu0
      %v2307 = vpop.f32.mrb[0].mxu0
      %v2308 = vadd.f32 0.0, %v2307
      %v2309 = vpop.f32.mrb[0].mxu0
      %2310 = vmatprep.mubr.bf16.mxu0 0
      %2311 = vmatmul.mubr.bf16.gmra.mrb[0].mxu0 %v2268
      %v2312 = vpop.f32.mrb[0].mxu0
      %v2313 = vadd.f32 0.0, %v2312
      %v2314 = vpop.f32.mrb[0].mxu0
      %v2315 = vpop.f32.mrb[0].mxu0
      %v2316 = vadd.f32 0.0, %v2315
      %v2317 = vpop.f32.mrb[0].mxu0
      %2318 = vdwg.mxu0
      %v2320 = vsel %vm1565, %v1932, 0
      %v2323 = vsel %vm1565, %v1933, 0
      %2325 = vmatprep.subr.bf16.mxu0 0
      %2326 = vmatpush1.bf16.msra.mxu0 %v1007
      %2327 = vmatprep.subr.bf16.mxu0 0
      %2328 = vmatpush1.bf16.msra.mxu0 %v1009
      %2329 = vmatprep.subr.bf16.mxu0 0
      %2330 = vmatpush1.bf16.msra.mxu0 0
      %2331 = vmatprep.subr.bf16.mxu0 0
      %2332 = vmatpush1.bf16.msra.mxu0 0
      %2333 = vmatprep.subr.bf16.mxu0 0
      %2334 = vmatpush1.bf16.msra.mxu0 0
      %2335 = vmatprep.subr.bf16.mxu0 0
      %2336 = vmatpush1.bf16.msra.mxu0 0
      %2337 = vmatprep.subr.bf16.mxu0 0
      %2338 = vmatpush1.bf16.msra.mxu0 0
      %2339 = vmatprep.subr.bf16.mxu0 0
      %2340 = vmatpush1.bf16.msra.mxu0 0
      %2341 = vmatprep.subr.bf16.mxu0 0
      %2342 = vmatpush1.bf16.msra.mxu0 0
      %2343 = vmatprep.subr.bf16.mxu0 0
      %2344 = vmatpush1.bf16.msra.mxu0 0
      %2345 = vmatprep.subr.bf16.mxu0 0
      %2346 = vmatpush1.bf16.msra.mxu0 0
      %2347 = vmatprep.subr.bf16.mxu0 0
      %2348 = vmatpush1.bf16.msra.mxu0 0
      %2349 = vmatprep.subr.bf16.mxu0 0
      %2350 = vmatpush1.bf16.msra.mxu0 0
      %2351 = vmatprep.subr.bf16.mxu0 0
      %2352 = vmatpush1.bf16.msra.mxu0 0
      %2353 = vmatprep.subr.bf16.mxu0 0
      %2354 = vmatpush1.bf16.msra.mxu0 0
      %2355 = vmatprep.subr.bf16.mxu0 0
      %2356 = vmatpush1.bf16.msra.mxu0 0
      %2357 = vmatprep.mubr.bf16.mxu0 0
      %2358 = vmatmul.mubr.bf16.gmra.mrb[0].mxu0 %v2320
      %v2359 = vpop.f32.mrb[0].mxu0
      %v2360 = vadd.f32 0.0, %v2359
      %v2361 = vpop.f32.mrb[0].mxu0
      %v2362 = vpop.f32.mrb[0].mxu0
      %v2363 = vadd.f32 0.0, %v2362
      %v2364 = vpop.f32.mrb[0].mxu0
      %2365 = vmatprep.mubr.bf16.mxu0 0
      %2366 = vmatmul.mubr.bf16.gmra.mrb[0].mxu0 %v2323
      %v2367 = vpop.f32.mrb[0].mxu0
      %v2368 = vadd.f32 0.0, %v2367
      %v2369 = vpop.f32.mrb[0].mxu0
      %v2370 = vpop.f32.mrb[0].mxu0
      %v2371 = vadd.f32 0.0, %v2370
      %v2372 = vpop.f32.mrb[0].mxu0
      %2373 = vdwg.mxu0
      %2378 = vrot.lane.b32.xlu0 %v2030, 16
      %v2379 = vpop.permute.xlu0 %2378
      %2380 = vrot.lane.b32.xlu0 %v2033, 16
      %v2381 = vpop.permute.xlu0 %2380
      %2382 = vrot.lane.b32.xlu0 %v2038, 16
      %v2383 = vpop.permute.xlu0 %2382
      %2384 = vrot.lane.b32.xlu0 %v2041, 16
      %v2385 = vpop.permute.xlu0 %2384
      %2394 = vrot.lane.b32.xlu0 %v2085, 32
      %v2395 = vpop.permute.xlu0 %2394
      %2396 = vrot.lane.b32.xlu0 %v2088, 32
      %v2397 = vpop.permute.xlu0 %2396
      %2398 = vrot.lane.b32.xlu0 %v2093, 32
      %v2399 = vpop.permute.xlu0 %2398
      %2400 = vrot.lane.b32.xlu0 %v2096, 32
      %v2401 = vpop.permute.xlu0 %2400
      %2410 = vrot.lane.b32.xlu0 %v2140, 48
      %v2411 = vpop.permute.xlu0 %2410
      %2412 = vrot.lane.b32.xlu0 %v2143, 48
      %v2413 = vpop.permute.xlu0 %2412
      %2414 = vrot.lane.b32.xlu0 %v2148, 48
      %v2415 = vpop.permute.xlu0 %2414
      %2416 = vrot.lane.b32.xlu0 %v2151, 48
      %v2417 = vpop.permute.xlu0 %2416
      %2426 = vrot.lane.b32.xlu0 %v2195, 64
      %v2427 = vpop.permute.xlu0 %2426
      %2428 = vrot.lane.b32.xlu0 %v2198, 64
      %v2429 = vpop.permute.xlu0 %2428
      %2430 = vrot.lane.b32.xlu0 %v2203, 64
      %v2431 = vpop.permute.xlu0 %2430
      %2432 = vrot.lane.b32.xlu0 %v2206, 64
      %v2433 = vpop.permute.xlu0 %2432
      %2442 = vrot.lane.b32.xlu0 %v2250, 80
      %v2443 = vpop.permute.xlu0 %2442
      %2444 = vrot.lane.b32.xlu0 %v2253, 80
      %v2445 = vpop.permute.xlu0 %2444
      %2446 = vrot.lane.b32.xlu0 %v2258, 80
      %v2447 = vpop.permute.xlu0 %2446
      %2448 = vrot.lane.b32.xlu0 %v2261, 80
      %v2449 = vpop.permute.xlu0 %2448
      %2458 = vrot.lane.b32.xlu0 %v2305, 96
      %v2459 = vpop.permute.xlu0 %2458
      %2460 = vrot.lane.b32.xlu0 %v2308, 96
      %v2461 = vpop.permute.xlu0 %2460
      %2462 = vrot.lane.b32.xlu0 %v2313, 96
      %v2463 = vpop.permute.xlu0 %2462
      %2464 = vrot.lane.b32.xlu0 %v2316, 96
      %v2465 = vpop.permute.xlu0 %2464
      %2474 = vrot.lane.b32.xlu0 %v2360, 112
      %v2475 = vpop.permute.xlu0 %2474
      %2476 = vrot.lane.b32.xlu0 %v2363, 112
      %v2477 = vpop.permute.xlu0 %2476
      %2478 = vrot.lane.b32.xlu0 %v2368, 112
      %v2479 = vpop.permute.xlu0 %2478
      %2480 = vrot.lane.b32.xlu0 %v2371, 112
      %v2481 = vpop.permute.xlu0 %2480
      %v2486 = vsel %vm1012, %v1975, %v2379
      %v2487 = vsel %vm1012, %v1978, %v2381
      %v2488 = vsel %vm1012, %v1983, %v2383
      %v2489 = vsel %vm1012, %v1986, %v2385
      %v2490 = vsel %vm1565, %v2486, %v2395
      %v2491 = vsel %vm1565, %v2487, %v2397
      %v2492 = vsel %vm1565, %v2488, %v2399
      %v2493 = vsel %vm1565, %v2489, %v2401
      %v2494 = vsel %vm511, %v2490, %v2411
      %v2495 = vsel %vm511, %v2491, %v2413
      %v2496 = vsel %vm511, %v2492, %v2415
      %v2497 = vsel %vm511, %v2493, %v2417
      %vm2498 = vcmask 523264
      %v2499 = vsel %vm2498, %v2494, %v2427
      %v2500 = vsel %vm2498, %v2495, %v2429
      %v2501 = vsel %vm2498, %v2496, %v2431
      %v2502 = vsel %vm2498, %v2497, %v2433
      %vm2503 = vcmask 654336
      %v2504 = vsel %vm2503, %v2499, %v2443
      %v2505 = vsel %vm2503, %v2500, %v2445
      %v2506 = vsel %vm2503, %v2501, %v2447
      %v2507 = vsel %vm2503, %v2502, %v2449
      %vm2508 = vcmask 785408
      %v2509 = vsel %vm2508, %v2504, %v2459
      %v2510 = vsel %vm2508, %v2505, %v2461
      %v2511 = vsel %vm2508, %v2506, %v2463
      %v2512 = vsel %vm2508, %v2507, %v2465
      %vm2513 = vcmask 916480
      %v2514 = vsel %vm2513, %v2509, %v2475
      %v2515 = vsel %vm2513, %v2510, %v2477
      %v2516 = vsel %vm2513, %v2511, %v2479
      %v2517 = vsel %vm2513, %v2512, %v2481
      %v2518 = vpack.c.bf16 %v2515, %v2514
      %v2519 = vpack.c.bf16 %v2517, %v2516
      %v2520 = vld [vmem:[%s4] sm:$0xf]
      %v2521 = vld [vmem:[%s4 + $0x4] sm:$0xf]
      %v2522 = vld [vmem:[%s4 + $0x8] sm:$0xf]
      %v2523 = vld [vmem:[%s4 + $0xc] sm:$0xf]
      %v2524 = vld [vmem:[%s4 + $0x10] sm:$0xf]
      %v2525 = vld [vmem:[%s4 + $0x14] sm:$0xf]
      %v2526 = vld [vmem:[%s4 + $0x18] sm:$0xf]
      %v2527 = vld [vmem:[%s4 + $0x1c] sm:$0xf]
      %v2528 = vld [vmem:[%s4 + $0x20] sm:$0xf]
      %v2529 = vld [vmem:[%s4 + $0x24] sm:$0xf]
      %v2530 = vld [vmem:[%s4 + $0x28] sm:$0xf]
      %v2531 = vld [vmem:[%s4 + $0x2c] sm:$0xf]
      %v2532 = vld [vmem:[%s4 + $0x30] sm:$0xf]
      %v2533 = vld [vmem:[%s4 + $0x34] sm:$0xf]
      %v2534 = vld [vmem:[%s4 + $0x38] sm:$0xf]
      %v2535 = vld [vmem:[%s4 + $0x3c] sm:$0xf]
      %v2536 = vld [vmem:[%s5] sm:$0x1]
      %v2538 = vlaneseq
      %v2539 = vshrl.u32 %v2538, 7
      %v2540 = vsub.s32 0, %v2539
      %v2541 = vrot.slane %v2536, %v2540
      %v2559 = vunpack.c.l.b16 %v2520
      %v2560 = vunpack.c.l.b16 %v2521
      %v2561 = vunpack.c.l.b16 %v2522
      %v2562 = vunpack.c.l.b16 %v2523
      %v2563 = vunpack.c.l.b16 %v2524
      %v2564 = vunpack.c.l.b16 %v2525
      %v2565 = vunpack.c.l.b16 %v2526
      %v2566 = vunpack.c.l.b16 %v2527
      %v2567 = vunpack.c.l.b16 %v2528
      %v2568 = vunpack.c.l.b16 %v2529
      %v2569 = vunpack.c.l.b16 %v2530
      %v2570 = vunpack.c.l.b16 %v2531
      %v2571 = vunpack.c.l.b16 %v2532
      %v2572 = vunpack.c.l.b16 %v2533
      %v2573 = vunpack.c.l.b16 %v2534
      %v2574 = vunpack.c.l.b16 %v2535
      %v2575 = vpack.c.b16 %v2560, %v2559
      %v2576 = vpack.c.b16 %v2562, %v2561
      %v2577 = vpack.c.b16 %v2564, %v2563
      %v2578 = vpack.c.b16 %v2566, %v2565
      %v2579 = vpack.c.b16 %v2568, %v2567
      %v2580 = vpack.c.b16 %v2570, %v2569
      %v2581 = vpack.c.b16 %v2572, %v2571
      %v2582 = vpack.c.b16 %v2574, %v2573
      %2591 = vmatprep.subr.bf16.mxu0 0
      %2592 = vmatpush1.bf16.msra.mxu0 %v2575
      %2593 = vmatprep.subr.bf16.mxu0 0
      %2594 = vmatpush1.bf16.msra.mxu0 %v2576
      %2595 = vmatprep.subr.bf16.mxu0 0
      %2596 = vmatpush1.bf16.msra.mxu0 %v2577
      %2597 = vmatprep.subr.bf16.mxu0 0
      %2598 = vmatpush1.bf16.msra.mxu0 %v2578
      %2599 = vmatprep.subr.bf16.mxu0 0
      %2600 = vmatpush1.bf16.msra.mxu0 %v2579
      %2601 = vmatprep.subr.bf16.mxu0 0
      %2602 = vmatpush1.bf16.msra.mxu0 %v2580
      %2603 = vmatprep.subr.bf16.mxu0 0
      %2604 = vmatpush1.bf16.msra.mxu0 %v2581
      %2605 = vmatprep.subr.bf16.mxu0 0
      %2606 = vmatpush1.bf16.msra.mxu0 %v2582
      %2607 = vmatprep.subr.bf16.mxu0 0
      %2608 = vmatpush1.bf16.msra.mxu0 0
      %2609 = vmatprep.subr.bf16.mxu0 0
      %2610 = vmatpush1.bf16.msra.mxu0 0
      %2611 = vmatprep.subr.bf16.mxu0 0
      %2612 = vmatpush1.bf16.msra.mxu0 0
      %2613 = vmatprep.subr.bf16.mxu0 0
      %2614 = vmatpush1.bf16.msra.mxu0 0
      %2615 = vmatprep.subr.bf16.mxu0 0
      %2616 = vmatpush1.bf16.msra.mxu0 0
      %2617 = vmatprep.subr.bf16.mxu0 0
      %2618 = vmatpush1.bf16.msra.mxu0 0
      %2619 = vmatprep.subr.bf16.mxu0 0
      %2620 = vmatpush1.bf16.msra.mxu0 0
      %2621 = vmatprep.subr.bf16.mxu0 0
      %2622 = vmatpush1.bf16.msra.mxu0 0
      %2623 = vmatprep.mubr.bf16.mxu0 0
      %2624 = vmatmul.mubr.bf16.gmra.mrb[0].mxu0 %v2518
      %v2625 = vpop.f32.mrb[0].mxu0
      %v2626 = vadd.f32 %v2541, %v2625
      %v2627 = vpop.f32.mrb[0].mxu0
      %v2628 = vpop.f32.mrb[0].mxu0
      %v2629 = vadd.f32 %v2541, %v2628
      %v2630 = vpop.f32.mrb[0].mxu0
      %2631 = vmatprep.mubr.bf16.mxu0 0
      %2632 = vmatmul.mubr.bf16.gmra.mrb[0].mxu0 %v2519
      %v2633 = vpop.f32.mrb[0].mxu0
      %v2634 = vadd.f32 %v2541, %v2633
      %v2635 = vpop.f32.mrb[0].mxu0
      %v2636 = vpop.f32.mrb[0].mxu0
      %v2637 = vadd.f32 %v2541, %v2636
      %v2638 = vpop.f32.mrb[0].mxu0
      %2639 = vdwg.mxu0
      %v2640 = vadd.f32 %v553, %v2626
      %v2641 = vadd.f32 %v556, %v2629
      %v2642 = vadd.f32 %v561, %v2634
      %v2643 = vadd.f32 %v564, %v2637
      %v2644 = vld [vmem:[%s8] sm:$0x1]
      %v2645 = vld [vmem:[%s9] sm:$0x1]
      %2646 = vadd.xlane.f32.xlu0 %v2640
      %v2647 = vpop.xlane.xlu0 %2646
      %2648 = vadd.xlane.f32.xlu0 %v2641
      %v2649 = vpop.xlane.xlu0 %2648
      %2650 = vadd.xlane.f32.xlu0 %v2642
      %v2651 = vpop.xlane.xlu0 %2650
      %2652 = vadd.xlane.f32.xlu0 %v2643
      %v2653 = vpop.xlane.xlu0 %2652
      %v2654 = vmul.f32 %v2647, %v581
      %v2655 = vmul.f32 %v2649, %v581
      %v2656 = vmul.f32 %v2651, %v581
      %v2657 = vmul.f32 %v2653, %v581
      %v2658 = vsub.f32 %v2640, %v2654
      %v2659 = vsub.f32 %v2641, %v2655
      %v2660 = vsub.f32 %v2642, %v2656
      %v2661 = vsub.f32 %v2643, %v2657
      %v2662 = vmul.f32 %v2658, %v2658
      %v2663 = vmul.f32 %v2659, %v2659
      %v2664 = vmul.f32 %v2660, %v2660
      %v2665 = vmul.f32 %v2661, %v2661
      %2666 = vadd.xlane.f32.xlu0 %v2662
      %v2667 = vpop.xlane.xlu0 %2666
      %2668 = vadd.xlane.f32.xlu0 %v2663
      %v2669 = vpop.xlane.xlu0 %2668
      %2670 = vadd.xlane.f32.xlu0 %v2664
      %v2671 = vpop.xlane.xlu0 %2670
      %2672 = vadd.xlane.f32.xlu0 %v2665
      %v2673 = vpop.xlane.xlu0 %2672
      %v2674 = vmul.f32 %v2667, %v581
      %v2675 = vmul.f32 %v2669, %v581
      %v2676 = vmul.f32 %v2671, %v581
      %v2677 = vmul.f32 %v2673, %v581
      %v2678 = vadd.f32 %v2674, 1e-05
      %v2679 = vadd.f32 %v2675, 1e-05
      %v2680 = vadd.f32 %v2676, 1e-05
      %v2681 = vadd.f32 %v2677, 1e-05
      %v2682 = vrsqrt.pop %v2678
      %v2683 = vrsqrt.pop %v2679
      %v2684 = vrsqrt.pop %v2680
      %v2685 = vrsqrt.pop %v2681
      %v2686 = vmul.f32 %v2658, %v2682
      %v2687 = vmul.f32 %v2659, %v2683
      %v2688 = vmul.f32 %v2660, %v2684
      %v2689 = vmul.f32 %v2661, %v2685
      %v2691 = vlaneseq
      %v2692 = vshrl.u32 %v2691, 7
      %v2693 = vsub.s32 0, %v2692
      %v2694 = vrot.slane %v2644, %v2693
      %v2696 = vmul.f32 %v2686, %v2694
      %v2697 = vmul.f32 %v2687, %v2694
      %v2698 = vmul.f32 %v2688, %v2694
      %v2699 = vmul.f32 %v2689, %v2694
      %v2701 = vlaneseq
      %v2702 = vshrl.u32 %v2701, 7
      %v2703 = vsub.s32 0, %v2702
      %v2704 = vrot.slane %v2645, %v2703
      %v2706 = vadd.f32 %v2696, %v2704
      %v2707 = vadd.f32 %v2697, %v2704
      %v2708 = vadd.f32 %v2698, %v2704
      %v2709 = vadd.f32 %v2699, %v2704
      %v2710 = vpack.c.bf16 %v2707, %v2706
      %v2711 = vpack.c.bf16 %v2709, %v2708
      %v2712 = vld [vmem:[%s10] sm:$0xff]
      %v2713 = vld [vmem:[%s10 + $0x8] sm:$0xff]
      %v2714 = vld [vmem:[%s10 + $0x10] sm:$0xff]
      %v2715 = vld [vmem:[%s10 + $0x18] sm:$0xff]
      %v2716 = vld [vmem:[%s10 + $0x20] sm:$0xff]
      %v2717 = vld [vmem:[%s10 + $0x28] sm:$0xff]
      %v2718 = vld [vmem:[%s10 + $0x30] sm:$0xff]
      %v2719 = vld [vmem:[%s10 + $0x38] sm:$0xff]
      %v2720 = vld [vmem:[%s10 + $0x40] sm:$0xff]
      %v2721 = vld [vmem:[%s10 + $0x48] sm:$0xff]
      %v2722 = vld [vmem:[%s10 + $0x50] sm:$0xff]
      %v2723 = vld [vmem:[%s10 + $0x58] sm:$0xff]
      %v2724 = vld [vmem:[%s10 + $0x60] sm:$0xff]
      %v2725 = vld [vmem:[%s10 + $0x68] sm:$0xff]
      %v2726 = vld [vmem:[%s10 + $0x70] sm:$0xff]
      %v2727 = vld [vmem:[%s10 + $0x78] sm:$0xff]
      %v2728 = vld [vmem:[%s11] sm:$0x3]
      %v2730 = vlaneseq
      %v2731 = vshrl.u32 %v2730, 7
      %v2732 = vsub.s32 0, %v2731
      %v2733 = vrot.slane %v2728, %v2732
      %v2734 = vlaneseq
      %v2735 = vshrl.u32 %v2734, 7
      %v2736 = vsub.s32 1, %v2735
      %v2737 = vrot.slane %v2728, %v2736
      %v2756 = vunpack.c.l.b16 %v2712
      %v2757 = vunpack.c.h.b16 %v2712
      %v2758 = vunpack.c.l.b16 %v2713
      %v2759 = vunpack.c.h.b16 %v2713
      %v2760 = vunpack.c.l.b16 %v2714
      %v2761 = vunpack.c.h.b16 %v2714
      %v2762 = vunpack.c.l.b16 %v2715
      %v2763 = vunpack.c.h.b16 %v2715
      %v2764 = vunpack.c.l.b16 %v2716
      %v2765 = vunpack.c.h.b16 %v2716
      %v2766 = vunpack.c.l.b16 %v2717
      %v2767 = vunpack.c.h.b16 %v2717
      %v2768 = vunpack.c.l.b16 %v2718
      %v2769 = vunpack.c.h.b16 %v2718
      %v2770 = vunpack.c.l.b16 %v2719
      %v2771 = vunpack.c.h.b16 %v2719
      %v2772 = vunpack.c.l.b16 %v2720
      %v2773 = vunpack.c.h.b16 %v2720
      %v2774 = vunpack.c.l.b16 %v2721
      %v2775 = vunpack.c.h.b16 %v2721
      %v2776 = vunpack.c.l.b16 %v2722
      %v2777 = vunpack.c.h.b16 %v2722
      %v2778 = vunpack.c.l.b16 %v2723
      %v2779 = vunpack.c.h.b16 %v2723
      %v2780 = vunpack.c.l.b16 %v2724
      %v2781 = vunpack.c.h.b16 %v2724
      %v2782 = vunpack.c.l.b16 %v2725
      %v2783 = vunpack.c.h.b16 %v2725
      %v2784 = vunpack.c.l.b16 %v2726
      %v2785 = vunpack.c.h.b16 %v2726
      %v2786 = vunpack.c.l.b16 %v2727
      %v2787 = vunpack.c.h.b16 %v2727
      %v2788 = vpack.c.b16 %v2758, %v2756
      %v2789 = vpack.c.b16 %v2759, %v2757
      %v2790 = vpack.c.b16 %v2762, %v2760
      %v2791 = vpack.c.b16 %v2763, %v2761
      %v2792 = vpack.c.b16 %v2766, %v2764
      %v2793 = vpack.c.b16 %v2767, %v2765
      %v2794 = vpack.c.b16 %v2770, %v2768
      %v2795 = vpack.c.b16 %v2771, %v2769
      %v2796 = vpack.c.b16 %v2774, %v2772
      %v2797 = vpack.c.b16 %v2775, %v2773
      %v2798 = vpack.c.b16 %v2778, %v2776
      %v2799 = vpack.c.b16 %v2779, %v2777
      %v2800 = vpack.c.b16 %v2782, %v2780
      %v2801 = vpack.c.b16 %v2783, %v2781
      %v2802 = vpack.c.b16 %v2786, %v2784
      %v2803 = vpack.c.b16 %v2787, %v2785
      %2820 = vmatprep.subr.bf16.mxu0 %v2789
      %2821 = vmatpush1.bf16.msra.mxu0 %v2788
      %2822 = vmatprep.subr.bf16.mxu0 %v2791
      %2823 = vmatpush1.bf16.msra.mxu0 %v2790
      %2824 = vmatprep.subr.bf16.mxu0 %v2793
      %2825 = vmatpush1.bf16.msra.mxu0 %v2792
      %2826 = vmatprep.subr.bf16.mxu0 %v2795
      %2827 = vmatpush1.bf16.msra.mxu0 %v2794
      %2828 = vmatprep.subr.bf16.mxu0 %v2797
      %2829 = vmatpush1.bf16.msra.mxu0 %v2796
      %2830 = vmatprep.subr.bf16.mxu0 %v2799
      %2831 = vmatpush1.bf16.msra.mxu0 %v2798
      %2832 = vmatprep.subr.bf16.mxu0 %v2801
      %2833 = vmatpush1.bf16.msra.mxu0 %v2800
      %2834 = vmatprep.subr.bf16.mxu0 %v2803
      %2835 = vmatpush1.bf16.msra.mxu0 %v2802
      %2836 = vmatprep.subr.bf16.mxu0 0
      %2837 = vmatpush1.bf16.msra.mxu0 0
      %2838 = vmatprep.subr.bf16.mxu0 0
      %2839 = vmatpush1.bf16.msra.mxu0 0
      %2840 = vmatprep.subr.bf16.mxu0 0
      %2841 = vmatpush1.bf16.msra.mxu0 0
      %2842 = vmatprep.subr.bf16.mxu0 0
      %2843 = vmatpush1.bf16.msra.mxu0 0
      %2844 = vmatprep.subr.bf16.mxu0 0
      %2845 = vmatpush1.bf16.msra.mxu0 0
      %2846 = vmatprep.subr.bf16.mxu0 0
      %2847 = vmatpush1.bf16.msra.mxu0 0
      %2848 = vmatprep.subr.bf16.mxu0 0
      %2849 = vmatpush1.bf16.msra.mxu0 0
      %2850 = vmatprep.subr.bf16.mxu0 0
      %2851 = vmatpush1.bf16.msra.mxu0 0
      %2852 = vmatprep.mubr.bf16.mxu0 0
      %2853 = vmatmul.mubr.bf16.gmra.mrb[0].mxu0 %v2710
      %v2854 = vpop.f32.mrb[0].mxu0
      %v2855 = vadd.f32 %v2733, %v2854
      %v2856 = vpop.f32.mrb[0].mxu0
      %v2857 = vadd.f32 %v2737, %v2856
      %v2858 = vpop.f32.mrb[0].mxu0
      %v2859 = vadd.f32 %v2733, %v2858
      %v2860 = vpop.f32.mrb[0].mxu0
      %v2861 = vadd.f32 %v2737, %v2860
      %2862 = vmatprep.mubr.bf16.mxu0 0
      %2863 = vmatmul.mubr.bf16.gmra.mrb[0].mxu0 %v2711
      %v2864 = vpop.f32.mrb[0].mxu0
      %v2865 = vadd.f32 %v2733, %v2864
      %v2866 = vpop.f32.mrb[0].mxu0
      %v2867 = vadd.f32 %v2737, %v2866
      %v2868 = vpop.f32.mrb[0].mxu0
      %v2869 = vadd.f32 %v2733, %v2868
      %v2870 = vpop.f32.mrb[0].mxu0
      %v2871 = vadd.f32 %v2737, %v2870
      %2872 = vdwg.mxu0
      %v2873 = vmul.f32 %v2855, 0.5
      %v2874 = vmul.f32 %v2857, 0.5
      %v2875 = vmul.f32 %v2859, 0.5
      %v2876 = vmul.f32 %v2861, 0.5
      %v2877 = vmul.f32 %v2865, 0.5
      %v2878 = vmul.f32 %v2867, 0.5
      %v2879 = vmul.f32 %v2869, 0.5
      %v2880 = vmul.f32 %v2871, 0.5
      %v2881 = vmul.f32 %v2855, 0.70710677
      %v2882 = vmul.f32 %v2857, 0.70710677
      %v2883 = vmul.f32 %v2859, 0.70710677
      %v2884 = vmul.f32 %v2861, 0.70710677
      %v2885 = vmul.f32 %v2865, 0.70710677
      %v2886 = vmul.f32 %v2867, 0.70710677
      %v2887 = vmul.f32 %v2869, 0.70710677
      %v2888 = vmul.f32 %v2871, 0.70710677
      %v2889 = verf.f32.pop %v2881
      %v2890 = verf.f32.pop %v2882
      %v2891 = verf.f32.pop %v2883
      %v2892 = verf.f32.pop %v2884
      %v2893 = verf.f32.pop %v2885
      %v2894 = verf.f32.pop %v2886
      %v2895 = verf.f32.pop %v2887
      %v2896 = verf.f32.pop %v2888
      %v2897 = vadd.f32 %v2889, 1.0
      %v2898 = vadd.f32 %v2890, 1.0
      %v2899 = vadd.f32 %v2891, 1.0
      %v2900 = vadd.f32 %v2892, 1.0
      %v2901 = vadd.f32 %v2893, 1.0
      %v2902 = vadd.f32 %v2894, 1.0
      %v2903 = vadd.f32 %v2895, 1.0
      %v2904 = vadd.f32 %v2896, 1.0
      %v2905 = vmul.f32 %v2873, %v2897
      %v2906 = vmul.f32 %v2874, %v2898
      %v2907 = vmul.f32 %v2875, %v2899
      %v2908 = vmul.f32 %v2876, %v2900
      %v2909 = vmul.f32 %v2877, %v2901
      %v2910 = vmul.f32 %v2878, %v2902
      %v2911 = vmul.f32 %v2879, %v2903
      %v2912 = vmul.f32 %v2880, %v2904
      %v2913 = vpack.c.bf16 %v2907, %v2905
      %v2914 = vpack.c.bf16 %v2908, %v2906
      %v2915 = vpack.c.bf16 %v2911, %v2909
      %v2916 = vpack.c.bf16 %v2912, %v2910
      %v2917 = vld [vmem:[%s12] sm:$0xf]
      %v2918 = vld [vmem:[%s12 + $0x4] sm:$0xf]
      %v2919 = vld [vmem:[%s12 + $0x8] sm:$0xf]
      %v2920 = vld [vmem:[%s12 + $0xc] sm:$0xf]
      %v2921 = vld [vmem:[%s12 + $0x10] sm:$0xf]
      %v2922 = vld [vmem:[%s12 + $0x14] sm:$0xf]
      %v2923 = vld [vmem:[%s12 + $0x18] sm:$0xf]
      %v2924 = vld [vmem:[%s12 + $0x1c] sm:$0xf]
      %v2925 = vld [vmem:[%s12 + $0x20] sm:$0xf]
      %v2926 = vld [vmem:[%s12 + $0x24] sm:$0xf]
      %v2927 = vld [vmem:[%s12 + $0x28] sm:$0xf]
      %v2928 = vld [vmem:[%s12 + $0x2c] sm:$0xf]
      %v2929 = vld [vmem:[%s12 + $0x30] sm:$0xf]
      %v2930 = vld [vmem:[%s12 + $0x34] sm:$0xf]
      %v2931 = vld [vmem:[%s12 + $0x38] sm:$0xf]
      %v2932 = vld [vmem:[%s12 + $0x3c] sm:$0xf]
      %v2933 = vld [vmem:[%s12 + $0x40] sm:$0xf]
      %v2934 = vld [vmem:[%s12 + $0x44] sm:$0xf]
      %v2935 = vld [vmem:[%s12 + $0x48] sm:$0xf]
      %v2936 = vld [vmem:[%s12 + $0x4c] sm:$0xf]
      %v2937 = vld [vmem:[%s12 + $0x50] sm:$0xf]
      %v2938 = vld [vmem:[%s12 + $0x54] sm:$0xf]
      %v2939 = vld [vmem:[%s12 + $0x58] sm:$0xf]
      %v2940 = vld [vmem:[%s12 + $0x5c] sm:$0xf]
      %v2941 = vld [vmem:[%s12 + $0x60] sm:$0xf]
      %v2942 = vld [vmem:[%s12 + $0x64] sm:$0xf]
      %v2943 = vld [vmem:[%s12 + $0x68] sm:$0xf]
      %v2944 = vld [vmem:[%s12 + $0x6c] sm:$0xf]
      %v2945 = vld [vmem:[%s12 + $0x70] sm:$0xf]
      %v2946 = vld [vmem:[%s12 + $0x74] sm:$0xf]
      %v2947 = vld [vmem:[%s12 + $0x78] sm:$0xf]
      %v2948 = vld [vmem:[%s12 + $0x7c] sm:$0xf]
      %v2949 = vld [vmem:[%s13] sm:$0x1]
      %v2951 = vlaneseq
      %v2952 = vshrl.u32 %v2951, 7
      %v2953 = vsub.s32 0, %v2952
      %v2954 = vrot.slane %v2949, %v2953
      %v2988 = vunpack.c.l.b16 %v2917
      %v2989 = vunpack.c.l.b16 %v2918
      %v2990 = vunpack.c.l.b16 %v2919
      %v2991 = vunpack.c.l.b16 %v2920
      %v2992 = vunpack.c.l.b16 %v2921
      %v2993 = vunpack.c.l.b16 %v2922
      %v2994 = vunpack.c.l.b16 %v2923
      %v2995 = vunpack.c.l.b16 %v2924
      %v2996 = vunpack.c.l.b16 %v2925
      %v2997 = vunpack.c.l.b16 %v2926
      %v2998 = vunpack.c.l.b16 %v2927
      %v2999 = vunpack.c.l.b16 %v2928
      %v3000 = vunpack.c.l.b16 %v2929
      %v3001 = vunpack.c.l.b16 %v2930
      %v3002 = vunpack.c.l.b16 %v2931
      %v3003 = vunpack.c.l.b16 %v2932
      %v3004 = vunpack.c.l.b16 %v2933
      %v3005 = vunpack.c.l.b16 %v2934
      %v3006 = vunpack.c.l.b16 %v2935
      %v3007 = vunpack.c.l.b16 %v2936
      %v3008 = vunpack.c.l.b16 %v2937
      %v3009 = vunpack.c.l.b16 %v2938
      %v3010 = vunpack.c.l.b16 %v2939
      %v3011 = vunpack.c.l.b16 %v2940
      %v3012 = vunpack.c.l.b16 %v2941
      %v3013 = vunpack.c.l.b16 %v2942
      %v3014 = vunpack.c.l.b16 %v2943
      %v3015 = vunpack.c.l.b16 %v2944
      %v3016 = vunpack.c.l.b16 %v2945
      %v3017 = vunpack.c.l.b16 %v2946
      %v3018 = vunpack.c.l.b16 %v2947
      %v3019 = vunpack.c.l.b16 %v2948
      %v3020 = vpack.c.b16 %v2989, %v2988
      %v3021 = vpack.c.b16 %v2991, %v2990
      %v3022 = vpack.c.b16 %v2993, %v2992
      %v3023 = vpack.c.b16 %v2995, %v2994
      %v3024 = vpack.c.b16 %v2997, %v2996
      %v3025 = vpack.c.b16 %v2999, %v2998
      %v3026 = vpack.c.b16 %v3001, %v3000
      %v3027 = vpack.c.b16 %v3003, %v3002
      %v3028 = vpack.c.b16 %v3005, %v3004
      %v3029 = vpack.c.b16 %v3007, %v3006
      %v3030 = vpack.c.b16 %v3009, %v3008
      %v3031 = vpack.c.b16 %v3011, %v3010
      %v3032 = vpack.c.b16 %v3013, %v3012
      %v3033 = vpack.c.b16 %v3015, %v3014
      %v3034 = vpack.c.b16 %v3017, %v3016
      %v3035 = vpack.c.b16 %v3019, %v3018
      %3052 = vmatprep.subr.bf16.mxu0 0
      %3053 = vmatpush1.bf16.msra.mxu0 %v3020
      %3054 = vmatprep.subr.bf16.mxu0 0
      %3055 = vmatpush1.bf16.msra.mxu0 %v3021
      %3056 = vmatprep.subr.bf16.mxu0 0
      %3057 = vmatpush1.bf16.msra.mxu0 %v3022
      %3058 = vmatprep.subr.bf16.mxu0 0
      %3059 = vmatpush1.bf16.msra.mxu0 %v3023
      %3060 = vmatprep.subr.bf16.mxu0 0
      %3061 = vmatpush1.bf16.msra.mxu0 %v3024
      %3062 = vmatprep.subr.bf16.mxu0 0
      %3063 = vmatpush1.bf16.msra.mxu0 %v3025
      %3064 = vmatprep.subr.bf16.mxu0 0
      %3065 = vmatpush1.bf16.msra.mxu0 %v3026
      %3066 = vmatprep.subr.bf16.mxu0 0
      %3067 = vmatpush1.bf16.msra.mxu0 %v3027
      %3068 = vmatprep.subr.bf16.mxu0 0
      %3069 = vmatpush1.bf16.msra.mxu0 %v3028
      %3070 = vmatprep.subr.bf16.mxu0 0
      %3071 = vmatpush1.bf16.msra.mxu0 %v3029
      %3072 = vmatprep.subr.bf16.mxu0 0
      %3073 = vmatpush1.bf16.msra.mxu0 %v3030
      %3074 = vmatprep.subr.bf16.mxu0 0
      %3075 = vmatpush1.bf16.msra.mxu0 %v3031
      %3076 = vmatprep.subr.bf16.mxu0 0
      %3077 = vmatpush1.bf16.msra.mxu0 %v3032
      %3078 = vmatprep.subr.bf16.mxu0 0
      %3079 = vmatpush1.bf16.msra.mxu0 %v3033
      %3080 = vmatprep.subr.bf16.mxu0 0
      %3081 = vmatpush1.bf16.msra.mxu0 %v3034
      %3082 = vmatprep.subr.bf16.mxu0 0
      %3083 = vmatpush1.bf16.msra.mxu0 %v3035
      %3084 = vmatprep.mubr.bf16.mxu0 %v2914
      %3085 = vmatmul.mubr.bf16.gmra.mrb[0].mxu0 %v2913
      %v3086 = vpop.f32.mrb[0].mxu0
      %v3087 = vadd.f32 %v2954, %v3086
      %v3088 = vpop.f32.mrb[0].mxu0
      %v3089 = vpop.f32.mrb[0].mxu0
      %v3090 = vadd.f32 %v2954, %v3089
      %v3091 = vpop.f32.mrb[0].mxu0
      %3092 = vmatprep.mubr.bf16.mxu0 %v2916
      %3093 = vmatmul.mubr.bf16.gmra.mrb[0].mxu0 %v2915
      %v3094 = vpop.f32.mrb[0].mxu0
      %v3095 = vadd.f32 %v2954, %v3094
      %v3096 = vpop.f32.mrb[0].mxu0
      %v3097 = vpop.f32.mrb[0].mxu0
      %v3098 = vadd.f32 %v2954, %v3097
      %v3099 = vpop.f32.mrb[0].mxu0
      %3100 = vdwg.mxu0
      %v3101 = vadd.f32 %v2640, %v3087
      %v3102 = vadd.f32 %v2641, %v3090
      %v3103 = vadd.f32 %v2642, %v3095
      %v3104 = vadd.f32 %v2643, %v3098
      %s3105 = scalar_lea.vmem %s6, 1
      %v3106 = vld [vmem:[%s3105] sm:$0x1]
      %s3107 = scalar_lea.vmem %s7, 1
      %v3108 = vld [vmem:[%s3107] sm:$0x1]
      %3109 = vadd.xlane.f32.xlu0 %v3101
      %v3110 = vpop.xlane.xlu0 %3109
      %3111 = vadd.xlane.f32.xlu0 %v3102
      %v3112 = vpop.xlane.xlu0 %3111
      %3113 = vadd.xlane.f32.xlu0 %v3103
      %v3114 = vpop.xlane.xlu0 %3113
      %3115 = vadd.xlane.f32.xlu0 %v3104
      %v3116 = vpop.xlane.xlu0 %3115
      %v3117 = vmul.f32 %v3110, %v581
      %v3118 = vmul.f32 %v3112, %v581
      %v3119 = vmul.f32 %v3114, %v581
      %v3120 = vmul.f32 %v3116, %v581
      %v3121 = vsub.f32 %v3101, %v3117
      %v3122 = vsub.f32 %v3102, %v3118
      %v3123 = vsub.f32 %v3103, %v3119
      %v3124 = vsub.f32 %v3104, %v3120
      %v3125 = vmul.f32 %v3121, %v3121
      %v3126 = vmul.f32 %v3122, %v3122
      %v3127 = vmul.f32 %v3123, %v3123
      %v3128 = vmul.f32 %v3124, %v3124
      %3129 = vadd.xlane.f32.xlu0 %v3125
      %v3130 = vpop.xlane.xlu0 %3129
      %3131 = vadd.xlane.f32.xlu0 %v3126
      %v3132 = vpop.xlane.xlu0 %3131
      %3133 = vadd.xlane.f32.xlu0 %v3127
      %v3134 = vpop.xlane.xlu0 %3133
      %3135 = vadd.xlane.f32.xlu0 %v3128
      %v3136 = vpop.xlane.xlu0 %3135
      %v3137 = vmul.f32 %v3130, %v581
      %v3138 = vmul.f32 %v3132, %v581
      %v3139 = vmul.f32 %v3134, %v581
      %v3140 = vmul.f32 %v3136, %v581
      %v3141 = vadd.f32 %v3137, 1e-05
      %v3142 = vadd.f32 %v3138, 1e-05
      %v3143 = vadd.f32 %v3139, 1e-05
      %v3144 = vadd.f32 %v3140, 1e-05
      %v3145 = vrsqrt.pop %v3141
      %v3146 = vrsqrt.pop %v3142
      %v3147 = vrsqrt.pop %v3143
      %v3148 = vrsqrt.pop %v3144
      %v3149 = vmul.f32 %v3121, %v3145
      %v3150 = vmul.f32 %v3122, %v3146
      %v3151 = vmul.f32 %v3123, %v3147
      %v3152 = vmul.f32 %v3124, %v3148
      %v3154 = vlaneseq
      %v3155 = vshrl.u32 %v3154, 7
      %v3156 = vsub.s32 0, %v3155
      %v3157 = vrot.slane %v3106, %v3156
      %v3159 = vmul.f32 %v3149, %v3157
      %v3160 = vmul.f32 %v3150, %v3157
      %v3161 = vmul.f32 %v3151, %v3157
      %v3162 = vmul.f32 %v3152, %v3157
      %v3164 = vlaneseq
      %v3165 = vshrl.u32 %v3164, 7
      %v3166 = vsub.s32 0, %v3165
      %v3167 = vrot.slane %v3108, %v3166
      %v3169 = vadd.f32 %v3159, %v3167
      %v3170 = vadd.f32 %v3160, %v3167
      %v3171 = vadd.f32 %v3161, %v3167
      %v3172 = vadd.f32 %v3162, %v3167
      %v3173 = vpack.c.bf16 %v3170, %v3169
      %v3174 = vpack.c.bf16 %v3172, %v3171
      %v3175 = vld [vmem:[%s3] sm:$0xff]
      %v3176 = vld [vmem:[%s3 + $0x8] sm:$0xf]
      %v3177 = vld [vmem:[%s3 + $0xc] sm:$0xff]
      %v3178 = vld [vmem:[%s3 + $0x14] sm:$0xf]
      %v3179 = vld [vmem:[%s3 + $0x18] sm:$0xff]
      %v3180 = vld [vmem:[%s3 + $0x20] sm:$0xf]
      %v3181 = vld [vmem:[%s3 + $0x24] sm:$0xff]
      %v3182 = vld [vmem:[%s3 + $0x2c] sm:$0xf]
      %v3183 = vld [vmem:[%s3 + $0x30] sm:$0xff]
      %v3184 = vld [vmem:[%s3 + $0x38] sm:$0xf]
      %v3185 = vld [vmem:[%s3 + $0x3c] sm:$0xff]
      %v3186 = vld [vmem:[%s3 + $0x44] sm:$0xf]
      %v3187 = vld [vmem:[%s3 + $0x48] sm:$0xff]
      %v3188 = vld [vmem:[%s3 + $0x50] sm:$0xf]
      %v3189 = vld [vmem:[%s3 + $0x54] sm:$0xff]
      %v3190 = vld [vmem:[%s3 + $0x5c] sm:$0xf]
      %v3191 = vld [vmem:[%s3 + $0x60] sm:$0xff]
      %v3192 = vld [vmem:[%s3 + $0x68] sm:$0xf]
      %v3193 = vld [vmem:[%s3 + $0x6c] sm:$0xff]
      %v3194 = vld [vmem:[%s3 + $0x74] sm:$0xf]
      %v3195 = vld [vmem:[%s3 + $0x78] sm:$0xff]
      %v3196 = vld [vmem:[%s3 + $0x80] sm:$0xf]
      %v3197 = vld [vmem:[%s3 + $0x84] sm:$0xff]
      %v3198 = vld [vmem:[%s3 + $0x8c] sm:$0xf]
      %v3199 = vld [vmem:[%s3 + $0x90] sm:$0xff]
      %v3200 = vld [vmem:[%s3 + $0x98] sm:$0xf]
      %v3201 = vld [vmem:[%s3 + $0x9c] sm:$0xff]
      %v3202 = vld [vmem:[%s3 + $0xa4] sm:$0xf]
      %v3203 = vld [vmem:[%s3 + $0xa8] sm:$0xff]
      %v3204 = vld [vmem:[%s3 + $0xb0] sm:$0xf]
      %v3205 = vld [vmem:[%s3 + $0xb4] sm:$0xff]
      %v3206 = vld [vmem:[%s3 + $0xbc] sm:$0xf]
      %v3239 = vunpack.c.l.b16 %v3175
      %v3240 = vunpack.c.h.b16 %v3175
      %v3241 = vunpack.c.l.b16 %v3176
      %v3242 = vunpack.c.l.b16 %v3177
      %v3243 = vunpack.c.h.b16 %v3177
      %v3244 = vunpack.c.l.b16 %v3178
      %v3245 = vunpack.c.l.b16 %v3179
      %v3246 = vunpack.c.h.b16 %v3179
      %v3247 = vunpack.c.l.b16 %v3180
      %v3248 = vunpack.c.l.b16 %v3181
      %v3249 = vunpack.c.h.b16 %v3181
      %v3250 = vunpack.c.l.b16 %v3182
      %v3251 = vunpack.c.l.b16 %v3183
      %v3252 = vunpack.c.h.b16 %v3183
      %v3253 = vunpack.c.l.b16 %v3184
      %v3254 = vunpack.c.l.b16 %v3185
      %v3255 = vunpack.c.h.b16 %v3185
      %v3256 = vunpack.c.l.b16 %v3186
      %v3257 = vunpack.c.l.b16 %v3187
      %v3258 = vunpack.c.h.b16 %v3187
      %v3259 = vunpack.c.l.b16 %v3188
      %v3260 = vunpack.c.l.b16 %v3189
      %v3261 = vunpack.c.h.b16 %v3189
      %v3262 = vunpack.c.l.b16 %v3190
      %v3263 = vunpack.c.l.b16 %v3191
      %v3264 = vunpack.c.h.b16 %v3191
      %v3265 = vunpack.c.l.b16 %v3192
      %v3266 = vunpack.c.l.b16 %v3193
      %v3267 = vunpack.c.h.b16 %v3193
      %v3268 = vunpack.c.l.b16 %v3194
      %v3269 = vunpack.c.l.b16 %v3195
      %v3270 = vunpack.c.h.b16 %v3195
      %v3271 = vunpack.c.l.b16 %v3196
      %v3272 = vunpack.c.l.b16 %v3197
      %v3273 = vunpack.c.h.b16 %v3197
      %v3274 = vunpack.c.l.b16 %v3198
      %v3275 = vunpack.c.l.b16 %v3199
      %v3276 = vunpack.c.h.b16 %v3199
      %v3277 = vunpack.c.l.b16 %v3200
      %v3278 = vunpack.c.l.b16 %v3201
      %v3279 = vunpack.c.h.b16 %v3201
      %v3280 = vunpack.c.l.b16 %v3202
      %v3281 = vunpack.c.l.b16 %v3203
      %v3282 = vunpack.c.h.b16 %v3203
      %v3283 = vunpack.c.l.b16 %v3204
      %v3284 = vunpack.c.l.b16 %v3205
      %v3285 = vunpack.c.h.b16 %v3205
      %v3286 = vunpack.c.l.b16 %v3206
      %v3287 = vpack.c.b16 %v3242, %v3239
      %v3288 = vpack.c.b16 %v3243, %v3240
      %v3289 = vpack.c.b16 %v3244, %v3241
      %v3290 = vpack.c.b16 %v3248, %v3245
      %v3291 = vpack.c.b16 %v3249, %v3246
      %v3292 = vpack.c.b16 %v3250, %v3247
      %v3293 = vpack.c.b16 %v3254, %v3251
      %v3294 = vpack.c.b16 %v3255, %v3252
      %v3295 = vpack.c.b16 %v3256, %v3253
      %v3296 = vpack.c.b16 %v3260, %v3257
      %v3297 = vpack.c.b16 %v3261, %v3258
      %v3298 = vpack.c.b16 %v3262, %v3259
      %v3299 = vpack.c.b16 %v3266, %v3263
      %v3300 = vpack.c.b16 %v3267, %v3264
      %v3301 = vpack.c.b16 %v3268, %v3265
      %v3302 = vpack.c.b16 %v3272, %v3269
      %v3303 = vpack.c.b16 %v3273, %v3270
      %v3304 = vpack.c.b16 %v3274, %v3271
      %v3305 = vpack.c.b16 %v3278, %v3275
      %v3306 = vpack.c.b16 %v3279, %v3276
      %v3307 = vpack.c.b16 %v3280, %v3277
      %v3308 = vpack.c.b16 %v3284, %v3281
      %v3309 = vpack.c.b16 %v3285, %v3282
      %v3310 = vpack.c.b16 %v3286, %v3283
      %3335 = vmatprep.subr.bf16.mxu0 %v3288
      %3336 = vmatpush1.bf16.msra.mxu0 %v3287
      %3337 = vmatprep.subr.bf16.mxu0 %v3291
      %3338 = vmatpush1.bf16.msra.mxu0 %v3290
      %3339 = vmatprep.subr.bf16.mxu0 %v3294
      %3340 = vmatpush1.bf16.msra.mxu0 %v3293
      %3341 = vmatprep.subr.bf16.mxu0 %v3297
      %3342 = vmatpush1.bf16.msra.mxu0 %v3296
      %3343 = vmatprep.subr.bf16.mxu0 %v3300
      %3344 = vmatpush1.bf16.msra.mxu0 %v3299
      %3345 = vmatprep.subr.bf16.mxu0 %v3303
      %3346 = vmatpush1.bf16.msra.mxu0 %v3302
      %3347 = vmatprep.subr.bf16.mxu0 %v3306
      %3348 = vmatpush1.bf16.msra.mxu0 %v3305
      %3349 = vmatprep.subr.bf16.mxu0 %v3309
      %3350 = vmatpush1.bf16.msra.mxu0 %v3308
      %3351 = vmatprep.subr.bf16.mxu0 0
      %3352 = vmatpush1.bf16.msra.mxu0 0
      %3353 = vmatprep.subr.bf16.mxu0 0
      %3354 = vmatpush1.bf16.msra.mxu0 0
      %3355 = vmatprep.subr.bf16.mxu0 0
      %3356 = vmatpush1.bf16.msra.mxu0 0
      %3357 = vmatprep.subr.bf16.mxu0 0
      %3358 = vmatpush1.bf16.msra.mxu0 0
      %3359 = vmatprep.subr.bf16.mxu0 0
      %3360 = vmatpush1.bf16.msra.mxu0 0
      %3361 = vmatprep.subr.bf16.mxu0 0
      %3362 = vmatpush1.bf16.msra.mxu0 0
      %3363 = vmatprep.subr.bf16.mxu0 0
      %3364 = vmatpush1.bf16.msra.mxu0 0
      %3365 = vmatprep.subr.bf16.mxu0 0
      %3366 = vmatpush1.bf16.msra.mxu0 0
      %3367 = vmatprep.mubr.bf16.mxu0 0
      %3368 = vmatmul.mubr.bf16.gmra.mrb[0].mxu0 %v3173
      %v3369 = vpop.f32.mrb[0].mxu0
      %v3370 = vadd.f32 0.0, %v3369
      %v3371 = vpop.f32.mrb[0].mxu0
      %v3372 = vadd.f32 0.0, %v3371
      %v3373 = vpop.f32.mrb[0].mxu0
      %v3374 = vadd.f32 0.0, %v3373
      %v3375 = vpop.f32.mrb[0].mxu0
      %v3376 = vadd.f32 0.0, %v3375
      %3377 = vmatprep.mubr.bf16.mxu0 0
      %3378 = vmatmul.mubr.bf16.gmra.mrb[0].mxu0 %v3174
      %v3379 = vpop.f32.mrb[0].mxu0
      %v3380 = vadd.f32 0.0, %v3379
      %v3381 = vpop.f32.mrb[0].mxu0
      %v3382 = vadd.f32 0.0, %v3381
      %v3383 = vpop.f32.mrb[0].mxu0
      %v3384 = vadd.f32 0.0, %v3383
      %v3385 = vpop.f32.mrb[0].mxu0
      %v3386 = vadd.f32 0.0, %v3385
      %3387 = vdwg.mxu0
      %3388 = vmatprep.subr.bf16.mxu0 0
      %3389 = vmatpush1.bf16.msra.mxu0 %v3289
      %3390 = vmatprep.subr.bf16.mxu0 0
      %3391 = vmatpush1.bf16.msra.mxu0 %v3292
      %3392 = vmatprep.subr.bf16.mxu0 0
      %3393 = vmatpush1.bf16.msra.mxu0 %v3295
      %3394 = vmatprep.subr.bf16.mxu0 0
      %3395 = vmatpush1.bf16.msra.mxu0 %v3298
      %3396 = vmatprep.subr.bf16.mxu0 0
      %3397 = vmatpush1.bf16.msra.mxu0 %v3301
      %3398 = vmatprep.subr.bf16.mxu0 0
      %3399 = vmatpush1.bf16.msra.mxu0 %v3304
      %3400 = vmatprep.subr.bf16.mxu0 0
      %3401 = vmatpush1.bf16.msra.mxu0 %v3307
      %3402 = vmatprep.subr.bf16.mxu0 0
      %3403 = vmatpush1.bf16.msra.mxu0 %v3310
      %3404 = vmatprep.subr.bf16.mxu0 0
      %3405 = vmatpush1.bf16.msra.mxu0 0
      %3406 = vmatprep.subr.bf16.mxu0 0
      %3407 = vmatpush1.bf16.msra.mxu0 0
      %3408 = vmatprep.subr.bf16.mxu0 0
      %3409 = vmatpush1.bf16.msra.mxu0 0
      %3410 = vmatprep.subr.bf16.mxu0 0
      %3411 = vmatpush1.bf16.msra.mxu0 0
      %3412 = vmatprep.subr.bf16.mxu0 0
      %3413 = vmatpush1.bf16.msra.mxu0 0
      %3414 = vmatprep.subr.bf16.mxu0 0
      %3415 = vmatpush1.bf16.msra.mxu0 0
      %3416 = vmatprep.subr.bf16.mxu0 0
      %3417 = vmatpush1.bf16.msra.mxu0 0
      %3418 = vmatprep.subr.bf16.mxu0 0
      %3419 = vmatpush1.bf16.msra.mxu0 0
      %3420 = vmatprep.mubr.bf16.mxu0 0
      %3421 = vmatmul.mubr.bf16.gmra.mrb[0].mxu0 %v3173
      %v3422 = vpop.f32.mrb[0].mxu0
      %v3423 = vadd.f32 0.0, %v3422
      %v3424 = vpop.f32.mrb[0].mxu0
      %v3425 = vpop.f32.mrb[0].mxu0
      %v3426 = vadd.f32 0.0, %v3425
      %v3427 = vpop.f32.mrb[0].mxu0
      %3428 = vmatprep.mubr.bf16.mxu0 0
      %3429 = vmatmul.mubr.bf16.gmra.mrb[0].mxu0 %v3174
      %v3430 = vpop.f32.mrb[0].mxu0
      %v3431 = vadd.f32 0.0, %v3430
      %v3432 = vpop.f32.mrb[0].mxu0
      %v3433 = vpop.f32.mrb[0].mxu0
      %v3434 = vadd.f32 0.0, %v3433
      %v3435 = vpop.f32.mrb[0].mxu0
      %3436 = vdwg.mxu0
      %v3437 = vpack.c.bf16 %v3374, %v3370
      %v3438 = vpack.c.bf16 %v3376, %v3372
      %v3439 = vpack.c.bf16 %v3426, %v3423
      %v3440 = vpack.c.bf16 %v3384, %v3380
      %v3441 = vpack.c.bf16 %v3386, %v3382
      %v3442 = vpack.c.bf16 %v3434, %v3431
      %3445 = vrot.lane.b32.xlu0 %v3437, 112
      %v3446 = vpop.permute.xlu0 %3445
      %3447 = vrot.lane.b32.xlu0 %v3440, 112
      %v3448 = vpop.permute.xlu0 %3447
      %3449 = vrot.lane.b32.xlu0 %v3437, 96
      %v3450 = vpop.permute.xlu0 %3449
      %3451 = vrot.lane.b32.xlu0 %v3440, 96
      %v3452 = vpop.permute.xlu0 %3451
      %3453 = vrot.lane.b32.xlu0 %v3437, 80
      %v3454 = vpop.permute.xlu0 %3453
      %3455 = vrot.lane.b32.xlu0 %v3440, 80
      %v3456 = vpop.permute.xlu0 %3455
      %3457 = vrot.lane.b32.xlu0 %v3437, 64
      %v3458 = vpop.permute.xlu0 %3457
      %3459 = vrot.lane.b32.xlu0 %v3440, 64
      %v3460 = vpop.permute.xlu0 %3459
      %3461 = vrot.lane.b32.xlu0 %v3437, 48
      %v3462 = vpop.permute.xlu0 %3461
      %3463 = vrot.lane.b32.xlu0 %v3440, 48
      %v3464 = vpop.permute.xlu0 %3463
      %3465 = vrot.lane.b32.xlu0 %v3437, 32
      %v3466 = vpop.permute.xlu0 %3465
      %3467 = vrot.lane.b32.xlu0 %v3440, 32
      %v3468 = vpop.permute.xlu0 %3467
      %3469 = vrot.lane.b32.xlu0 %v3437, 16
      %v3470 = vpop.permute.xlu0 %3469
      %3471 = vrot.lane.b32.xlu0 %v3440, 16
      %v3472 = vpop.permute.xlu0 %3471
      %3475 = vrot.lane.b32.xlu0 %v3438, 112
      %v3476 = vpop.permute.xlu0 %3475
      %3477 = vrot.lane.b32.xlu0 %v3441, 112
      %v3478 = vpop.permute.xlu0 %3477
      %3479 = vrot.lane.b32.xlu0 %v3438, 96
      %v3480 = vpop.permute.xlu0 %3479
      %3481 = vrot.lane.b32.xlu0 %v3441, 96
      %v3482 = vpop.permute.xlu0 %3481
      %3483 = vrot.lane.b32.xlu0 %v3438, 80
      %v3484 = vpop.permute.xlu0 %3483
      %3485 = vrot.lane.b32.xlu0 %v3441, 80
      %v3486 = vpop.permute.xlu0 %3485
      %3487 = vrot.lane.b32.xlu0 %v3438, 64
      %v3488 = vpop.permute.xlu0 %3487
      %3489 = vrot.lane.b32.xlu0 %v3441, 64
      %v3490 = vpop.permute.xlu0 %3489
      %3491 = vrot.lane.b32.xlu0 %v3438, 48
      %v3492 = vpop.permute.xlu0 %3491
      %3493 = vrot.lane.b32.xlu0 %v3441, 48
      %v3494 = vpop.permute.xlu0 %3493
      %3495 = vrot.lane.b32.xlu0 %v3438, 32
      %v3496 = vpop.permute.xlu0 %3495
      %3497 = vrot.lane.b32.xlu0 %v3441, 32
      %v3498 = vpop.permute.xlu0 %3497
      %3499 = vrot.lane.b32.xlu0 %v3438, 16
      %v3500 = vpop.permute.xlu0 %3499
      %3501 = vrot.lane.b32.xlu0 %v3441, 16
      %v3502 = vpop.permute.xlu0 %3501
      %3505 = vrot.lane.b32.xlu0 %v3439, 112
      %v3506 = vpop.permute.xlu0 %3505
      %3507 = vrot.lane.b32.xlu0 %v3442, 112
      %v3508 = vpop.permute.xlu0 %3507
      %3511 = vrot.lane.b32.xlu0 %v3439, 96
      %v3512 = vpop.permute.xlu0 %3511
      %3513 = vrot.lane.b32.xlu0 %v3442, 96
      %v3514 = vpop.permute.xlu0 %3513
      %3517 = vrot.lane.b32.xlu0 %v3439, 80
      %v3518 = vpop.permute.xlu0 %3517
      %3519 = vrot.lane.b32.xlu0 %v3442, 80
      %v3520 = vpop.permute.xlu0 %3519
      %3523 = vrot.lane.b32.xlu0 %v3439, 64
      %v3524 = vpop.permute.xlu0 %3523
      %3525 = vrot.lane.b32.xlu0 %v3442, 64
      %v3526 = vpop.permute.xlu0 %3525
      %3529 = vrot.lane.b32.xlu0 %v3439, 48
      %v3530 = vpop.permute.xlu0 %3529
      %3531 = vrot.lane.b32.xlu0 %v3442, 48
      %v3532 = vpop.permute.xlu0 %3531
      %3535 = vrot.lane.b32.xlu0 %v3439, 32
      %v3536 = vpop.permute.xlu0 %3535
      %3537 = vrot.lane.b32.xlu0 %v3442, 32
      %v3538 = vpop.permute.xlu0 %3537
      %3541 = vrot.lane.b32.xlu0 %v3439, 16
      %v3542 = vpop.permute.xlu0 %3541
      %3543 = vrot.lane.b32.xlu0 %v3442, 16
      %v3544 = vpop.permute.xlu0 %3543
      %v3548 = vsel %vm1012, %v3437, 0
      %v3551 = vsel %vm1012, %v3440, 0
      %v3554 = vsel %vm1012, %v3438, 0
      %v3557 = vsel %vm1012, %v3441, 0
      %3559 = vmatprep.subr.bf16.mxu0 0
      %3560 = vmatpush1.bf16.xpose.msra.mxu0 %v3554
      %3561 = vmatprep.subr.bf16.mxu0 0
      %3562 = vmatpush1.bf16.xpose.msra.mxu0 %v3557
      %3563 = vmatprep.subr.bf16.mxu0 0
      %3564 = vmatpush1.bf16.xpose.msra.mxu0 0
      %3565 = vmatprep.subr.bf16.mxu0 0
      %3566 = vmatpush1.bf16.xpose.msra.mxu0 0
      %3567 = vmatprep.subr.bf16.mxu0 0
      %3568 = vmatpush1.bf16.xpose.msra.mxu0 0
      %3569 = vmatprep.subr.bf16.mxu0 0
      %3570 = vmatpush1.bf16.xpose.msra.mxu0 0
      %3571 = vmatprep.subr.bf16.mxu0 0
      %3572 = vmatpush1.bf16.xpose.msra.mxu0 0
      %3573 = vmatprep.subr.bf16.mxu0 0
      %3574 = vmatpush1.bf16.xpose.msra.mxu0 0
      %3575 = vmatprep.subr.bf16.mxu0 0
      %3576 = vmatpush1.bf16.xpose.msra.mxu0 0
      %3577 = vmatprep.subr.bf16.mxu0 0
      %3578 = vmatpush1.bf16.xpose.msra.mxu0 0
      %3579 = vmatprep.subr.bf16.mxu0 0
      %3580 = vmatpush1.bf16.xpose.msra.mxu0 0
      %3581 = vmatprep.subr.bf16.mxu0 0
      %3582 = vmatpush1.bf16.xpose.msra.mxu0 0
      %3583 = vmatprep.subr.bf16.mxu0 0
      %3584 = vmatpush1.bf16.xpose.msra.mxu0 0
      %3585 = vmatprep.subr.bf16.mxu0 0
      %3586 = vmatpush1.bf16.xpose.msra.mxu0 0
      %3587 = vmatprep.subr.bf16.mxu0 0
      %3588 = vmatpush1.bf16.xpose.msra.mxu0 0
      %3589 = vmatprep.subr.bf16.mxu0 0
      %3590 = vmatpush1.bf16.xpose.msra.mxu0 0
      %3591 = vmatprep.mubr.bf16.mxu0 0
      %3592 = vmatmul.mubr.bf16.gmra.mrb[0].mxu0 %v3548
      %v3593 = vpop.f32.mrb[0].mxu0
      %v3594 = vadd.f32 0.0, %v3593
      %v3595 = vpop.f32.mrb[0].mxu0
      %v3596 = vpop.f32.mrb[0].mxu0
      %v3597 = vadd.f32 0.0, %v3596
      %v3598 = vpop.f32.mrb[0].mxu0
      %3599 = vmatprep.mubr.bf16.mxu0 0
      %3600 = vmatmul.mubr.bf16.gmra.mrb[0].mxu0 %v3551
      %v3601 = vpop.f32.mrb[0].mxu0
      %v3602 = vadd.f32 0.0, %v3601
      %v3603 = vpop.f32.mrb[0].mxu0
      %v3604 = vpop.f32.mrb[0].mxu0
      %v3605 = vadd.f32 0.0, %v3604
      %v3606 = vpop.f32.mrb[0].mxu0
      %3607 = vdwg.mxu0
      %v3609 = vsel %vm1012, %v3446, 0
      %v3612 = vsel %vm1012, %v3448, 0
      %v3615 = vsel %vm1012, %v3476, 0
      %v3618 = vsel %vm1012, %v3478, 0
      %3620 = vmatprep.subr.bf16.mxu0 0
      %3621 = vmatpush1.bf16.xpose.msra.mxu0 %v3615
      %3622 = vmatprep.subr.bf16.mxu0 0
      %3623 = vmatpush1.bf16.xpose.msra.mxu0 %v3618
      %3624 = vmatprep.subr.bf16.mxu0 0
      %3625 = vmatpush1.bf16.xpose.msra.mxu0 0
      %3626 = vmatprep.subr.bf16.mxu0 0
      %3627 = vmatpush1.bf16.xpose.msra.mxu0 0
      %3628 = vmatprep.subr.bf16.mxu0 0
      %3629 = vmatpush1.bf16.xpose.msra.mxu0 0
      %3630 = vmatprep.subr.bf16.mxu0 0
      %3631 = vmatpush1.bf16.xpose.msra.mxu0 0
      %3632 = vmatprep.subr.bf16.mxu0 0
      %3633 = vmatpush1.bf16.xpose.msra.mxu0 0
      %3634 = vmatprep.subr.bf16.mxu0 0
      %3635 = vmatpush1.bf16.xpose.msra.mxu0 0
      %3636 = vmatprep.subr.bf16.mxu0 0
      %3637 = vmatpush1.bf16.xpose.msra.mxu0 0
      %3638 = vmatprep.subr.bf16.mxu0 0
      %3639 = vmatpush1.bf16.xpose.msra.mxu0 0
      %3640 = vmatprep.subr.bf16.mxu0 0
      %3641 = vmatpush1.bf16.xpose.msra.mxu0 0
      %3642 = vmatprep.subr.bf16.mxu0 0
      %3643 = vmatpush1.bf16.xpose.msra.mxu0 0
      %3644 = vmatprep.subr.bf16.mxu0 0
      %3645 = vmatpush1.bf16.xpose.msra.mxu0 0
      %3646 = vmatprep.subr.bf16.mxu0 0
      %3647 = vmatpush1.bf16.xpose.msra.mxu0 0
      %3648 = vmatprep.subr.bf16.mxu0 0
      %3649 = vmatpush1.bf16.xpose.msra.mxu0 0
      %3650 = vmatprep.subr.bf16.mxu0 0
      %3651 = vmatpush1.bf16.xpose.msra.mxu0 0
      %3652 = vmatprep.mubr.bf16.mxu0 0
      %3653 = vmatmul.mubr.bf16.gmra.mrb[0].mxu0 %v3609
      %v3654 = vpop.f32.mrb[0].mxu0
      %v3655 = vadd.f32 0.0, %v3654
      %v3656 = vpop.f32.mrb[0].mxu0
      %v3657 = vpop.f32.mrb[0].mxu0
      %v3658 = vadd.f32 0.0, %v3657
      %v3659 = vpop.f32.mrb[0].mxu0
      %3660 = vmatprep.mubr.bf16.mxu0 0
      %3661 = vmatmul.mubr.bf16.gmra.mrb[0].mxu0 %v3612
      %v3662 = vpop.f32.mrb[0].mxu0
      %v3663 = vadd.f32 0.0, %v3662
      %v3664 = vpop.f32.mrb[0].mxu0
      %v3665 = vpop.f32.mrb[0].mxu0
      %v3666 = vadd.f32 0.0, %v3665
      %v3667 = vpop.f32.mrb[0].mxu0
      %3668 = vdwg.mxu0
      %v3670 = vsel %vm1012, %v3450, 0
      %v3673 = vsel %vm1012, %v3452, 0
      %v3676 = vsel %vm1012, %v3480, 0
      %v3679 = vsel %vm1012, %v3482, 0
      %3681 = vmatprep.subr.bf16.mxu0 0
      %3682 = vmatpush1.bf16.xpose.msra.mxu0 %v3676
      %3683 = vmatprep.subr.bf16.mxu0 0
      %3684 = vmatpush1.bf16.xpose.msra.mxu0 %v3679
      %3685 = vmatprep.subr.bf16.mxu0 0
      %3686 = vmatpush1.bf16.xpose.msra.mxu0 0
      %3687 = vmatprep.subr.bf16.mxu0 0
      %3688 = vmatpush1.bf16.xpose.msra.mxu0 0
      %3689 = vmatprep.subr.bf16.mxu0 0
      %3690 = vmatpush1.bf16.xpose.msra.mxu0 0
      %3691 = vmatprep.subr.bf16.mxu0 0
      %3692 = vmatpush1.bf16.xpose.msra.mxu0 0
      %3693 = vmatprep.subr.bf16.mxu0 0
      %3694 = vmatpush1.bf16.xpose.msra.mxu0 0
      %3695 = vmatprep.subr.bf16.mxu0 0
      %3696 = vmatpush1.bf16.xpose.msra.mxu0 0
      %3697 = vmatprep.subr.bf16.mxu0 0
      %3698 = vmatpush1.bf16.xpose.msra.mxu0 0
      %3699 = vmatprep.subr.bf16.mxu0 0
      %3700 = vmatpush1.bf16.xpose.msra.mxu0 0
      %3701 = vmatprep.subr.bf16.mxu0 0
      %3702 = vmatpush1.bf16.xpose.msra.mxu0 0
      %3703 = vmatprep.subr.bf16.mxu0 0
      %3704 = vmatpush1.bf16.xpose.msra.mxu0 0
      %3705 = vmatprep.subr.bf16.mxu0 0
      %3706 = vmatpush1.bf16.xpose.msra.mxu0 0
      %3707 = vmatprep.subr.bf16.mxu0 0
      %3708 = vmatpush1.bf16.xpose.msra.mxu0 0
      %3709 = vmatprep.subr.bf16.mxu0 0
      %3710 = vmatpush1.bf16.xpose.msra.mxu0 0
      %3711 = vmatprep.subr.bf16.mxu0 0
      %3712 = vmatpush1.bf16.xpose.msra.mxu0 0
      %3713 = vmatprep.mubr.bf16.mxu0 0
      %3714 = vmatmul.mubr.bf16.gmra.mrb[0].mxu0 %v3670
      %v3715 = vpop.f32.mrb[0].mxu0
      %v3716 = vadd.f32 0.0, %v3715
      %v3717 = vpop.f32.mrb[0].mxu0
      %v3718 = vpop.f32.mrb[0].mxu0
      %v3719 = vadd.f32 0.0, %v3718
      %v3720 = vpop.f32.mrb[0].mxu0
      %3721 = vmatprep.mubr.bf16.mxu0 0
      %3722 = vmatmul.mubr.bf16.gmra.mrb[0].mxu0 %v3673
      %v3723 = vpop.f32.mrb[0].mxu0
      %v3724 = vadd.f32 0.0, %v3723
      %v3725 = vpop.f32.mrb[0].mxu0
      %v3726 = vpop.f32.mrb[0].mxu0
      %v3727 = vadd.f32 0.0, %v3726
      %v3728 = vpop.f32.mrb[0].mxu0
      %3729 = vdwg.mxu0
      %v3731 = vsel %vm1012, %v3454, 0
      %v3734 = vsel %vm1012, %v3456, 0
      %v3737 = vsel %vm1012, %v3484, 0
      %v3740 = vsel %vm1012, %v3486, 0
      %3742 = vmatprep.subr.bf16.mxu0 0
      %3743 = vmatpush1.bf16.xpose.msra.mxu0 %v3737
      %3744 = vmatprep.subr.bf16.mxu0 0
      %3745 = vmatpush1.bf16.xpose.msra.mxu0 %v3740
      %3746 = vmatprep.subr.bf16.mxu0 0
      %3747 = vmatpush1.bf16.xpose.msra.mxu0 0
      %3748 = vmatprep.subr.bf16.mxu0 0
      %3749 = vmatpush1.bf16.xpose.msra.mxu0 0
      %3750 = vmatprep.subr.bf16.mxu0 0
      %3751 = vmatpush1.bf16.xpose.msra.mxu0 0
      %3752 = vmatprep.subr.bf16.mxu0 0
      %3753 = vmatpush1.bf16.xpose.msra.mxu0 0
      %3754 = vmatprep.subr.bf16.mxu0 0
      %3755 = vmatpush1.bf16.xpose.msra.mxu0 0
      %3756 = vmatprep.subr.bf16.mxu0 0
      %3757 = vmatpush1.bf16.xpose.msra.mxu0 0
      %3758 = vmatprep.subr.bf16.mxu0 0
      %3759 = vmatpush1.bf16.xpose.msra.mxu0 0
      %3760 = vmatprep.subr.bf16.mxu0 0
      %3761 = vmatpush1.bf16.xpose.msra.mxu0 0
      %3762 = vmatprep.subr.bf16.mxu0 0
      %3763 = vmatpush1.bf16.xpose.msra.mxu0 0
      %3764 = vmatprep.subr.bf16.mxu0 0
      %3765 = vmatpush1.bf16.xpose.msra.mxu0 0
      %3766 = vmatprep.subr.bf16.mxu0 0
      %3767 = vmatpush1.bf16.xpose.msra.mxu0 0
      %3768 = vmatprep.subr.bf16.mxu0 0
      %3769 = vmatpush1.bf16.xpose.msra.mxu0 0
      %3770 = vmatprep.subr.bf16.mxu0 0
      %3771 = vmatpush1.bf16.xpose.msra.mxu0 0
      %3772 = vmatprep.subr.bf16.mxu0 0
      %3773 = vmatpush1.bf16.xpose.msra.mxu0 0
      %3774 = vmatprep.mubr.bf16.mxu0 0
      %3775 = vmatmul.mubr.bf16.gmra.mrb[0].mxu0 %v3731
      %v3776 = vpop.f32.mrb[0].mxu0
      %v3777 = vadd.f32 0.0, %v3776
      %v3778 = vpop.f32.mrb[0].mxu0
      %v3779 = vpop.f32.mrb[0].mxu0
      %v3780 = vadd.f32 0.0, %v3779
      %v3781 = vpop.f32.mrb[0].mxu0
      %3782 = vmatprep.mubr.bf16.mxu0 0
      %3783 = vmatmul.mubr.bf16.gmra.mrb[0].mxu0 %v3734
      %v3784 = vpop.f32.mrb[0].mxu0
      %v3785 = vadd.f32 0.0, %v3784
      %v3786 = vpop.f32.mrb[0].mxu0
      %v3787 = vpop.f32.mrb[0].mxu0
      %v3788 = vadd.f32 0.0, %v3787
      %v3789 = vpop.f32.mrb[0].mxu0
      %3790 = vdwg.mxu0
      %v3792 = vsel %vm1012, %v3458, 0
      %v3795 = vsel %vm1012, %v3460, 0
      %v3798 = vsel %vm1012, %v3488, 0
      %v3801 = vsel %vm1012, %v3490, 0
      %3803 = vmatprep.subr.bf16.mxu0 0
      %3804 = vmatpush1.bf16.xpose.msra.mxu0 %v3798
      %3805 = vmatprep.subr.bf16.mxu0 0
      %3806 = vmatpush1.bf16.xpose.msra.mxu0 %v3801
      %3807 = vmatprep.subr.bf16.mxu0 0
      %3808 = vmatpush1.bf16.xpose.msra.mxu0 0
      %3809 = vmatprep.subr.bf16.mxu0 0
      %3810 = vmatpush1.bf16.xpose.msra.mxu0 0
      %3811 = vmatprep.subr.bf16.mxu0 0
      %3812 = vmatpush1.bf16.xpose.msra.mxu0 0
      %3813 = vmatprep.subr.bf16.mxu0 0
      %3814 = vmatpush1.bf16.xpose.msra.mxu0 0
      %3815 = vmatprep.subr.bf16.mxu0 0
      %3816 = vmatpush1.bf16.xpose.msra.mxu0 0
      %3817 = vmatprep.subr.bf16.mxu0 0
      %3818 = vmatpush1.bf16.xpose.msra.mxu0 0
      %3819 = vmatprep.subr.bf16.mxu0 0
      %3820 = vmatpush1.bf16.xpose.msra.mxu0 0
      %3821 = vmatprep.subr.bf16.mxu0 0
      %3822 = vmatpush1.bf16.xpose.msra.mxu0 0
      %3823 = vmatprep.subr.bf16.mxu0 0
      %3824 = vmatpush1.bf16.xpose.msra.mxu0 0
      %3825 = vmatprep.subr.bf16.mxu0 0
      %3826 = vmatpush1.bf16.xpose.msra.mxu0 0
      %3827 = vmatprep.subr.bf16.mxu0 0
      %3828 = vmatpush1.bf16.xpose.msra.mxu0 0
      %3829 = vmatprep.subr.bf16.mxu0 0
      %3830 = vmatpush1.bf16.xpose.msra.mxu0 0
      %3831 = vmatprep.subr.bf16.mxu0 0
      %3832 = vmatpush1.bf16.xpose.msra.mxu0 0
      %3833 = vmatprep.subr.bf16.mxu0 0
      %3834 = vmatpush1.bf16.xpose.msra.mxu0 0
      %3835 = vmatprep.mubr.bf16.mxu0 0
      %3836 = vmatmul.mubr.bf16.gmra.mrb[0].mxu0 %v3792
      %v3837 = vpop.f32.mrb[0].mxu0
      %v3838 = vadd.f32 0.0, %v3837
      %v3839 = vpop.f32.mrb[0].mxu0
      %v3840 = vpop.f32.mrb[0].mxu0
      %v3841 = vadd.f32 0.0, %v3840
      %v3842 = vpop.f32.mrb[0].mxu0
      %3843 = vmatprep.mubr.bf16.mxu0 0
      %3844 = vmatmul.mubr.bf16.gmra.mrb[0].mxu0 %v3795
      %v3845 = vpop.f32.mrb[0].mxu0
      %v3846 = vadd.f32 0.0, %v3845
      %v3847 = vpop.f32.mrb[0].mxu0
      %v3848 = vpop.f32.mrb[0].mxu0
      %v3849 = vadd.f32 0.0, %v3848
      %v3850 = vpop.f32.mrb[0].mxu0
      %3851 = vdwg.mxu0
      %v3853 = vsel %vm1012, %v3462, 0
      %v3856 = vsel %vm1012, %v3464, 0
      %v3859 = vsel %vm1012, %v3492, 0
      %v3862 = vsel %vm1012, %v3494, 0
      %3864 = vmatprep.subr.bf16.mxu0 0
      %3865 = vmatpush1.bf16.xpose.msra.mxu0 %v3859
      %3866 = vmatprep.subr.bf16.mxu0 0
      %3867 = vmatpush1.bf16.xpose.msra.mxu0 %v3862
      %3868 = vmatprep.subr.bf16.mxu0 0
      %3869 = vmatpush1.bf16.xpose.msra.mxu0 0
      %3870 = vmatprep.subr.bf16.mxu0 0
      %3871 = vmatpush1.bf16.xpose.msra.mxu0 0
      %3872 = vmatprep.subr.bf16.mxu0 0
      %3873 = vmatpush1.bf16.xpose.msra.mxu0 0
      %3874 = vmatprep.subr.bf16.mxu0 0
      %3875 = vmatpush1.bf16.xpose.msra.mxu0 0
      %3876 = vmatprep.subr.bf16.mxu0 0
      %3877 = vmatpush1.bf16.xpose.msra.mxu0 0
      %3878 = vmatprep.subr.bf16.mxu0 0
      %3879 = vmatpush1.bf16.xpose.msra.mxu0 0
      %3880 = vmatprep.subr.bf16.mxu0 0
      %3881 = vmatpush1.bf16.xpose.msra.mxu0 0
      %3882 = vmatprep.subr.bf16.mxu0 0
      %3883 = vmatpush1.bf16.xpose.msra.mxu0 0
      %3884 = vmatprep.subr.bf16.mxu0 0
      %3885 = vmatpush1.bf16.xpose.msra.mxu0 0
      %3886 = vmatprep.subr.bf16.mxu0 0
      %3887 = vmatpush1.bf16.xpose.msra.mxu0 0
      %3888 = vmatprep.subr.bf16.mxu0 0
      %3889 = vmatpush1.bf16.xpose.msra.mxu0 0
      %3890 = vmatprep.subr.bf16.mxu0 0
      %3891 = vmatpush1.bf16.xpose.msra.mxu0 0
      %3892 = vmatprep.subr.bf16.mxu0 0
      %3893 = vmatpush1.bf16.xpose.msra.mxu0 0
      %3894 = vmatprep.subr.bf16.mxu0 0
      %3895 = vmatpush1.bf16.xpose.msra.mxu0 0
      %3896 = vmatprep.mubr.bf16.mxu0 0
      %3897 = vmatmul.mubr.bf16.gmra.mrb[0].mxu0 %v3853
      %v3898 = vpop.f32.mrb[0].mxu0
      %v3899 = vadd.f32 0.0, %v3898
      %v3900 = vpop.f32.mrb[0].mxu0
      %v3901 = vpop.f32.mrb[0].mxu0
      %v3902 = vadd.f32 0.0, %v3901
      %v3903 = vpop.f32.mrb[0].mxu0
      %3904 = vmatprep.mubr.bf16.mxu0 0
      %3905 = vmatmul.mubr.bf16.gmra.mrb[0].mxu0 %v3856
      %v3906 = vpop.f32.mrb[0].mxu0
      %v3907 = vadd.f32 0.0, %v3906
      %v3908 = vpop.f32.mrb[0].mxu0
      %v3909 = vpop.f32.mrb[0].mxu0
      %v3910 = vadd.f32 0.0, %v3909
      %v3911 = vpop.f32.mrb[0].mxu0
      %3912 = vdwg.mxu0
      %v3914 = vsel %vm1012, %v3466, 0
      %v3917 = vsel %vm1012, %v3468, 0
      %v3920 = vsel %vm1012, %v3496, 0
      %v3923 = vsel %vm1012, %v3498, 0
      %3925 = vmatprep.subr.bf16.mxu0 0
      %3926 = vmatpush1.bf16.xpose.msra.mxu0 %v3920
      %3927 = vmatprep.subr.bf16.mxu0 0
      %3928 = vmatpush1.bf16.xpose.msra.mxu0 %v3923
      %3929 = vmatprep.subr.bf16.mxu0 0
      %3930 = vmatpush1.bf16.xpose.msra.mxu0 0
      %3931 = vmatprep.subr.bf16.mxu0 0
      %3932 = vmatpush1.bf16.xpose.msra.mxu0 0
      %3933 = vmatprep.subr.bf16.mxu0 0
      %3934 = vmatpush1.bf16.xpose.msra.mxu0 0
      %3935 = vmatprep.subr.bf16.mxu0 0
      %3936 = vmatpush1.bf16.xpose.msra.mxu0 0
      %3937 = vmatprep.subr.bf16.mxu0 0
      %3938 = vmatpush1.bf16.xpose.msra.mxu0 0
      %3939 = vmatprep.subr.bf16.mxu0 0
      %3940 = vmatpush1.bf16.xpose.msra.mxu0 0
      %3941 = vmatprep.subr.bf16.mxu0 0
      %3942 = vmatpush1.bf16.xpose.msra.mxu0 0
      %3943 = vmatprep.subr.bf16.mxu0 0
      %3944 = vmatpush1.bf16.xpose.msra.mxu0 0
      %3945 = vmatprep.subr.bf16.mxu0 0
      %3946 = vmatpush1.bf16.xpose.msra.mxu0 0
      %3947 = vmatprep.subr.bf16.mxu0 0
      %3948 = vmatpush1.bf16.xpose.msra.mxu0 0
      %3949 = vmatprep.subr.bf16.mxu0 0
      %3950 = vmatpush1.bf16.xpose.msra.mxu0 0
      %3951 = vmatprep.subr.bf16.mxu0 0
      %3952 = vmatpush1.bf16.xpose.msra.mxu0 0
      %3953 = vmatprep.subr.bf16.mxu0 0
      %3954 = vmatpush1.bf16.xpose.msra.mxu0 0
      %3955 = vmatprep.subr.bf16.mxu0 0
      %3956 = vmatpush1.bf16.xpose.msra.mxu0 0
      %3957 = vmatprep.mubr.bf16.mxu0 0
      %3958 = vmatmul.mubr.bf16.gmra.mrb[0].mxu0 %v3914
      %v3959 = vpop.f32.mrb[0].mxu0
      %v3960 = vadd.f32 0.0, %v3959
      %v3961 = vpop.f32.mrb[0].mxu0
      %v3962 = vpop.f32.mrb[0].mxu0
      %v3963 = vadd.f32 0.0, %v3962
      %v3964 = vpop.f32.mrb[0].mxu0
      %3965 = vmatprep.mubr.bf16.mxu0 0
      %3966 = vmatmul.mubr.bf16.gmra.mrb[0].mxu0 %v3917
      %v3967 = vpop.f32.mrb[0].mxu0
      %v3968 = vadd.f32 0.0, %v3967
      %v3969 = vpop.f32.mrb[0].mxu0
      %v3970 = vpop.f32.mrb[0].mxu0
      %v3971 = vadd.f32 0.0, %v3970
      %v3972 = vpop.f32.mrb[0].mxu0
      %3973 = vdwg.mxu0
      %v3975 = vsel %vm1012, %v3470, 0
      %v3978 = vsel %vm1012, %v3472, 0
      %v3981 = vsel %vm1012, %v3500, 0
      %v3984 = vsel %vm1012, %v3502, 0
      %3986 = vmatprep.subr.bf16.mxu0 0
      %3987 = vmatpush1.bf16.xpose.msra.mxu0 %v3981
      %3988 = vmatprep.subr.bf16.mxu0 0
      %3989 = vmatpush1.bf16.xpose.msra.mxu0 %v3984
      %3990 = vmatprep.subr.bf16.mxu0 0
      %3991 = vmatpush1.bf16.xpose.msra.mxu0 0
      %3992 = vmatprep.subr.bf16.mxu0 0
      %3993 = vmatpush1.bf16.xpose.msra.mxu0 0
      %3994 = vmatprep.subr.bf16.mxu0 0
      %3995 = vmatpush1.bf16.xpose.msra.mxu0 0
      %3996 = vmatprep.subr.bf16.mxu0 0
      %3997 = vmatpush1.bf16.xpose.msra.mxu0 0
      %3998 = vmatprep.subr.bf16.mxu0 0
      %3999 = vmatpush1.bf16.xpose.msra.mxu0 0
      %4000 = vmatprep.subr.bf16.mxu0 0
      %4001 = vmatpush1.bf16.xpose.msra.mxu0 0
      %4002 = vmatprep.subr.bf16.mxu0 0
      %4003 = vmatpush1.bf16.xpose.msra.mxu0 0
      %4004 = vmatprep.subr.bf16.mxu0 0
      %4005 = vmatpush1.bf16.xpose.msra.mxu0 0
      %4006 = vmatprep.subr.bf16.mxu0 0
      %4007 = vmatpush1.bf16.xpose.msra.mxu0 0
      %4008 = vmatprep.subr.bf16.mxu0 0
      %4009 = vmatpush1.bf16.xpose.msra.mxu0 0
      %4010 = vmatprep.subr.bf16.mxu0 0
      %4011 = vmatpush1.bf16.xpose.msra.mxu0 0
      %4012 = vmatprep.subr.bf16.mxu0 0
      %4013 = vmatpush1.bf16.xpose.msra.mxu0 0
      %4014 = vmatprep.subr.bf16.mxu0 0
      %4015 = vmatpush1.bf16.xpose.msra.mxu0 0
      %4016 = vmatprep.subr.bf16.mxu0 0
      %4017 = vmatpush1.bf16.xpose.msra.mxu0 0
      %4018 = vmatprep.mubr.bf16.mxu0 0
      %4019 = vmatmul.mubr.bf16.gmra.mrb[0].mxu0 %v3975
      %v4020 = vpop.f32.mrb[0].mxu0
      %v4021 = vadd.f32 0.0, %v4020
      %v4022 = vpop.f32.mrb[0].mxu0
      %v4023 = vpop.f32.mrb[0].mxu0
      %v4024 = vadd.f32 0.0, %v4023
      %v4025 = vpop.f32.mrb[0].mxu0
      %4026 = vmatprep.mubr.bf16.mxu0 0
      %4027 = vmatmul.mubr.bf16.gmra.mrb[0].mxu0 %v3978
      %v4028 = vpop.f32.mrb[0].mxu0
      %v4029 = vadd.f32 0.0, %v4028
      %v4030 = vpop.f32.mrb[0].mxu0
      %v4031 = vpop.f32.mrb[0].mxu0
      %v4032 = vadd.f32 0.0, %v4031
      %v4033 = vpop.f32.mrb[0].mxu0
      %4034 = vdwg.mxu0
      %v4035 = vmul.f32 %v3594, 0.25
      %v4036 = vmul.f32 %v3597, 0.25
      %v4037 = vmul.f32 %v3602, 0.25
      %v4038 = vmul.f32 %v3605, 0.25
      %v4039 = vmul.f32 %v3655, 0.25
      %v4040 = vmul.f32 %v3658, 0.25
      %v4041 = vmul.f32 %v3663, 0.25
      %v4042 = vmul.f32 %v3666, 0.25
      %v4043 = vmul.f32 %v3716, 0.25
      %v4044 = vmul.f32 %v3719, 0.25
      %v4045 = vmul.f32 %v3724, 0.25
      %v4046 = vmul.f32 %v3727, 0.25
      %v4047 = vmul.f32 %v3777, 0.25
      %v4048 = vmul.f32 %v3780, 0.25
      %v4049 = vmul.f32 %v3785, 0.25
      %v4050 = vmul.f32 %v3788, 0.25
      %v4051 = vmul.f32 %v3838, 0.25
      %v4052 = vmul.f32 %v3841, 0.25
      %v4053 = vmul.f32 %v3846, 0.25
      %v4054 = vmul.f32 %v3849, 0.25
      %v4055 = vmul.f32 %v3899, 0.25
      %v4056 = vmul.f32 %v3902, 0.25
      %v4057 = vmul.f32 %v3907, 0.25
      %v4058 = vmul.f32 %v3910, 0.25
      %v4059 = vmul.f32 %v3960, 0.25
      %v4060 = vmul.f32 %v3963, 0.25
      %v4061 = vmul.f32 %v3968, 0.25
      %v4062 = vmul.f32 %v3971, 0.25
      %v4063 = vmul.f32 %v4021, 0.25
      %v4064 = vmul.f32 %v4024, 0.25
      %v4065 = vmul.f32 %v4029, 0.25
      %v4066 = vmul.f32 %v4032, 0.25
      %v4067 = vadd.f32 %v4035, %v570
      %v4068 = vadd.f32 %v4036, %v570
      %v4069 = vadd.f32 %v4037, %v570
      %v4070 = vadd.f32 %v4038, %v570
      %v4071 = vadd.f32 %v4039, %v570
      %v4072 = vadd.f32 %v4040, %v570
      %v4073 = vadd.f32 %v4041, %v570
      %v4074 = vadd.f32 %v4042, %v570
      %v4075 = vadd.f32 %v4043, %v570
      %v4076 = vadd.f32 %v4044, %v570
      %v4077 = vadd.f32 %v4045, %v570
      %v4078 = vadd.f32 %v4046, %v570
      %v4079 = vadd.f32 %v4047, %v570
      %v4080 = vadd.f32 %v4048, %v570
      %v4081 = vadd.f32 %v4049, %v570
      %v4082 = vadd.f32 %v4050, %v570
      %v4083 = vadd.f32 %v4051, %v570
      %v4084 = vadd.f32 %v4052, %v570
      %v4085 = vadd.f32 %v4053, %v570
      %v4086 = vadd.f32 %v4054, %v570
      %v4087 = vadd.f32 %v4055, %v570
      %v4088 = vadd.f32 %v4056, %v570
      %v4089 = vadd.f32 %v4057, %v570
      %v4090 = vadd.f32 %v4058, %v570
      %v4091 = vadd.f32 %v4059, %v570
      %v4092 = vadd.f32 %v4060, %v570
      %v4093 = vadd.f32 %v4061, %v570
      %v4094 = vadd.f32 %v4062, %v570
      %v4095 = vadd.f32 %v4063, %v570
      %v4096 = vadd.f32 %v4064, %v570
      %v4097 = vadd.f32 %v4065, %v570
      %v4098 = vadd.f32 %v4066, %v570
      %v4099 = vsel %vm1565, %v4067, -inf
      %4100 = vmax.xlane.f32.xlu0 %v4099
      %v4101 = vpop.xlane.xlu0 %4100
      %v4102 = vsel %vm1565, %v4068, -inf
      %4103 = vmax.xlane.f32.xlu0 %v4102
      %v4104 = vpop.xlane.xlu0 %4103
      %v4105 = vsel %vm1565, %v4069, -inf
      %4106 = vmax.xlane.f32.xlu0 %v4105
      %v4107 = vpop.xlane.xlu0 %4106
      %v4108 = vsel %vm1565, %v4070, -inf
      %4109 = vmax.xlane.f32.xlu0 %v4108
      %v4110 = vpop.xlane.xlu0 %4109
      %v4111 = vsel %vm1565, %v4071, -inf
      %4112 = vmax.xlane.f32.xlu0 %v4111
      %v4113 = vpop.xlane.xlu0 %4112
      %v4114 = vsel %vm1565, %v4072, -inf
      %4115 = vmax.xlane.f32.xlu0 %v4114
      %v4116 = vpop.xlane.xlu0 %4115
      %v4117 = vsel %vm1565, %v4073, -inf
      %4118 = vmax.xlane.f32.xlu0 %v4117
      %v4119 = vpop.xlane.xlu0 %4118
      %v4120 = vsel %vm1565, %v4074, -inf
      %4121 = vmax.xlane.f32.xlu0 %v4120
      %v4122 = vpop.xlane.xlu0 %4121
      %v4123 = vsel %vm1565, %v4075, -inf
      %4124 = vmax.xlane.f32.xlu0 %v4123
      %v4125 = vpop.xlane.xlu0 %4124
      %v4126 = vsel %vm1565, %v4076, -inf
      %4127 = vmax.xlane.f32.xlu0 %v4126
      %v4128 = vpop.xlane.xlu0 %4127
      %v4129 = vsel %vm1565, %v4077, -inf
      %4130 = vmax.xlane.f32.xlu0 %v4129
      %v4131 = vpop.xlane.xlu0 %4130
      %v4132 = vsel %vm1565, %v4078, -inf
      %4133 = vmax.xlane.f32.xlu0 %v4132
      %v4134 = vpop.xlane.xlu0 %4133
      %v4135 = vsel %vm1565, %v4079, -inf
      %4136 = vmax.xlane.f32.xlu0 %v4135
      %v4137 = vpop.xlane.xlu0 %4136
      %v4138 = vsel %vm1565, %v4080, -inf
      %4139 = vmax.xlane.f32.xlu0 %v4138
      %v4140 = vpop.xlane.xlu0 %4139
      %v4141 = vsel %vm1565, %v4081, -inf
      %4142 = vmax.xlane.f32.xlu0 %v4141
      %v4143 = vpop.xlane.xlu0 %4142
      %v4144 = vsel %vm1565, %v4082, -inf
      %4145 = vmax.xlane.f32.xlu0 %v4144
      %v4146 = vpop.xlane.xlu0 %4145
      %v4147 = vsel %vm1565, %v4083, -inf
      %4148 = vmax.xlane.f32.xlu0 %v4147
      %v4149 = vpop.xlane.xlu0 %4148
      %v4150 = vsel %vm1565, %v4084, -inf
      %4151 = vmax.xlane.f32.xlu0 %v4150
      %v4152 = vpop.xlane.xlu0 %4151
      %v4153 = vsel %vm1565, %v4085, -inf
      %4154 = vmax.xlane.f32.xlu0 %v4153
      %v4155 = vpop.xlane.xlu0 %4154
      %v4156 = vsel %vm1565, %v4086, -inf
      %4157 = vmax.xlane.f32.xlu0 %v4156
      %v4158 = vpop.xlane.xlu0 %4157
      %v4159 = vsel %vm1565, %v4087, -inf
      %4160 = vmax.xlane.f32.xlu0 %v4159
      %v4161 = vpop.xlane.xlu0 %4160
      %v4162 = vsel %vm1565, %v4088, -inf
      %4163 = vmax.xlane.f32.xlu0 %v4162
      %v4164 = vpop.xlane.xlu0 %4163
      %v4165 = vsel %vm1565, %v4089, -inf
      %4166 = vmax.xlane.f32.xlu0 %v4165
      %v4167 = vpop.xlane.xlu0 %4166
      %v4168 = vsel %vm1565, %v4090, -inf
      %4169 = vmax.xlane.f32.xlu0 %v4168
      %v4170 = vpop.xlane.xlu0 %4169
      %v4171 = vsel %vm1565, %v4091, -inf
      %4172 = vmax.xlane.f32.xlu0 %v4171
      %v4173 = vpop.xlane.xlu0 %4172
      %v4174 = vsel %vm1565, %v4092, -inf
      %4175 = vmax.xlane.f32.xlu0 %v4174
      %v4176 = vpop.xlane.xlu0 %4175
      %v4177 = vsel %vm1565, %v4093, -inf
      %4178 = vmax.xlane.f32.xlu0 %v4177
      %v4179 = vpop.xlane.xlu0 %4178
      %v4180 = vsel %vm1565, %v4094, -inf
      %4181 = vmax.xlane.f32.xlu0 %v4180
      %v4182 = vpop.xlane.xlu0 %4181
      %v4183 = vsel %vm1565, %v4095, -inf
      %4184 = vmax.xlane.f32.xlu0 %v4183
      %v4185 = vpop.xlane.xlu0 %4184
      %v4186 = vsel %vm1565, %v4096, -inf
      %4187 = vmax.xlane.f32.xlu0 %v4186
      %v4188 = vpop.xlane.xlu0 %4187
      %v4189 = vsel %vm1565, %v4097, -inf
      %4190 = vmax.xlane.f32.xlu0 %v4189
      %v4191 = vpop.xlane.xlu0 %4190
      %v4192 = vsel %vm1565, %v4098, -inf
      %4193 = vmax.xlane.f32.xlu0 %v4192
      %v4194 = vpop.xlane.xlu0 %4193
      %v4195 = vsub.f32 %v4067, %v4101
      %v4196 = vsub.f32 %v4068, %v4104
      %v4197 = vsub.f32 %v4069, %v4107
      %v4198 = vsub.f32 %v4070, %v4110
      %v4199 = vsub.f32 %v4071, %v4113
      %v4200 = vsub.f32 %v4072, %v4116
      %v4201 = vsub.f32 %v4073, %v4119
      %v4202 = vsub.f32 %v4074, %v4122
      %v4203 = vsub.f32 %v4075, %v4125
      %v4204 = vsub.f32 %v4076, %v4128
      %v4205 = vsub.f32 %v4077, %v4131
      %v4206 = vsub.f32 %v4078, %v4134
      %v4207 = vsub.f32 %v4079, %v4137
      %v4208 = vsub.f32 %v4080, %v4140
      %v4209 = vsub.f32 %v4081, %v4143
      %v4210 = vsub.f32 %v4082, %v4146
      %v4211 = vsub.f32 %v4083, %v4149
      %v4212 = vsub.f32 %v4084, %v4152
      %v4213 = vsub.f32 %v4085, %v4155
      %v4214 = vsub.f32 %v4086, %v4158
      %v4215 = vsub.f32 %v4087, %v4161
      %v4216 = vsub.f32 %v4088, %v4164
      %v4217 = vsub.f32 %v4089, %v4167
      %v4218 = vsub.f32 %v4090, %v4170
      %v4219 = vsub.f32 %v4091, %v4173
      %v4220 = vsub.f32 %v4092, %v4176
      %v4221 = vsub.f32 %v4093, %v4179
      %v4222 = vsub.f32 %v4094, %v4182
      %v4223 = vsub.f32 %v4095, %v4185
      %v4224 = vsub.f32 %v4096, %v4188
      %v4225 = vsub.f32 %v4097, %v4191
      %v4226 = vsub.f32 %v4098, %v4194
      %v4227 = vmul.f32 %v4195, 1.442695
      %v4228 = vpow.pop %v4227
      %v4229 = vmul.f32 %v4196, 1.442695
      %v4230 = vpow.pop %v4229
      %v4231 = vmul.f32 %v4197, 1.442695
      %v4232 = vpow.pop %v4231
      %v4233 = vmul.f32 %v4198, 1.442695
      %v4234 = vpow.pop %v4233
      %v4235 = vmul.f32 %v4199, 1.442695
      %v4236 = vpow.pop %v4235
      %v4237 = vmul.f32 %v4200, 1.442695
      %v4238 = vpow.pop %v4237
      %v4239 = vmul.f32 %v4201, 1.442695
      %v4240 = vpow.pop %v4239
      %v4241 = vmul.f32 %v4202, 1.442695
      %v4242 = vpow.pop %v4241
      %v4243 = vmul.f32 %v4203, 1.442695
      %v4244 = vpow.pop %v4243
      %v4245 = vmul.f32 %v4204, 1.442695
      %v4246 = vpow.pop %v4245
      %v4247 = vmul.f32 %v4205, 1.442695
      %v4248 = vpow.pop %v4247
      %v4249 = vmul.f32 %v4206, 1.442695
      %v4250 = vpow.pop %v4249
      %v4251 = vmul.f32 %v4207, 1.442695
      %v4252 = vpow.pop %v4251
      %v4253 = vmul.f32 %v4208, 1.442695
      %v4254 = vpow.pop %v4253
      %v4255 = vmul.f32 %v4209, 1.442695
      %v4256 = vpow.pop %v4255
      %v4257 = vmul.f32 %v4210, 1.442695
      %v4258 = vpow.pop %v4257
      %v4259 = vmul.f32 %v4211, 1.442695
      %v4260 = vpow.pop %v4259
      %v4261 = vmul.f32 %v4212, 1.442695
      %v4262 = vpow.pop %v4261
      %v4263 = vmul.f32 %v4213, 1.442695
      %v4264 = vpow.pop %v4263
      %v4265 = vmul.f32 %v4214, 1.442695
      %v4266 = vpow.pop %v4265
      %v4267 = vmul.f32 %v4215, 1.442695
      %v4268 = vpow.pop %v4267
      %v4269 = vmul.f32 %v4216, 1.442695
      %v4270 = vpow.pop %v4269
      %v4271 = vmul.f32 %v4217, 1.442695
      %v4272 = vpow.pop %v4271
      %v4273 = vmul.f32 %v4218, 1.442695
      %v4274 = vpow.pop %v4273
      %v4275 = vmul.f32 %v4219, 1.442695
      %v4276 = vpow.pop %v4275
      %v4277 = vmul.f32 %v4220, 1.442695
      %v4278 = vpow.pop %v4277
      %v4279 = vmul.f32 %v4221, 1.442695
      %v4280 = vpow.pop %v4279
      %v4281 = vmul.f32 %v4222, 1.442695
      %v4282 = vpow.pop %v4281
      %v4283 = vmul.f32 %v4223, 1.442695
      %v4284 = vpow.pop %v4283
      %v4285 = vmul.f32 %v4224, 1.442695
      %v4286 = vpow.pop %v4285
      %v4287 = vmul.f32 %v4225, 1.442695
      %v4288 = vpow.pop %v4287
      %v4289 = vmul.f32 %v4226, 1.442695
      %v4290 = vpow.pop %v4289
      %v4291 = vsel %vm1565, %v4228, 0.0
      %4292 = vadd.xlane.f32.xlu0 %v4291
      %v4293 = vpop.xlane.xlu0 %4292
      %v4294 = vsel %vm1565, %v4230, 0.0
      %4295 = vadd.xlane.f32.xlu0 %v4294
      %v4296 = vpop.xlane.xlu0 %4295
      %v4297 = vsel %vm1565, %v4232, 0.0
      %4298 = vadd.xlane.f32.xlu0 %v4297
      %v4299 = vpop.xlane.xlu0 %4298
      %v4300 = vsel %vm1565, %v4234, 0.0
      %4301 = vadd.xlane.f32.xlu0 %v4300
      %v4302 = vpop.xlane.xlu0 %4301
      %v4303 = vsel %vm1565, %v4236, 0.0
      %4304 = vadd.xlane.f32.xlu0 %v4303
      %v4305 = vpop.xlane.xlu0 %4304
      %v4306 = vsel %vm1565, %v4238, 0.0
      %4307 = vadd.xlane.f32.xlu0 %v4306
      %v4308 = vpop.xlane.xlu0 %4307
      %v4309 = vsel %vm1565, %v4240, 0.0
      %4310 = vadd.xlane.f32.xlu0 %v4309
      %v4311 = vpop.xlane.xlu0 %4310
      %v4312 = vsel %vm1565, %v4242, 0.0
      %4313 = vadd.xlane.f32.xlu0 %v4312
      %v4314 = vpop.xlane.xlu0 %4313
      %v4315 = vsel %vm1565, %v4244, 0.0
      %4316 = vadd.xlane.f32.xlu0 %v4315
      %v4317 = vpop.xlane.xlu0 %4316
      %v4318 = vsel %vm1565, %v4246, 0.0
      %4319 = vadd.xlane.f32.xlu0 %v4318
      %v4320 = vpop.xlane.xlu0 %4319
      %v4321 = vsel %vm1565, %v4248, 0.0
      %4322 = vadd.xlane.f32.xlu0 %v4321
      %v4323 = vpop.xlane.xlu0 %4322
      %v4324 = vsel %vm1565, %v4250, 0.0
      %4325 = vadd.xlane.f32.xlu0 %v4324
      %v4326 = vpop.xlane.xlu0 %4325
      %v4327 = vsel %vm1565, %v4252, 0.0
      %4328 = vadd.xlane.f32.xlu0 %v4327
      %v4329 = vpop.xlane.xlu0 %4328
      %v4330 = vsel %vm1565, %v4254, 0.0
      %4331 = vadd.xlane.f32.xlu0 %v4330
      %v4332 = vpop.xlane.xlu0 %4331
      %v4333 = vsel %vm1565, %v4256, 0.0
      %4334 = vadd.xlane.f32.xlu0 %v4333
      %v4335 = vpop.xlane.xlu0 %4334
      %v4336 = vsel %vm1565, %v4258, 0.0
      %4337 = vadd.xlane.f32.xlu0 %v4336
      %v4338 = vpop.xlane.xlu0 %4337
      %v4339 = vsel %vm1565, %v4260, 0.0
      %4340 = vadd.xlane.f32.xlu0 %v4339
      %v4341 = vpop.xlane.xlu0 %4340
      %v4342 = vsel %vm1565, %v4262, 0.0
      %4343 = vadd.xlane.f32.xlu0 %v4342
      %v4344 = vpop.xlane.xlu0 %4343
      %v4345 = vsel %vm1565, %v4264, 0.0
      %4346 = vadd.xlane.f32.xlu0 %v4345
      %v4347 = vpop.xlane.xlu0 %4346
      %v4348 = vsel %vm1565, %v4266, 0.0
      %4349 = vadd.xlane.f32.xlu0 %v4348
      %v4350 = vpop.xlane.xlu0 %4349
      %v4351 = vsel %vm1565, %v4268, 0.0
      %4352 = vadd.xlane.f32.xlu0 %v4351
      %v4353 = vpop.xlane.xlu0 %4352
      %v4354 = vsel %vm1565, %v4270, 0.0
      %4355 = vadd.xlane.f32.xlu0 %v4354
      %v4356 = vpop.xlane.xlu0 %4355
      %v4357 = vsel %vm1565, %v4272, 0.0
      %4358 = vadd.xlane.f32.xlu0 %v4357
      %v4359 = vpop.xlane.xlu0 %4358
      %v4360 = vsel %vm1565, %v4274, 0.0
      %4361 = vadd.xlane.f32.xlu0 %v4360
      %v4362 = vpop.xlane.xlu0 %4361
      %v4363 = vsel %vm1565, %v4276, 0.0
      %4364 = vadd.xlane.f32.xlu0 %v4363
      %v4365 = vpop.xlane.xlu0 %4364
      %v4366 = vsel %vm1565, %v4278, 0.0
      %4367 = vadd.xlane.f32.xlu0 %v4366
      %v4368 = vpop.xlane.xlu0 %4367
      %v4369 = vsel %vm1565, %v4280, 0.0
      %4370 = vadd.xlane.f32.xlu0 %v4369
      %v4371 = vpop.xlane.xlu0 %4370
      %v4372 = vsel %vm1565, %v4282, 0.0
      %4373 = vadd.xlane.f32.xlu0 %v4372
      %v4374 = vpop.xlane.xlu0 %4373
      %v4375 = vsel %vm1565, %v4284, 0.0
      %4376 = vadd.xlane.f32.xlu0 %v4375
      %v4377 = vpop.xlane.xlu0 %4376
      %v4378 = vsel %vm1565, %v4286, 0.0
      %4379 = vadd.xlane.f32.xlu0 %v4378
      %v4380 = vpop.xlane.xlu0 %4379
      %v4381 = vsel %vm1565, %v4288, 0.0
      %4382 = vadd.xlane.f32.xlu0 %v4381
      %v4383 = vpop.xlane.xlu0 %4382
      %v4384 = vsel %vm1565, %v4290, 0.0
      %4385 = vadd.xlane.f32.xlu0 %v4384
      %v4386 = vpop.xlane.xlu0 %4385
      %v4387 = vrcp.pop %v4293
      %v4388 = vrcp.pop %v4296
      %v4389 = vrcp.pop %v4299
      %v4390 = vrcp.pop %v4302
      %v4391 = vrcp.pop %v4305
      %v4392 = vrcp.pop %v4308
      %v4393 = vrcp.pop %v4311
      %v4394 = vrcp.pop %v4314
      %v4395 = vrcp.pop %v4317
      %v4396 = vrcp.pop %v4320
      %v4397 = vrcp.pop %v4323
      %v4398 = vrcp.pop %v4326
      %v4399 = vrcp.pop %v4329
      %v4400 = vrcp.pop %v4332
      %v4401 = vrcp.pop %v4335
      %v4402 = vrcp.pop %v4338
      %v4403 = vrcp.pop %v4341
      %v4404 = vrcp.pop %v4344
      %v4405 = vrcp.pop %v4347
      %v4406 = vrcp.pop %v4350
      %v4407 = vrcp.pop %v4353
      %v4408 = vrcp.pop %v4356
      %v4409 = vrcp.pop %v4359
      %v4410 = vrcp.pop %v4362
      %v4411 = vrcp.pop %v4365
      %v4412 = vrcp.pop %v4368
      %v4413 = vrcp.pop %v4371
      %v4414 = vrcp.pop %v4374
      %v4415 = vrcp.pop %v4377
      %v4416 = vrcp.pop %v4380
      %v4417 = vrcp.pop %v4383
      %v4418 = vrcp.pop %v4386
      %v4419 = vmul.f32 %v4228, %v4387
      %v4420 = vmul.f32 %v4230, %v4388
      %v4421 = vmul.f32 %v4232, %v4389
      %v4422 = vmul.f32 %v4234, %v4390
      %v4423 = vmul.f32 %v4236, %v4391
      %v4424 = vmul.f32 %v4238, %v4392
      %v4425 = vmul.f32 %v4240, %v4393
      %v4426 = vmul.f32 %v4242, %v4394
      %v4427 = vmul.f32 %v4244, %v4395
      %v4428 = vmul.f32 %v4246, %v4396
      %v4429 = vmul.f32 %v4248, %v4397
      %v4430 = vmul.f32 %v4250, %v4398
      %v4431 = vmul.f32 %v4252, %v4399
      %v4432 = vmul.f32 %v4254, %v4400
      %v4433 = vmul.f32 %v4256, %v4401
      %v4434 = vmul.f32 %v4258, %v4402
      %v4435 = vmul.f32 %v4260, %v4403
      %v4436 = vmul.f32 %v4262, %v4404
      %v4437 = vmul.f32 %v4264, %v4405
      %v4438 = vmul.f32 %v4266, %v4406
      %v4439 = vmul.f32 %v4268, %v4407
      %v4440 = vmul.f32 %v4270, %v4408
      %v4441 = vmul.f32 %v4272, %v4409
      %v4442 = vmul.f32 %v4274, %v4410
      %v4443 = vmul.f32 %v4276, %v4411
      %v4444 = vmul.f32 %v4278, %v4412
      %v4445 = vmul.f32 %v4280, %v4413
      %v4446 = vmul.f32 %v4282, %v4414
      %v4447 = vmul.f32 %v4284, %v4415
      %v4448 = vmul.f32 %v4286, %v4416
      %v4449 = vmul.f32 %v4288, %v4417
      %v4450 = vmul.f32 %v4290, %v4418
      %v4451 = vpack.c.bf16 %v4420, %v4419
      %v4452 = vpack.c.bf16 %v4422, %v4421
      %v4453 = vpack.c.bf16 %v4424, %v4423
      %v4454 = vpack.c.bf16 %v4426, %v4425
      %v4455 = vpack.c.bf16 %v4428, %v4427
      %v4456 = vpack.c.bf16 %v4430, %v4429
      %v4457 = vpack.c.bf16 %v4432, %v4431
      %v4458 = vpack.c.bf16 %v4434, %v4433
      %v4459 = vpack.c.bf16 %v4436, %v4435
      %v4460 = vpack.c.bf16 %v4438, %v4437
      %v4461 = vpack.c.bf16 %v4440, %v4439
      %v4462 = vpack.c.bf16 %v4442, %v4441
      %v4463 = vpack.c.bf16 %v4444, %v4443
      %v4464 = vpack.c.bf16 %v4446, %v4445
      %v4465 = vpack.c.bf16 %v4448, %v4447
      %v4466 = vpack.c.bf16 %v4450, %v4449
      %v4468 = vsel %vm1565, %v4451, 0
      %v4471 = vsel %vm1565, %v4452, 0
      %4473 = vmatprep.subr.bf16.mxu0 0
      %4474 = vmatpush1.bf16.msra.mxu0 %v3439
      %4475 = vmatprep.subr.bf16.mxu0 0
      %4476 = vmatpush1.bf16.msra.mxu0 %v3442
      %4477 = vmatprep.subr.bf16.mxu0 0
      %4478 = vmatpush1.bf16.msra.mxu0 0
      %4479 = vmatprep.subr.bf16.mxu0 0
      %4480 = vmatpush1.bf16.msra.mxu0 0
      %4481 = vmatprep.subr.bf16.mxu0 0
      %4482 = vmatpush1.bf16.msra.mxu0 0
      %4483 = vmatprep.subr.bf16.mxu0 0
      %4484 = vmatpush1.bf16.msra.mxu0 0
      %4485 = vmatprep.subr.bf16.mxu0 0
      %4486 = vmatpush1.bf16.msra.mxu0 0
      %4487 = vmatprep.subr.bf16.mxu0 0
      %4488 = vmatpush1.bf16.msra.mxu0 0
      %4489 = vmatprep.subr.bf16.mxu0 0
      %4490 = vmatpush1.bf16.msra.mxu0 0
      %4491 = vmatprep.subr.bf16.mxu0 0
      %4492 = vmatpush1.bf16.msra.mxu0 0
      %4493 = vmatprep.subr.bf16.mxu0 0
      %4494 = vmatpush1.bf16.msra.mxu0 0
      %4495 = vmatprep.subr.bf16.mxu0 0
      %4496 = vmatpush1.bf16.msra.mxu0 0
      %4497 = vmatprep.subr.bf16.mxu0 0
      %4498 = vmatpush1.bf16.msra.mxu0 0
      %4499 = vmatprep.subr.bf16.mxu0 0
      %4500 = vmatpush1.bf16.msra.mxu0 0
      %4501 = vmatprep.subr.bf16.mxu0 0
      %4502 = vmatpush1.bf16.msra.mxu0 0
      %4503 = vmatprep.subr.bf16.mxu0 0
      %4504 = vmatpush1.bf16.msra.mxu0 0
      %4505 = vmatprep.mubr.bf16.mxu0 0
      %4506 = vmatmul.mubr.bf16.gmra.mrb[0].mxu0 %v4468
      %v4507 = vpop.f32.mrb[0].mxu0
      %v4508 = vadd.f32 0.0, %v4507
      %v4509 = vpop.f32.mrb[0].mxu0
      %v4510 = vpop.f32.mrb[0].mxu0
      %v4511 = vadd.f32 0.0, %v4510
      %v4512 = vpop.f32.mrb[0].mxu0
      %4513 = vmatprep.mubr.bf16.mxu0 0
      %4514 = vmatmul.mubr.bf16.gmra.mrb[0].mxu0 %v4471
      %v4515 = vpop.f32.mrb[0].mxu0
      %v4516 = vadd.f32 0.0, %v4515
      %v4517 = vpop.f32.mrb[0].mxu0
      %v4518 = vpop.f32.mrb[0].mxu0
      %v4519 = vadd.f32 0.0, %v4518
      %v4520 = vpop.f32.mrb[0].mxu0
      %4521 = vdwg.mxu0
      %v4523 = vsel %vm1565, %v4453, 0
      %v4526 = vsel %vm1565, %v4454, 0
      %4528 = vmatprep.subr.bf16.mxu0 0
      %4529 = vmatpush1.bf16.msra.mxu0 %v3506
      %4530 = vmatprep.subr.bf16.mxu0 0
      %4531 = vmatpush1.bf16.msra.mxu0 %v3508
      %4532 = vmatprep.subr.bf16.mxu0 0
      %4533 = vmatpush1.bf16.msra.mxu0 0
      %4534 = vmatprep.subr.bf16.mxu0 0
      %4535 = vmatpush1.bf16.msra.mxu0 0
      %4536 = vmatprep.subr.bf16.mxu0 0
      %4537 = vmatpush1.bf16.msra.mxu0 0
      %4538 = vmatprep.subr.bf16.mxu0 0
      %4539 = vmatpush1.bf16.msra.mxu0 0
      %4540 = vmatprep.subr.bf16.mxu0 0
      %4541 = vmatpush1.bf16.msra.mxu0 0
      %4542 = vmatprep.subr.bf16.mxu0 0
      %4543 = vmatpush1.bf16.msra.mxu0 0
      %4544 = vmatprep.subr.bf16.mxu0 0
      %4545 = vmatpush1.bf16.msra.mxu0 0
      %4546 = vmatprep.subr.bf16.mxu0 0
      %4547 = vmatpush1.bf16.msra.mxu0 0
      %4548 = vmatprep.subr.bf16.mxu0 0
      %4549 = vmatpush1.bf16.msra.mxu0 0
      %4550 = vmatprep.subr.bf16.mxu0 0
      %4551 = vmatpush1.bf16.msra.mxu0 0
      %4552 = vmatprep.subr.bf16.mxu0 0
      %4553 = vmatpush1.bf16.msra.mxu0 0
      %4554 = vmatprep.subr.bf16.mxu0 0
      %4555 = vmatpush1.bf16.msra.mxu0 0
      %4556 = vmatprep.subr.bf16.mxu0 0
      %4557 = vmatpush1.bf16.msra.mxu0 0
      %4558 = vmatprep.subr.bf16.mxu0 0
      %4559 = vmatpush1.bf16.msra.mxu0 0
      %4560 = vmatprep.mubr.bf16.mxu0 0
      %4561 = vmatmul.mubr.bf16.gmra.mrb[0].mxu0 %v4523
      %v4562 = vpop.f32.mrb[0].mxu0
      %v4563 = vadd.f32 0.0, %v4562
      %v4564 = vpop.f32.mrb[0].mxu0
      %v4565 = vpop.f32.mrb[0].mxu0
      %v4566 = vadd.f32 0.0, %v4565
      %v4567 = vpop.f32.mrb[0].mxu0
      %4568 = vmatprep.mubr.bf16.mxu0 0
      %4569 = vmatmul.mubr.bf16.gmra.mrb[0].mxu0 %v4526
      %v4570 = vpop.f32.mrb[0].mxu0
      %v4571 = vadd.f32 0.0, %v4570
      %v4572 = vpop.f32.mrb[0].mxu0
      %v4573 = vpop.f32.mrb[0].mxu0
      %v4574 = vadd.f32 0.0, %v4573
      %v4575 = vpop.f32.mrb[0].mxu0
      %4576 = vdwg.mxu0
      %v4578 = vsel %vm1565, %v4455, 0
      %v4581 = vsel %vm1565, %v4456, 0
      %4583 = vmatprep.subr.bf16.mxu0 0
      %4584 = vmatpush1.bf16.msra.mxu0 %v3512
      %4585 = vmatprep.subr.bf16.mxu0 0
      %4586 = vmatpush1.bf16.msra.mxu0 %v3514
      %4587 = vmatprep.subr.bf16.mxu0 0
      %4588 = vmatpush1.bf16.msra.mxu0 0
      %4589 = vmatprep.subr.bf16.mxu0 0
      %4590 = vmatpush1.bf16.msra.mxu0 0
      %4591 = vmatprep.subr.bf16.mxu0 0
      %4592 = vmatpush1.bf16.msra.mxu0 0
      %4593 = vmatprep.subr.bf16.mxu0 0
      %4594 = vmatpush1.bf16.msra.mxu0 0
      %4595 = vmatprep.subr.bf16.mxu0 0
      %4596 = vmatpush1.bf16.msra.mxu0 0
      %4597 = vmatprep.subr.bf16.mxu0 0
      %4598 = vmatpush1.bf16.msra.mxu0 0
      %4599 = vmatprep.subr.bf16.mxu0 0
      %4600 = vmatpush1.bf16.msra.mxu0 0
      %4601 = vmatprep.subr.bf16.mxu0 0
      %4602 = vmatpush1.bf16.msra.mxu0 0
      %4603 = vmatprep.subr.bf16.mxu0 0
      %4604 = vmatpush1.bf16.msra.mxu0 0
      %4605 = vmatprep.subr.bf16.mxu0 0
      %4606 = vmatpush1.bf16.msra.mxu0 0
      %4607 = vmatprep.subr.bf16.mxu0 0
      %4608 = vmatpush1.bf16.msra.mxu0 0
      %4609 = vmatprep.subr.bf16.mxu0 0
      %4610 = vmatpush1.bf16.msra.mxu0 0
      %4611 = vmatprep.subr.bf16.mxu0 0
      %4612 = vmatpush1.bf16.msra.mxu0 0
      %4613 = vmatprep.subr.bf16.mxu0 0
      %4614 = vmatpush1.bf16.msra.mxu0 0
      %4615 = vmatprep.mubr.bf16.mxu0 0
      %4616 = vmatmul.mubr.bf16.gmra.mrb[0].mxu0 %v4578
      %v4617 = vpop.f32.mrb[0].mxu0
      %v4618 = vadd.f32 0.0, %v4617
      %v4619 = vpop.f32.mrb[0].mxu0
      %v4620 = vpop.f32.mrb[0].mxu0
      %v4621 = vadd.f32 0.0, %v4620
      %v4622 = vpop.f32.mrb[0].mxu0
      %4623 = vmatprep.mubr.bf16.mxu0 0
      %4624 = vmatmul.mubr.bf16.gmra.mrb[0].mxu0 %v4581
      %v4625 = vpop.f32.mrb[0].mxu0
      %v4626 = vadd.f32 0.0, %v4625
      %v4627 = vpop.f32.mrb[0].mxu0
      %v4628 = vpop.f32.mrb[0].mxu0
      %v4629 = vadd.f32 0.0, %v4628
      %v4630 = vpop.f32.mrb[0].mxu0
      %4631 = vdwg.mxu0
      %v4633 = vsel %vm1565, %v4457, 0
      %v4636 = vsel %vm1565, %v4458, 0
      %4638 = vmatprep.subr.bf16.mxu0 0
      %4639 = vmatpush1.bf16.msra.mxu0 %v3518
      %4640 = vmatprep.subr.bf16.mxu0 0
      %4641 = vmatpush1.bf16.msra.mxu0 %v3520
      %4642 = vmatprep.subr.bf16.mxu0 0
      %4643 = vmatpush1.bf16.msra.mxu0 0
      %4644 = vmatprep.subr.bf16.mxu0 0
      %4645 = vmatpush1.bf16.msra.mxu0 0
      %4646 = vmatprep.subr.bf16.mxu0 0
      %4647 = vmatpush1.bf16.msra.mxu0 0
      %4648 = vmatprep.subr.bf16.mxu0 0
      %4649 = vmatpush1.bf16.msra.mxu0 0
      %4650 = vmatprep.subr.bf16.mxu0 0
      %4651 = vmatpush1.bf16.msra.mxu0 0
      %4652 = vmatprep.subr.bf16.mxu0 0
      %4653 = vmatpush1.bf16.msra.mxu0 0
      %4654 = vmatprep.subr.bf16.mxu0 0
      %4655 = vmatpush1.bf16.msra.mxu0 0
      %4656 = vmatprep.subr.bf16.mxu0 0
      %4657 = vmatpush1.bf16.msra.mxu0 0
      %4658 = vmatprep.subr.bf16.mxu0 0
      %4659 = vmatpush1.bf16.msra.mxu0 0
      %4660 = vmatprep.subr.bf16.mxu0 0
      %4661 = vmatpush1.bf16.msra.mxu0 0
      %4662 = vmatprep.subr.bf16.mxu0 0
      %4663 = vmatpush1.bf16.msra.mxu0 0
      %4664 = vmatprep.subr.bf16.mxu0 0
      %4665 = vmatpush1.bf16.msra.mxu0 0
      %4666 = vmatprep.subr.bf16.mxu0 0
      %4667 = vmatpush1.bf16.msra.mxu0 0
      %4668 = vmatprep.subr.bf16.mxu0 0
      %4669 = vmatpush1.bf16.msra.mxu0 0
      %4670 = vmatprep.mubr.bf16.mxu0 0
      %4671 = vmatmul.mubr.bf16.gmra.mrb[0].mxu0 %v4633
      %v4672 = vpop.f32.mrb[0].mxu0
      %v4673 = vadd.f32 0.0, %v4672
      %v4674 = vpop.f32.mrb[0].mxu0
      %v4675 = vpop.f32.mrb[0].mxu0
      %v4676 = vadd.f32 0.0, %v4675
      %v4677 = vpop.f32.mrb[0].mxu0
      %4678 = vmatprep.mubr.bf16.mxu0 0
      %4679 = vmatmul.mubr.bf16.gmra.mrb[0].mxu0 %v4636
      %v4680 = vpop.f32.mrb[0].mxu0
      %v4681 = vadd.f32 0.0, %v4680
      %v4682 = vpop.f32.mrb[0].mxu0
      %v4683 = vpop.f32.mrb[0].mxu0
      %v4684 = vadd.f32 0.0, %v4683
      %v4685 = vpop.f32.mrb[0].mxu0
      %4686 = vdwg.mxu0
      %v4688 = vsel %vm1565, %v4459, 0
      %v4691 = vsel %vm1565, %v4460, 0
      %4693 = vmatprep.subr.bf16.mxu0 0
      %4694 = vmatpush1.bf16.msra.mxu0 %v3524
      %4695 = vmatprep.subr.bf16.mxu0 0
      %4696 = vmatpush1.bf16.msra.mxu0 %v3526
      %4697 = vmatprep.subr.bf16.mxu0 0
      %4698 = vmatpush1.bf16.msra.mxu0 0
      %4699 = vmatprep.subr.bf16.mxu0 0
      %4700 = vmatpush1.bf16.msra.mxu0 0
      %4701 = vmatprep.subr.bf16.mxu0 0
      %4702 = vmatpush1.bf16.msra.mxu0 0
      %4703 = vmatprep.subr.bf16.mxu0 0
      %4704 = vmatpush1.bf16.msra.mxu0 0
      %4705 = vmatprep.subr.bf16.mxu0 0
      %4706 = vmatpush1.bf16.msra.mxu0 0
      %4707 = vmatprep.subr.bf16.mxu0 0
      %4708 = vmatpush1.bf16.msra.mxu0 0
      %4709 = vmatprep.subr.bf16.mxu0 0
      %4710 = vmatpush1.bf16.msra.mxu0 0
      %4711 = vmatprep.subr.bf16.mxu0 0
      %4712 = vmatpush1.bf16.msra.mxu0 0
      %4713 = vmatprep.subr.bf16.mxu0 0
      %4714 = vmatpush1.bf16.msra.mxu0 0
      %4715 = vmatprep.subr.bf16.mxu0 0
      %4716 = vmatpush1.bf16.msra.mxu0 0
      %4717 = vmatprep.subr.bf16.mxu0 0
      %4718 = vmatpush1.bf16.msra.mxu0 0
      %4719 = vmatprep.subr.bf16.mxu0 0
      %4720 = vmatpush1.bf16.msra.mxu0 0
      %4721 = vmatprep.subr.bf16.mxu0 0
      %4722 = vmatpush1.bf16.msra.mxu0 0
      %4723 = vmatprep.subr.bf16.mxu0 0
      %4724 = vmatpush1.bf16.msra.mxu0 0
      %4725 = vmatprep.mubr.bf16.mxu0 0
      %4726 = vmatmul.mubr.bf16.gmra.mrb[0].mxu0 %v4688
      %v4727 = vpop.f32.mrb[0].mxu0
      %v4728 = vadd.f32 0.0, %v4727
      %v4729 = vpop.f32.mrb[0].mxu0
      %v4730 = vpop.f32.mrb[0].mxu0
      %v4731 = vadd.f32 0.0, %v4730
      %v4732 = vpop.f32.mrb[0].mxu0
      %4733 = vmatprep.mubr.bf16.mxu0 0
      %4734 = vmatmul.mubr.bf16.gmra.mrb[0].mxu0 %v4691
      %v4735 = vpop.f32.mrb[0].mxu0
      %v4736 = vadd.f32 0.0, %v4735
      %v4737 = vpop.f32.mrb[0].mxu0
      %v4738 = vpop.f32.mrb[0].mxu0
      %v4739 = vadd.f32 0.0, %v4738
      %v4740 = vpop.f32.mrb[0].mxu0
      %4741 = vdwg.mxu0
      %v4743 = vsel %vm1565, %v4461, 0
      %v4746 = vsel %vm1565, %v4462, 0
      %4748 = vmatprep.subr.bf16.mxu0 0
      %4749 = vmatpush1.bf16.msra.mxu0 %v3530
      %4750 = vmatprep.subr.bf16.mxu0 0
      %4751 = vmatpush1.bf16.msra.mxu0 %v3532
      %4752 = vmatprep.subr.bf16.mxu0 0
      %4753 = vmatpush1.bf16.msra.mxu0 0
      %4754 = vmatprep.subr.bf16.mxu0 0
      %4755 = vmatpush1.bf16.msra.mxu0 0
      %4756 = vmatprep.subr.bf16.mxu0 0
      %4757 = vmatpush1.bf16.msra.mxu0 0
      %4758 = vmatprep.subr.bf16.mxu0 0
      %4759 = vmatpush1.bf16.msra.mxu0 0
      %4760 = vmatprep.subr.bf16.mxu0 0
      %4761 = vmatpush1.bf16.msra.mxu0 0
      %4762 = vmatprep.subr.bf16.mxu0 0
      %4763 = vmatpush1.bf16.msra.mxu0 0
      %4764 = vmatprep.subr.bf16.mxu0 0
      %4765 = vmatpush1.bf16.msra.mxu0 0
      %4766 = vmatprep.subr.bf16.mxu0 0
      %4767 = vmatpush1.bf16.msra.mxu0 0
      %4768 = vmatprep.subr.bf16.mxu0 0
      %4769 = vmatpush1.bf16.msra.mxu0 0
      %4770 = vmatprep.subr.bf16.mxu0 0
      %4771 = vmatpush1.bf16.msra.mxu0 0
      %4772 = vmatprep.subr.bf16.mxu0 0
      %4773 = vmatpush1.bf16.msra.mxu0 0
      %4774 = vmatprep.subr.bf16.mxu0 0
      %4775 = vmatpush1.bf16.msra.mxu0 0
      %4776 = vmatprep.subr.bf16.mxu0 0
      %4777 = vmatpush1.bf16.msra.mxu0 0
      %4778 = vmatprep.subr.bf16.mxu0 0
      %4779 = vmatpush1.bf16.msra.mxu0 0
      %4780 = vmatprep.mubr.bf16.mxu0 0
      %4781 = vmatmul.mubr.bf16.gmra.mrb[0].mxu0 %v4743
      %v4782 = vpop.f32.mrb[0].mxu0
      %v4783 = vadd.f32 0.0, %v4782
      %v4784 = vpop.f32.mrb[0].mxu0
      %v4785 = vpop.f32.mrb[0].mxu0
      %v4786 = vadd.f32 0.0, %v4785
      %v4787 = vpop.f32.mrb[0].mxu0
      %4788 = vmatprep.mubr.bf16.mxu0 0
      %4789 = vmatmul.mubr.bf16.gmra.mrb[0].mxu0 %v4746
      %v4790 = vpop.f32.mrb[0].mxu0
      %v4791 = vadd.f32 0.0, %v4790
      %v4792 = vpop.f32.mrb[0].mxu0
      %v4793 = vpop.f32.mrb[0].mxu0
      %v4794 = vadd.f32 0.0, %v4793
      %v4795 = vpop.f32.mrb[0].mxu0
      %4796 = vdwg.mxu0
      %v4798 = vsel %vm1565, %v4463, 0
      %v4801 = vsel %vm1565, %v4464, 0
      %4803 = vmatprep.subr.bf16.mxu0 0
      %4804 = vmatpush1.bf16.msra.mxu0 %v3536
      %4805 = vmatprep.subr.bf16.mxu0 0
      %4806 = vmatpush1.bf16.msra.mxu0 %v3538
      %4807 = vmatprep.subr.bf16.mxu0 0
      %4808 = vmatpush1.bf16.msra.mxu0 0
      %4809 = vmatprep.subr.bf16.mxu0 0
      %4810 = vmatpush1.bf16.msra.mxu0 0
      %4811 = vmatprep.subr.bf16.mxu0 0
      %4812 = vmatpush1.bf16.msra.mxu0 0
      %4813 = vmatprep.subr.bf16.mxu0 0
      %4814 = vmatpush1.bf16.msra.mxu0 0
      %4815 = vmatprep.subr.bf16.mxu0 0
      %4816 = vmatpush1.bf16.msra.mxu0 0
      %4817 = vmatprep.subr.bf16.mxu0 0
      %4818 = vmatpush1.bf16.msra.mxu0 0
      %4819 = vmatprep.subr.bf16.mxu0 0
      %4820 = vmatpush1.bf16.msra.mxu0 0
      %4821 = vmatprep.subr.bf16.mxu0 0
      %4822 = vmatpush1.bf16.msra.mxu0 0
      %4823 = vmatprep.subr.bf16.mxu0 0
      %4824 = vmatpush1.bf16.msra.mxu0 0
      %4825 = vmatprep.subr.bf16.mxu0 0
      %4826 = vmatpush1.bf16.msra.mxu0 0
      %4827 = vmatprep.subr.bf16.mxu0 0
      %4828 = vmatpush1.bf16.msra.mxu0 0
      %4829 = vmatprep.subr.bf16.mxu0 0
      %4830 = vmatpush1.bf16.msra.mxu0 0
      %4831 = vmatprep.subr.bf16.mxu0 0
      %4832 = vmatpush1.bf16.msra.mxu0 0
      %4833 = vmatprep.subr.bf16.mxu0 0
      %4834 = vmatpush1.bf16.msra.mxu0 0
      %4835 = vmatprep.mubr.bf16.mxu0 0
      %4836 = vmatmul.mubr.bf16.gmra.mrb[0].mxu0 %v4798
      %v4837 = vpop.f32.mrb[0].mxu0
      %v4838 = vadd.f32 0.0, %v4837
      %v4839 = vpop.f32.mrb[0].mxu0
      %v4840 = vpop.f32.mrb[0].mxu0
      %v4841 = vadd.f32 0.0, %v4840
      %v4842 = vpop.f32.mrb[0].mxu0
      %4843 = vmatprep.mubr.bf16.mxu0 0
      %4844 = vmatmul.mubr.bf16.gmra.mrb[0].mxu0 %v4801
      %v4845 = vpop.f32.mrb[0].mxu0
      %v4846 = vadd.f32 0.0, %v4845
      %v4847 = vpop.f32.mrb[0].mxu0
      %v4848 = vpop.f32.mrb[0].mxu0
      %v4849 = vadd.f32 0.0, %v4848
      %v4850 = vpop.f32.mrb[0].mxu0
      %4851 = vdwg.mxu0
      %v4853 = vsel %vm1565, %v4465, 0
      %v4856 = vsel %vm1565, %v4466, 0
      %4858 = vmatprep.subr.bf16.mxu0 0
      %4859 = vmatpush1.bf16.msra.mxu0 %v3542
      %4860 = vmatprep.subr.bf16.mxu0 0
      %4861 = vmatpush1.bf16.msra.mxu0 %v3544
      %4862 = vmatprep.subr.bf16.mxu0 0
      %4863 = vmatpush1.bf16.msra.mxu0 0
      %4864 = vmatprep.subr.bf16.mxu0 0
      %4865 = vmatpush1.bf16.msra.mxu0 0
      %4866 = vmatprep.subr.bf16.mxu0 0
      %4867 = vmatpush1.bf16.msra.mxu0 0
      %4868 = vmatprep.subr.bf16.mxu0 0
      %4869 = vmatpush1.bf16.msra.mxu0 0
      %4870 = vmatprep.subr.bf16.mxu0 0
      %4871 = vmatpush1.bf16.msra.mxu0 0
      %4872 = vmatprep.subr.bf16.mxu0 0
      %4873 = vmatpush1.bf16.msra.mxu0 0
      %4874 = vmatprep.subr.bf16.mxu0 0
      %4875 = vmatpush1.bf16.msra.mxu0 0
      %4876 = vmatprep.subr.bf16.mxu0 0
      %4877 = vmatpush1.bf16.msra.mxu0 0
      %4878 = vmatprep.subr.bf16.mxu0 0
      %4879 = vmatpush1.bf16.msra.mxu0 0
      %4880 = vmatprep.subr.bf16.mxu0 0
      %4881 = vmatpush1.bf16.msra.mxu0 0
      %4882 = vmatprep.subr.bf16.mxu0 0
      %4883 = vmatpush1.bf16.msra.mxu0 0
      %4884 = vmatprep.subr.bf16.mxu0 0
      %4885 = vmatpush1.bf16.msra.mxu0 0
      %4886 = vmatprep.subr.bf16.mxu0 0
      %4887 = vmatpush1.bf16.msra.mxu0 0
      %4888 = vmatprep.subr.bf16.mxu0 0
      %4889 = vmatpush1.bf16.msra.mxu0 0
      %4890 = vmatprep.mubr.bf16.mxu0 0
      %4891 = vmatmul.mubr.bf16.gmra.mrb[0].mxu0 %v4853
      %v4892 = vpop.f32.mrb[0].mxu0
      %v4893 = vadd.f32 0.0, %v4892
      %v4894 = vpop.f32.mrb[0].mxu0
      %v4895 = vpop.f32.mrb[0].mxu0
      %v4896 = vadd.f32 0.0, %v4895
      %v4897 = vpop.f32.mrb[0].mxu0
      %4898 = vmatprep.mubr.bf16.mxu0 0
      %4899 = vmatmul.mubr.bf16.gmra.mrb[0].mxu0 %v4856
      %v4900 = vpop.f32.mrb[0].mxu0
      %v4901 = vadd.f32 0.0, %v4900
      %v4902 = vpop.f32.mrb[0].mxu0
      %v4903 = vpop.f32.mrb[0].mxu0
      %v4904 = vadd.f32 0.0, %v4903
      %v4905 = vpop.f32.mrb[0].mxu0
      %4906 = vdwg.mxu0
      %4911 = vrot.lane.b32.xlu0 %v4563, 16
      %v4912 = vpop.permute.xlu0 %4911
      %4913 = vrot.lane.b32.xlu0 %v4566, 16
      %v4914 = vpop.permute.xlu0 %4913
      %4915 = vrot.lane.b32.xlu0 %v4571, 16
      %v4916 = vpop.permute.xlu0 %4915
      %4917 = vrot.lane.b32.xlu0 %v4574, 16
      %v4918 = vpop.permute.xlu0 %4917
      %4927 = vrot.lane.b32.xlu0 %v4618, 32
      %v4928 = vpop.permute.xlu0 %4927
      %4929 = vrot.lane.b32.xlu0 %v4621, 32
      %v4930 = vpop.permute.xlu0 %4929
      %4931 = vrot.lane.b32.xlu0 %v4626, 32
      %v4932 = vpop.permute.xlu0 %4931
      %4933 = vrot.lane.b32.xlu0 %v4629, 32
      %v4934 = vpop.permute.xlu0 %4933
      %4943 = vrot.lane.b32.xlu0 %v4673, 48
      %v4944 = vpop.permute.xlu0 %4943
      %4945 = vrot.lane.b32.xlu0 %v4676, 48
      %v4946 = vpop.permute.xlu0 %4945
      %4947 = vrot.lane.b32.xlu0 %v4681, 48
      %v4948 = vpop.permute.xlu0 %4947
      %4949 = vrot.lane.b32.xlu0 %v4684, 48
      %v4950 = vpop.permute.xlu0 %4949
      %4959 = vrot.lane.b32.xlu0 %v4728, 64
      %v4960 = vpop.permute.xlu0 %4959
      %4961 = vrot.lane.b32.xlu0 %v4731, 64
      %v4962 = vpop.permute.xlu0 %4961
      %4963 = vrot.lane.b32.xlu0 %v4736, 64
      %v4964 = vpop.permute.xlu0 %4963
      %4965 = vrot.lane.b32.xlu0 %v4739, 64
      %v4966 = vpop.permute.xlu0 %4965
      %4975 = vrot.lane.b32.xlu0 %v4783, 80
      %v4976 = vpop.permute.xlu0 %4975
      %4977 = vrot.lane.b32.xlu0 %v4786, 80
      %v4978 = vpop.permute.xlu0 %4977
      %4979 = vrot.lane.b32.xlu0 %v4791, 80
      %v4980 = vpop.permute.xlu0 %4979
      %4981 = vrot.lane.b32.xlu0 %v4794, 80
      %v4982 = vpop.permute.xlu0 %4981
      %4991 = vrot.lane.b32.xlu0 %v4838, 96
      %v4992 = vpop.permute.xlu0 %4991
      %4993 = vrot.lane.b32.xlu0 %v4841, 96
      %v4994 = vpop.permute.xlu0 %4993
      %4995 = vrot.lane.b32.xlu0 %v4846, 96
      %v4996 = vpop.permute.xlu0 %4995
      %4997 = vrot.lane.b32.xlu0 %v4849, 96
      %v4998 = vpop.permute.xlu0 %4997
      %5007 = vrot.lane.b32.xlu0 %v4893, 112
      %v5008 = vpop.permute.xlu0 %5007
      %5009 = vrot.lane.b32.xlu0 %v4896, 112
      %v5010 = vpop.permute.xlu0 %5009
      %5011 = vrot.lane.b32.xlu0 %v4901, 112
      %v5012 = vpop.permute.xlu0 %5011
      %5013 = vrot.lane.b32.xlu0 %v4904, 112
      %v5014 = vpop.permute.xlu0 %5013
      %v5019 = vsel %vm1012, %v4508, %v4912
      %v5020 = vsel %vm1012, %v4511, %v4914
      %v5021 = vsel %vm1012, %v4516, %v4916
      %v5022 = vsel %vm1012, %v4519, %v4918
      %v5023 = vsel %vm1565, %v5019, %v4928
      %v5024 = vsel %vm1565, %v5020, %v4930
      %v5025 = vsel %vm1565, %v5021, %v4932
      %v5026 = vsel %vm1565, %v5022, %v4934
      %v5027 = vsel %vm511, %v5023, %v4944
      %v5028 = vsel %vm511, %v5024, %v4946
      %v5029 = vsel %vm511, %v5025, %v4948
      %v5030 = vsel %vm511, %v5026, %v4950
      %v5031 = vsel %vm2498, %v5027, %v4960
      %v5032 = vsel %vm2498, %v5028, %v4962
      %v5033 = vsel %vm2498, %v5029, %v4964
      %v5034 = vsel %vm2498, %v5030, %v4966
      %v5035 = vsel %vm2503, %v5031, %v4976
      %v5036 = vsel %vm2503, %v5032, %v4978
      %v5037 = vsel %vm2503, %v5033, %v4980
      %v5038 = vsel %vm2503, %v5034, %v4982
      %v5039 = vsel %vm2508, %v5035, %v4992
      %v5040 = vsel %vm2508, %v5036, %v4994
      %v5041 = vsel %vm2508, %v5037, %v4996
      %v5042 = vsel %vm2508, %v5038, %v4998
      %v5043 = vsel %vm2513, %v5039, %v5008
      %v5044 = vsel %vm2513, %v5040, %v5010
      %v5045 = vsel %vm2513, %v5041, %v5012
      %v5046 = vsel %vm2513, %v5042, %v5014
      %v5047 = vpack.c.bf16 %v5044, %v5043
      %v5048 = vpack.c.bf16 %v5046, %v5045
      %v5049 = vld [vmem:[%s4] sm:$0xf]
      %v5050 = vld [vmem:[%s4 + $0x4] sm:$0xf]
      %v5051 = vld [vmem:[%s4 + $0x8] sm:$0xf]
      %v5052 = vld [vmem:[%s4 + $0xc] sm:$0xf]
      %v5053 = vld [vmem:[%s4 + $0x10] sm:$0xf]
      %v5054 = vld [vmem:[%s4 + $0x14] sm:$0xf]
      %v5055 = vld [vmem:[%s4 + $0x18] sm:$0xf]
      %v5056 = vld [vmem:[%s4 + $0x1c] sm:$0xf]
      %v5057 = vld [vmem:[%s4 + $0x20] sm:$0xf]
      %v5058 = vld [vmem:[%s4 + $0x24] sm:$0xf]
      %v5059 = vld [vmem:[%s4 + $0x28] sm:$0xf]
      %v5060 = vld [vmem:[%s4 + $0x2c] sm:$0xf]
      %v5061 = vld [vmem:[%s4 + $0x30] sm:$0xf]
      %v5062 = vld [vmem:[%s4 + $0x34] sm:$0xf]
      %v5063 = vld [vmem:[%s4 + $0x38] sm:$0xf]
      %v5064 = vld [vmem:[%s4 + $0x3c] sm:$0xf]
      %v5065 = vld [vmem:[%s5] sm:$0x1]
      %v5067 = vlaneseq
      %v5068 = vshrl.u32 %v5067, 7
      %v5069 = vsub.s32 0, %v5068
      %v5070 = vrot.slane %v5065, %v5069
      %v5088 = vunpack.c.l.b16 %v5049
      %v5089 = vunpack.c.l.b16 %v5050
      %v5090 = vunpack.c.l.b16 %v5051
      %v5091 = vunpack.c.l.b16 %v5052
      %v5092 = vunpack.c.l.b16 %v5053
      %v5093 = vunpack.c.l.b16 %v5054
      %v5094 = vunpack.c.l.b16 %v5055
      %v5095 = vunpack.c.l.b16 %v5056
      %v5096 = vunpack.c.l.b16 %v5057
      %v5097 = vunpack.c.l.b16 %v5058
      %v5098 = vunpack.c.l.b16 %v5059
      %v5099 = vunpack.c.l.b16 %v5060
      %v5100 = vunpack.c.l.b16 %v5061
      %v5101 = vunpack.c.l.b16 %v5062
      %v5102 = vunpack.c.l.b16 %v5063
      %v5103 = vunpack.c.l.b16 %v5064
      %v5104 = vpack.c.b16 %v5089, %v5088
      %v5105 = vpack.c.b16 %v5091, %v5090
      %v5106 = vpack.c.b16 %v5093, %v5092
      %v5107 = vpack.c.b16 %v5095, %v5094
      %v5108 = vpack.c.b16 %v5097, %v5096
      %v5109 = vpack.c.b16 %v5099, %v5098
      %v5110 = vpack.c.b16 %v5101, %v5100
      %v5111 = vpack.c.b16 %v5103, %v5102
      %5120 = vmatprep.subr.bf16.mxu0 0
      %5121 = vmatpush1.bf16.msra.mxu0 %v5104
      %5122 = vmatprep.subr.bf16.mxu0 0
      %5123 = vmatpush1.bf16.msra.mxu0 %v5105
      %5124 = vmatprep.subr.bf16.mxu0 0
      %5125 = vmatpush1.bf16.msra.mxu0 %v5106
      %5126 = vmatprep.subr.bf16.mxu0 0
      %5127 = vmatpush1.bf16.msra.mxu0 %v5107
      %5128 = vmatprep.subr.bf16.mxu0 0
      %5129 = vmatpush1.bf16.msra.mxu0 %v5108
      %5130 = vmatprep.subr.bf16.mxu0 0
      %5131 = vmatpush1.bf16.msra.mxu0 %v5109
      %5132 = vmatprep.subr.bf16.mxu0 0
      %5133 = vmatpush1.bf16.msra.mxu0 %v5110
      %5134 = vmatprep.subr.bf16.mxu0 0
      %5135 = vmatpush1.bf16.msra.mxu0 %v5111
      %5136 = vmatprep.subr.bf16.mxu0 0
      %5137 = vmatpush1.bf16.msra.mxu0 0
      %5138 = vmatprep.subr.bf16.mxu0 0
      %5139 = vmatpush1.bf16.msra.mxu0 0
      %5140 = vmatprep.subr.bf16.mxu0 0
      %5141 = vmatpush1.bf16.msra.mxu0 0
      %5142 = vmatprep.subr.bf16.mxu0 0
      %5143 = vmatpush1.bf16.msra.mxu0 0
      %5144 = vmatprep.subr.bf16.mxu0 0
      %5145 = vmatpush1.bf16.msra.mxu0 0
      %5146 = vmatprep.subr.bf16.mxu0 0
      %5147 = vmatpush1.bf16.msra.mxu0 0
      %5148 = vmatprep.subr.bf16.mxu0 0
      %5149 = vmatpush1.bf16.msra.mxu0 0
      %5150 = vmatprep.subr.bf16.mxu0 0
      %5151 = vmatpush1.bf16.msra.mxu0 0
      %5152 = vmatprep.mubr.bf16.mxu0 0
      %5153 = vmatmul.mubr.bf16.gmra.mrb[0].mxu0 %v5047
      %v5154 = vpop.f32.mrb[0].mxu0
      %v5155 = vadd.f32 %v5070, %v5154
      %v5156 = vpop.f32.mrb[0].mxu0
      %v5157 = vpop.f32.mrb[0].mxu0
      %v5158 = vadd.f32 %v5070, %v5157
      %v5159 = vpop.f32.mrb[0].mxu0
      %5160 = vmatprep.mubr.bf16.mxu0 0
      %5161 = vmatmul.mubr.bf16.gmra.mrb[0].mxu0 %v5048
      %v5162 = vpop.f32.mrb[0].mxu0
      %v5163 = vadd.f32 %v5070, %v5162
      %v5164 = vpop.f32.mrb[0].mxu0
      %v5165 = vpop.f32.mrb[0].mxu0
      %v5166 = vadd.f32 %v5070, %v5165
      %v5167 = vpop.f32.mrb[0].mxu0
      %5168 = vdwg.mxu0
      %v5169 = vadd.f32 %v3101, %v5155
      %v5170 = vadd.f32 %v3102, %v5158
      %v5171 = vadd.f32 %v3103, %v5163
      %v5172 = vadd.f32 %v3104, %v5166
      %s5173 = scalar_lea.vmem %s8, 1
      %v5174 = vld [vmem:[%s5173] sm:$0x1]
      %s5175 = scalar_lea.vmem %s9, 1
      %v5176 = vld [vmem:[%s5175] sm:$0x1]
      %5177 = vadd.xlane.f32.xlu0 %v5169
      %v5178 = vpop.xlane.xlu0 %5177
      %5179 = vadd.xlane.f32.xlu0 %v5170
      %v5180 = vpop.xlane.xlu0 %5179
      %5181 = vadd.xlane.f32.xlu0 %v5171
      %v5182 = vpop.xlane.xlu0 %5181
      %5183 = vadd.xlane.f32.xlu0 %v5172
      %v5184 = vpop.xlane.xlu0 %5183
      %v5185 = vmul.f32 %v5178, %v581
      %v5186 = vmul.f32 %v5180, %v581
      %v5187 = vmul.f32 %v5182, %v581
      %v5188 = vmul.f32 %v5184, %v581
      %v5189 = vsub.f32 %v5169, %v5185
      %v5190 = vsub.f32 %v5170, %v5186
      %v5191 = vsub.f32 %v5171, %v5187
      %v5192 = vsub.f32 %v5172, %v5188
      %v5193 = vmul.f32 %v5189, %v5189
      %v5194 = vmul.f32 %v5190, %v5190
      %v5195 = vmul.f32 %v5191, %v5191
      %v5196 = vmul.f32 %v5192, %v5192
      %5197 = vadd.xlane.f32.xlu0 %v5193
      %v5198 = vpop.xlane.xlu0 %5197
      %5199 = vadd.xlane.f32.xlu0 %v5194
      %v5200 = vpop.xlane.xlu0 %5199
      %5201 = vadd.xlane.f32.xlu0 %v5195
      %v5202 = vpop.xlane.xlu0 %5201
      %5203 = vadd.xlane.f32.xlu0 %v5196
      %v5204 = vpop.xlane.xlu0 %5203
      %v5205 = vmul.f32 %v5198, %v581
      %v5206 = vmul.f32 %v5200, %v581
      %v5207 = vmul.f32 %v5202, %v581
      %v5208 = vmul.f32 %v5204, %v581
      %v5209 = vadd.f32 %v5205, 1e-05
      %v5210 = vadd.f32 %v5206, 1e-05
      %v5211 = vadd.f32 %v5207, 1e-05
      %v5212 = vadd.f32 %v5208, 1e-05
      %v5213 = vrsqrt.pop %v5209
      %v5214 = vrsqrt.pop %v5210
      %v5215 = vrsqrt.pop %v5211
      %v5216 = vrsqrt.pop %v5212
      %v5217 = vmul.f32 %v5189, %v5213
      %v5218 = vmul.f32 %v5190, %v5214
      %v5219 = vmul.f32 %v5191, %v5215
      %v5220 = vmul.f32 %v5192, %v5216
      %v5222 = vlaneseq
      %v5223 = vshrl.u32 %v5222, 7
      %v5224 = vsub.s32 0, %v5223
      %v5225 = vrot.slane %v5174, %v5224
      %v5227 = vmul.f32 %v5217, %v5225
      %v5228 = vmul.f32 %v5218, %v5225
      %v5229 = vmul.f32 %v5219, %v5225
      %v5230 = vmul.f32 %v5220, %v5225
      %v5232 = vlaneseq
      %v5233 = vshrl.u32 %v5232, 7
      %v5234 = vsub.s32 0, %v5233
      %v5235 = vrot.slane %v5176, %v5234
      %v5237 = vadd.f32 %v5227, %v5235
      %v5238 = vadd.f32 %v5228, %v5235
      %v5239 = vadd.f32 %v5229, %v5235
      %v5240 = vadd.f32 %v5230, %v5235
      %v5241 = vpack.c.bf16 %v5238, %v5237
      %v5242 = vpack.c.bf16 %v5240, %v5239
      %s5243 = scalar_lea.vmem %s10, 128
      %v5244 = vld [vmem:[%s5243] sm:$0xff]
      %v5245 = vld [vmem:[%s5243 + $0x8] sm:$0xff]
      %v5246 = vld [vmem:[%s5243 + $0x10] sm:$0xff]
      %v5247 = vld [vmem:[%s5243 + $0x18] sm:$0xff]
      %v5248 = vld [vmem:[%s5243 + $0x20] sm:$0xff]
      %v5249 = vld [vmem:[%s5243 + $0x28] sm:$0xff]
      %v5250 = vld [vmem:[%s5243 + $0x30] sm:$0xff]
      %v5251 = vld [vmem:[%s5243 + $0x38] sm:$0xff]
      %v5252 = vld [vmem:[%s5243 + $0x40] sm:$0xff]
      %v5253 = vld [vmem:[%s5243 + $0x48] sm:$0xff]
      %v5254 = vld [vmem:[%s5243 + $0x50] sm:$0xff]
      %v5255 = vld [vmem:[%s5243 + $0x58] sm:$0xff]
      %v5256 = vld [vmem:[%s5243 + $0x60] sm:$0xff]
      %v5257 = vld [vmem:[%s5243 + $0x68] sm:$0xff]
      %v5258 = vld [vmem:[%s5243 + $0x70] sm:$0xff]
      %v5259 = vld [vmem:[%s5243 + $0x78] sm:$0xff]
      %s5260 = scalar_lea.vmem %s11, 2
      %v5261 = vld [vmem:[%s5260] sm:$0x3]
      %v5263 = vlaneseq
      %v5264 = vshrl.u32 %v5263, 7
      %v5265 = vsub.s32 0, %v5264
      %v5266 = vrot.slane %v5261, %v5265
      %v5267 = vlaneseq
      %v5268 = vshrl.u32 %v5267, 7
      %v5269 = vsub.s32 1, %v5268
      %v5270 = vrot.slane %v5261, %v5269
      %v5289 = vunpack.c.l.b16 %v5244
      %v5290 = vunpack.c.h.b16 %v5244
      %v5291 = vunpack.c.l.b16 %v5245
      %v5292 = vunpack.c.h.b16 %v5245
      %v5293 = vunpack.c.l.b16 %v5246
      %v5294 = vunpack.c.h.b16 %v5246
      %v5295 = vunpack.c.l.b16 %v5247
      %v5296 = vunpack.c.h.b16 %v5247
      %v5297 = vunpack.c.l.b16 %v5248
      %v5298 = vunpack.c.h.b16 %v5248
      %v5299 = vunpack.c.l.b16 %v5249
      %v5300 = vunpack.c.h.b16 %v5249
      %v5301 = vunpack.c.l.b16 %v5250
      %v5302 = vunpack.c.h.b16 %v5250
      %v5303 = vunpack.c.l.b16 %v5251
      %v5304 = vunpack.c.h.b16 %v5251
      %v5305 = vunpack.c.l.b16 %v5252
      %v5306 = vunpack.c.h.b16 %v5252
      %v5307 = vunpack.c.l.b16 %v5253
      %v5308 = vunpack.c.h.b16 %v5253
      %v5309 = vunpack.c.l.b16 %v5254
      %v5310 = vunpack.c.h.b16 %v5254
      %v5311 = vunpack.c.l.b16 %v5255
      %v5312 = vunpack.c.h.b16 %v5255
      %v5313 = vunpack.c.l.b16 %v5256
      %v5314 = vunpack.c.h.b16 %v5256
      %v5315 = vunpack.c.l.b16 %v5257
      %v5316 = vunpack.c.h.b16 %v5257
      %v5317 = vunpack.c.l.b16 %v5258
      %v5318 = vunpack.c.h.b16 %v5258
      %v5319 = vunpack.c.l.b16 %v5259
      %v5320 = vunpack.c.h.b16 %v5259
      %v5321 = vpack.c.b16 %v5291, %v5289
      %v5322 = vpack.c.b16 %v5292, %v5290
      %v5323 = vpack.c.b16 %v5295, %v5293
      %v5324 = vpack.c.b16 %v5296, %v5294
      %v5325 = vpack.c.b16 %v5299, %v5297
      %v5326 = vpack.c.b16 %v5300, %v5298
      %v5327 = vpack.c.b16 %v5303, %v5301
      %v5328 = vpack.c.b16 %v5304, %v5302
      %v5329 = vpack.c.b16 %v5307, %v5305
      %v5330 = vpack.c.b16 %v5308, %v5306
      %v5331 = vpack.c.b16 %v5311, %v5309
      %v5332 = vpack.c.b16 %v5312, %v5310
      %v5333 = vpack.c.b16 %v5315, %v5313
      %v5334 = vpack.c.b16 %v5316, %v5314
      %v5335 = vpack.c.b16 %v5319, %v5317
      %v5336 = vpack.c.b16 %v5320, %v5318
      %5353 = vmatprep.subr.bf16.mxu0 %v5322
      %5354 = vmatpush1.bf16.msra.mxu0 %v5321
      %5355 = vmatprep.subr.bf16.mxu0 %v5324
      %5356 = vmatpush1.bf16.msra.mxu0 %v5323
      %5357 = vmatprep.subr.bf16.mxu0 %v5326
      %5358 = vmatpush1.bf16.msra.mxu0 %v5325
      %5359 = vmatprep.subr.bf16.mxu0 %v5328
      %5360 = vmatpush1.bf16.msra.mxu0 %v5327
      %5361 = vmatprep.subr.bf16.mxu0 %v5330
      %5362 = vmatpush1.bf16.msra.mxu0 %v5329
      %5363 = vmatprep.subr.bf16.mxu0 %v5332
      %5364 = vmatpush1.bf16.msra.mxu0 %v5331
      %5365 = vmatprep.subr.bf16.mxu0 %v5334
      %5366 = vmatpush1.bf16.msra.mxu0 %v5333
      %5367 = vmatprep.subr.bf16.mxu0 %v5336
      %5368 = vmatpush1.bf16.msra.mxu0 %v5335
      %5369 = vmatprep.subr.bf16.mxu0 0
      %5370 = vmatpush1.bf16.msra.mxu0 0
      %5371 = vmatprep.subr.bf16.mxu0 0
      %5372 = vmatpush1.bf16.msra.mxu0 0
      %5373 = vmatprep.subr.bf16.mxu0 0
      %5374 = vmatpush1.bf16.msra.mxu0 0
      %5375 = vmatprep.subr.bf16.mxu0 0
      %5376 = vmatpush1.bf16.msra.mxu0 0
      %5377 = vmatprep.subr.bf16.mxu0 0
      %5378 = vmatpush1.bf16.msra.mxu0 0
      %5379 = vmatprep.subr.bf16.mxu0 0
      %5380 = vmatpush1.bf16.msra.mxu0 0
      %5381 = vmatprep.subr.bf16.mxu0 0
      %5382 = vmatpush1.bf16.msra.mxu0 0
      %5383 = vmatprep.subr.bf16.mxu0 0
      %5384 = vmatpush1.bf16.msra.mxu0 0
      %5385 = vmatprep.mubr.bf16.mxu0 0
      %5386 = vmatmul.mubr.bf16.gmra.mrb[0].mxu0 %v5241
      %v5387 = vpop.f32.mrb[0].mxu0
      %v5388 = vadd.f32 %v5266, %v5387
      %v5389 = vpop.f32.mrb[0].mxu0
      %v5390 = vadd.f32 %v5270, %v5389
      %v5391 = vpop.f32.mrb[0].mxu0
      %v5392 = vadd.f32 %v5266, %v5391
      %v5393 = vpop.f32.mrb[0].mxu0
      %v5394 = vadd.f32 %v5270, %v5393
      %5395 = vmatprep.mubr.bf16.mxu0 0
      %5396 = vmatmul.mubr.bf16.gmra.mrb[0].mxu0 %v5242
      %v5397 = vpop.f32.mrb[0].mxu0
      %v5398 = vadd.f32 %v5266, %v5397
      %v5399 = vpop.f32.mrb[0].mxu0
      %v5400 = vadd.f32 %v5270, %v5399
      %v5401 = vpop.f32.mrb[0].mxu0
      %v5402 = vadd.f32 %v5266, %v5401
      %v5403 = vpop.f32.mrb[0].mxu0
      %v5404 = vadd.f32 %v5270, %v5403
      %5405 = vdwg.mxu0
      %v5406 = vmul.f32 %v5388, 0.5
      %v5407 = vmul.f32 %v5390, 0.5
      %v5408 = vmul.f32 %v5392, 0.5
      %v5409 = vmul.f32 %v5394, 0.5
      %v5410 = vmul.f32 %v5398, 0.5
      %v5411 = vmul.f32 %v5400, 0.5
      %v5412 = vmul.f32 %v5402, 0.5
      %v5413 = vmul.f32 %v5404, 0.5
      %v5414 = vmul.f32 %v5388, 0.70710677
      %v5415 = vmul.f32 %v5390, 0.70710677
      %v5416 = vmul.f32 %v5392, 0.70710677
      %v5417 = vmul.f32 %v5394, 0.70710677
      %v5418 = vmul.f32 %v5398, 0.70710677
      %v5419 = vmul.f32 %v5400, 0.70710677
      %v5420 = vmul.f32 %v5402, 0.70710677
      %v5421 = vmul.f32 %v5404, 0.70710677
      %v5422 = verf.f32.pop %v5414
      %v5423 = verf.f32.pop %v5415
      %v5424 = verf.f32.pop %v5416
      %v5425 = verf.f32.pop %v5417
      %v5426 = verf.f32.pop %v5418
      %v5427 = verf.f32.pop %v5419
      %v5428 = verf.f32.pop %v5420
      %v5429 = verf.f32.pop %v5421
      %v5430 = vadd.f32 %v5422, 1.0
      %v5431 = vadd.f32 %v5423, 1.0
      %v5432 = vadd.f32 %v5424, 1.0
      %v5433 = vadd.f32 %v5425, 1.0
      %v5434 = vadd.f32 %v5426, 1.0
      %v5435 = vadd.f32 %v5427, 1.0
      %v5436 = vadd.f32 %v5428, 1.0
      %v5437 = vadd.f32 %v5429, 1.0
      %v5438 = vmul.f32 %v5406, %v5430
      %v5439 = vmul.f32 %v5407, %v5431
      %v5440 = vmul.f32 %v5408, %v5432
      %v5441 = vmul.f32 %v5409, %v5433
      %v5442 = vmul.f32 %v5410, %v5434
      %v5443 = vmul.f32 %v5411, %v5435
      %v5444 = vmul.f32 %v5412, %v5436
      %v5445 = vmul.f32 %v5413, %v5437
      %v5446 = vpack.c.bf16 %v5440, %v5438
      %v5447 = vpack.c.bf16 %v5441, %v5439
      %v5448 = vpack.c.bf16 %v5444, %v5442
      %v5449 = vpack.c.bf16 %v5445, %v5443
      %s5450 = scalar_lea.vmem %s12, 128
      %v5451 = vld [vmem:[%s5450] sm:$0xf]
      %v5452 = vld [vmem:[%s5450 + $0x4] sm:$0xf]
      %v5453 = vld [vmem:[%s5450 + $0x8] sm:$0xf]
      %v5454 = vld [vmem:[%s5450 + $0xc] sm:$0xf]
      %v5455 = vld [vmem:[%s5450 + $0x10] sm:$0xf]
      %v5456 = vld [vmem:[%s5450 + $0x14] sm:$0xf]
      %v5457 = vld [vmem:[%s5450 + $0x18] sm:$0xf]
      %v5458 = vld [vmem:[%s5450 + $0x1c] sm:$0xf]
      %v5459 = vld [vmem:[%s5450 + $0x20] sm:$0xf]
      %v5460 = vld [vmem:[%s5450 + $0x24] sm:$0xf]
      %v5461 = vld [vmem:[%s5450 + $0x28] sm:$0xf]
      %v5462 = vld [vmem:[%s5450 + $0x2c] sm:$0xf]
      %v5463 = vld [vmem:[%s5450 + $0x30] sm:$0xf]
      %v5464 = vld [vmem:[%s5450 + $0x34] sm:$0xf]
      %v5465 = vld [vmem:[%s5450 + $0x38] sm:$0xf]
      %v5466 = vld [vmem:[%s5450 + $0x3c] sm:$0xf]
      %v5467 = vld [vmem:[%s5450 + $0x40] sm:$0xf]
      %v5468 = vld [vmem:[%s5450 + $0x44] sm:$0xf]
      %v5469 = vld [vmem:[%s5450 + $0x48] sm:$0xf]
      %v5470 = vld [vmem:[%s5450 + $0x4c] sm:$0xf]
      %v5471 = vld [vmem:[%s5450 + $0x50] sm:$0xf]
      %v5472 = vld [vmem:[%s5450 + $0x54] sm:$0xf]
      %v5473 = vld [vmem:[%s5450 + $0x58] sm:$0xf]
      %v5474 = vld [vmem:[%s5450 + $0x5c] sm:$0xf]
      %v5475 = vld [vmem:[%s5450 + $0x60] sm:$0xf]
      %v5476 = vld [vmem:[%s5450 + $0x64] sm:$0xf]
      %v5477 = vld [vmem:[%s5450 + $0x68] sm:$0xf]
      %v5478 = vld [vmem:[%s5450 + $0x6c] sm:$0xf]
      %v5479 = vld [vmem:[%s5450 + $0x70] sm:$0xf]
      %v5480 = vld [vmem:[%s5450 + $0x74] sm:$0xf]
      %v5481 = vld [vmem:[%s5450 + $0x78] sm:$0xf]
      %v5482 = vld [vmem:[%s5450 + $0x7c] sm:$0xf]
      %s5483 = scalar_lea.vmem %s13, 1
      %v5484 = vld [vmem:[%s5483] sm:$0x1]
      %v5486 = vlaneseq
      %v5487 = vshrl.u32 %v5486, 7
      %v5488 = vsub.s32 0, %v5487
      %v5489 = vrot.slane %v5484, %v5488
      %v5523 = vunpack.c.l.b16 %v5451
      %v5524 = vunpack.c.l.b16 %v5452
      %v5525 = vunpack.c.l.b16 %v5453
      %v5526 = vunpack.c.l.b16 %v5454
      %v5527 = vunpack.c.l.b16 %v5455
      %v5528 = vunpack.c.l.b16 %v5456
      %v5529 = vunpack.c.l.b16 %v5457
      %v5530 = vunpack.c.l.b16 %v5458
      %v5531 = vunpack.c.l.b16 %v5459
      %v5532 = vunpack.c.l.b16 %v5460
      %v5533 = vunpack.c.l.b16 %v5461
      %v5534 = vunpack.c.l.b16 %v5462
      %v5535 = vunpack.c.l.b16 %v5463
      %v5536 = vunpack.c.l.b16 %v5464
      %v5537 = vunpack.c.l.b16 %v5465
      %v5538 = vunpack.c.l.b16 %v5466
      %v5539 = vunpack.c.l.b16 %v5467
      %v5540 = vunpack.c.l.b16 %v5468
      %v5541 = vunpack.c.l.b16 %v5469
      %v5542 = vunpack.c.l.b16 %v5470
      %v5543 = vunpack.c.l.b16 %v5471
      %v5544 = vunpack.c.l.b16 %v5472
      %v5545 = vunpack.c.l.b16 %v5473
      %v5546 = vunpack.c.l.b16 %v5474
      %v5547 = vunpack.c.l.b16 %v5475
      %v5548 = vunpack.c.l.b16 %v5476
      %v5549 = vunpack.c.l.b16 %v5477
      %v5550 = vunpack.c.l.b16 %v5478
      %v5551 = vunpack.c.l.b16 %v5479
      %v5552 = vunpack.c.l.b16 %v5480
      %v5553 = vunpack.c.l.b16 %v5481
      %v5554 = vunpack.c.l.b16 %v5482
      %v5555 = vpack.c.b16 %v5524, %v5523
      %v5556 = vpack.c.b16 %v5526, %v5525
      %v5557 = vpack.c.b16 %v5528, %v5527
      %v5558 = vpack.c.b16 %v5530, %v5529
      %v5559 = vpack.c.b16 %v5532, %v5531
      %v5560 = vpack.c.b16 %v5534, %v5533
      %v5561 = vpack.c.b16 %v5536, %v5535
      %v5562 = vpack.c.b16 %v5538, %v5537
      %v5563 = vpack.c.b16 %v5540, %v5539
      %v5564 = vpack.c.b16 %v5542, %v5541
      %v5565 = vpack.c.b16 %v5544, %v5543
      %v5566 = vpack.c.b16 %v5546, %v5545
      %v5567 = vpack.c.b16 %v5548, %v5547
      %v5568 = vpack.c.b16 %v5550, %v5549
      %v5569 = vpack.c.b16 %v5552, %v5551
      %v5570 = vpack.c.b16 %v5554, %v5553
      %5587 = vmatprep.subr.bf16.mxu0 0
      %5588 = vmatpush1.bf16.msra.mxu0 %v5555
      %5589 = vmatprep.subr.bf16.mxu0 0
      %5590 = vmatpush1.bf16.msra.mxu0 %v5556
      %5591 = vmatprep.subr.bf16.mxu0 0
      %5592 = vmatpush1.bf16.msra.mxu0 %v5557
      %5593 = vmatprep.subr.bf16.mxu0 0
      %5594 = vmatpush1.bf16.msra.mxu0 %v5558
      %5595 = vmatprep.subr.bf16.mxu0 0
      %5596 = vmatpush1.bf16.msra.mxu0 %v5559
      %5597 = vmatprep.subr.bf16.mxu0 0
      %5598 = vmatpush1.bf16.msra.mxu0 %v5560
      %5599 = vmatprep.subr.bf16.mxu0 0
      %5600 = vmatpush1.bf16.msra.mxu0 %v5561
      %5601 = vmatprep.subr.bf16.mxu0 0
      %5602 = vmatpush1.bf16.msra.mxu0 %v5562
      %5603 = vmatprep.subr.bf16.mxu0 0
      %5604 = vmatpush1.bf16.msra.mxu0 %v5563
      %5605 = vmatprep.subr.bf16.mxu0 0
      %5606 = vmatpush1.bf16.msra.mxu0 %v5564
      %5607 = vmatprep.subr.bf16.mxu0 0
      %5608 = vmatpush1.bf16.msra.mxu0 %v5565
      %5609 = vmatprep.subr.bf16.mxu0 0
      %5610 = vmatpush1.bf16.msra.mxu0 %v5566
      %5611 = vmatprep.subr.bf16.mxu0 0
      %5612 = vmatpush1.bf16.msra.mxu0 %v5567
      %5613 = vmatprep.subr.bf16.mxu0 0
      %5614 = vmatpush1.bf16.msra.mxu0 %v5568
      %5615 = vmatprep.subr.bf16.mxu0 0
      %5616 = vmatpush1.bf16.msra.mxu0 %v5569
      %5617 = vmatprep.subr.bf16.mxu0 0
      %5618 = vmatpush1.bf16.msra.mxu0 %v5570
      %5619 = vmatprep.mubr.bf16.mxu0 %v5447
      %5620 = vmatmul.mubr.bf16.gmra.mrb[0].mxu0 %v5446
      %v5621 = vpop.f32.mrb[0].mxu0
      %v5622 = vadd.f32 %v5489, %v5621
      %v5623 = vpop.f32.mrb[0].mxu0
      %v5624 = vpop.f32.mrb[0].mxu0
      %v5625 = vadd.f32 %v5489, %v5624
      %v5626 = vpop.f32.mrb[0].mxu0
      %5627 = vmatprep.mubr.bf16.mxu0 %v5449
      %5628 = vmatmul.mubr.bf16.gmra.mrb[0].mxu0 %v5448
      %v5629 = vpop.f32.mrb[0].mxu0
      %v5630 = vadd.f32 %v5489, %v5629
      %v5631 = vpop.f32.mrb[0].mxu0
      %v5632 = vpop.f32.mrb[0].mxu0
      %v5633 = vadd.f32 %v5489, %v5632
      %v5634 = vpop.f32.mrb[0].mxu0
      %5635 = vdwg.mxu0
      %v5636 = vadd.f32 %v5169, %v5622
      %v5637 = vadd.f32 %v5170, %v5625
      %v5638 = vadd.f32 %v5171, %v5630
      %v5639 = vadd.f32 %v5172, %v5633
      %5640 = vst [vmem:[%s467] sm:$0xff] %v5636
      %5641 = vst [vmem:[%s467 + $0x8] sm:$0xff] %v5637
      %5642 = vst [vmem:[%s467 + $0x10] sm:$0xff] %v5638
      %5643 = vst [vmem:[%s467 + $0x18] sm:$0xff] %v5639
      %p5644 = scmp.lt.s32.totalorder %s25, 1
      %s5645 = scalar_select %p5644, %s25, 1
      %s5646 = smul.addr %s5645, 4
      %s5647 = smul.addr %s5646, 8
      %s5648 = scalar_lea.vmem %s14, %s5647
      // Predicated region
      $region77: #{encoder_forward.1} parent=75 // pred_check
        %p5649 = pneg %p342
      $region78: #{encoder_forward.1} parent=75 // pred_check_branch
        %5651 = sbr.rel (%p5649) target = $region80
      $region79: #{encoder_forward.1} parent=75 // pred_region
        _
      $region80: #{encoder_forward.1} parent=75 // pred_fallthru
        _
    $region76: #{encoder_forward.1} parent=5 // pred_fallthru
      _
    %p5652 = scmp.le.s32.totalorder 2, %s20
    // Predicated region
    $region81: #{encoder_forward.1} parent=5 // pred_check
      %p5653 = pneg %p5652
    $region82: #{encoder_forward.1} parent=5 // pred_check_branch
      %5655 = sbr.rel (%p5653) target = $region84
    $region83: #{encoder_forward.1} parent=5 // pred_region
      %s5656 = ssub.s32 %s20, 2
      // Predicated region
      $region85: #{encoder_forward.1} parent=83 // pred_check
        %p5657 = pneg %p348
      $region86: #{encoder_forward.1} parent=83 // pred_check_branch
        %5659 = sbr.rel (%p5657) target = $region88
      $region87: #{encoder_forward.1} parent=83 // pred_region
        %p5660 = scmp.lt.s32.totalorder %s26, 1
        %s5661 = scalar_select %p5660, %s26, 1
        %s5662 = smul.addr %s5661, 4
        %s5663 = smul.addr %s5662, 8
        %s5664 = scalar_lea.vmem %s14, %s5663
      $region88: #{encoder_forward.1} parent=83 // pred_fallthru
        _
    $region84: #{encoder_forward.1} parent=5 // pred_fallthru
      _
  $region6: #{encoder_forward.1} parent=0 // loop_footer
    %s24 = sadd.s32 1, %s20
  $region7: #{encoder_forward.1} parent=0 // loop_footer_branch
    %19 = sbr.rel target = $region3
  $region8: #{encoder_forward.1} parent=0 // loop_exit
    _

</llo_original>
